<compile_context>
chip_gen: v7x
topology: tpu7x:2x2x1
jax: 0.10.0
libtpu: 0.0.40
codegen_flags: <defaults>
</compile_context>

<pallas_src>
import numpy as np
import jax
import jax.numpy as jnp
from jax.experimental import pallas as pl
from jax.experimental.pallas import tpu as pltpu


# --------------------- static geometry (forced by fc = Linear(8*8*32, nc)) ----
K = 5          # conv kernel size
PAD = 2        # conv padding ("same")
H0 = W0 = 32   # input spatial size
C0 = 3         # input channels (n_channels)
C1 = 16        # conv1 output channels
C2 = 32        # conv2 output channels
H1 = W1 = 16   # spatial after first 2x2 max-pool
H2 = W2 = 8    # spatial after second 2x2 max-pool
XL = 128       # lane-padded width of a layer-1 input row (W0*C0 = 96 -> 128)
NCP = 128      # lane-padded logits width (num_classes -> 128 for dense stores)


# ------------------------------- Pallas kernel --------------------------------

def _fused_forward_kernel(xs_ref, w1_ref, b1_ref, w2_ref, b2_ref,
                          wfc_ref, bfc_ref, wfc1_ref, bfc1_ref,
                          o_ref, p_ref, fcbuf_ref):
    """conv1+ReLU+pool -> conv2+ReLU+pool -> fc -> ReLU -> fc1, all in VMEM.

    xs_ref  : (K+3, Bt*8, XL) f32   tap-stacked conv1 rows:
                                    xs[a, b*8+u, :] = H-padded input row 4u+a.
    w1_ref  : (K, 2, XL, W1*C1) bf16   banded conv1 weights, [kh, q] slabs.
    b1_ref  : (1, W1*C1) f32           conv1 bias tiled over output columns.
    w2_ref  : (K, 2, W1*C1, W2*C2) bf16  banded conv2 weights.
    b2_ref  : (1, W2*C2) f32
    wfc_ref : (H2*W2*C2, nc) bf16      fc weights, rows permuted to (h, w, c).
    bfc_ref : (1, nc) f32
    wfc1_ref: (nc, NCP) bf16           fc1 weights, transposed + lane-padded.
    bfc1_ref: (1, NCP) f32
    o_ref   : (1, Bt, NCP)             lane-padded logits for this batch tile.
    p_ref   : (2, Bt, H1//2+2, W1*C1) f32  scratch: conv2 input, H-zero-padded
                                       row slabs, phase-split along H mod 2.
    fcbuf_ref: (Bt, H2*W2*C2) f32      scratch: flattened (h, w, c) fc input.
    """
    f32 = jnp.float32
    cdt = jnp.bfloat16
    Bt = o_ref.shape[1]
    hb1 = H1 // 2                 # 8 pooled rows per (batch, row-parity) block
    rows1 = Bt * hb1              # LHS rows per (rho, p) block, layer 1
    rows2 = Bt * H2               # LHS rows per p block, layer 2
    nl1 = W1 * C1                 # 256 lanes of a layer-1 / conv2-input row
    nl2 = W2 * C2                 # 256 lanes of a layer-2 output row

    # Zero only the 4 H-padding rows of the conv2-input slab (data rows 1..8
    # are fully overwritten below).  Done every grid step, not under
    # pl.when(program_id==0), so it stays correct when the "parallel" batch
    # axis is split across TensorCores (each core has its own scratch).
    zrow = jnp.zeros((Bt, 1, nl1), f32)
    for rho in (0, 1):
        p_ref[rho, :, 0:1, :] = zrow
        p_ref[rho, :, hb1 + 1:hb1 + 2, :] = zrow

    # ---- layer 1: conv(5x5, pad 2) + ReLU + 2x2 max-pool ----------------------
    # LHS rows = (pool offset a_off = 2*rho+p, batch b, pooled row u); the tap
    # stack makes each kh LHS one contiguous slice.  Two f32 accumulation
    # chains, one per horizontal pool phase q (half the live vregs), each fed
    # by lane-dense (x, 128) @ (128, 256) bf16 matmuls.
    acc1 = [None, None]
    for kh in range(K):
        lhs = xs_ref[kh:kh + 4, :, :].reshape(4 * rows1, XL).astype(cdt)
        for q in (0, 1):
            d = jnp.dot(lhs, w1_ref[kh, q], preferred_element_type=f32)
            acc1[q] = d if kh == 0 else acc1[q] + d

    b1 = b1_ref[...]
    for rho in (0, 1):
        def blk1(q, p):
            r0 = (2 * rho + p) * rows1
            return acc1[q][r0:r0 + rows1, :]
        mx = jnp.maximum(jnp.maximum(blk1(0, 0), blk1(0, 1)),
                         jnp.maximum(blk1(1, 0), blk1(1, 1)))
        # max-pool before bias+ReLU is exact: bias constant over the window,
        # ReLU monotone.
        h1 = jnp.maximum(mx + b1, 0.0)                              # (rows1, 256)
        # Rows of parity `rho` land directly in the phase-`rho` slab of the
        # H-zero-padded conv2 input (padded row 2*(1+u)+rho = data row 2u+rho).
        p_ref[rho, :, 1:1 + hb1, :] = h1.reshape(Bt, hb1, nl1)

    # ---- layer 2: conv(5x5, pad 2) + ReLU + 2x2 max-pool ----------------------
    # Six distinct row blocks (one per padded-row offset a = p + kh), built
    # once; each kh LHS is a 2-block sublane concat.  Two q accumulator chains.
    blk2a = [p_ref[a % 2, :, a // 2:a // 2 + H2, :].reshape(rows2, nl1)
             for a in range(K + 1)]
    acc2 = [None, None]
    for kh in range(K):
        lhs = jnp.concatenate([blk2a[kh], blk2a[kh + 1]], axis=0).astype(cdt)
        for q in (0, 1):
            d = jnp.dot(lhs, w2_ref[kh, q], preferred_element_type=f32)
            acc2[q] = d if kh == 0 else acc2[q] + d

    def blk2(q, p):
        return acc2[q][p * rows2:(p + 1) * rows2, :]
    mx2 = jnp.maximum(jnp.maximum(blk2(0, 0), blk2(0, 1)),
                      jnp.maximum(blk2(1, 0), blk2(1, 1)))
    h2 = jnp.maximum(mx2 + b2_ref[...], 0.0)                        # (rows2, 256)
    # TODO(synk): F.dropout(p=0.25) (train-mode in the torch code) is treated as
    # inference identity; a stochastic version would use pltpu.prng_random_bits.

    # ---- head: flatten (h, w, c) -> fc -> ReLU -> fc1 --------------------------
    # Relayout h2 (Bt*8, 256) -> (Bt, 2048) through a small VMEM scratch so the
    # fc layer is ONE K=2048 matmul instead of 8 tiny ones; wfc rows were
    # pre-permuted to the kernel's (h, w, c) flatten order.
    h2r = h2.reshape(Bt, H2, nl2)
    for u in range(H2):
        fcbuf_ref[:, u * nl2:(u + 1) * nl2] = h2r[:, u, :]
    fc = jnp.dot(fcbuf_ref[...].astype(cdt), wfc_ref[...],
                 preferred_element_type=f32)
    fc = jnp.maximum(fc + bfc_ref[...], 0.0)
    out = jnp.dot(fc.astype(cdt), wfc1_ref[...],
                  preferred_element_type=f32) + bfc1_ref[...]       # (Bt, 128)
    o_ref[0] = out.astype(o_ref.dtype)


# --------------------------- parameter re-layout (one-time) -------------------

def _banded_conv_weights(w_oihw, w_in, w_out, k_dim):
    """(K, 2, k_dim, w_out*Cout) bf16 banded matmul RHS for conv+pool row slabs.

    R[kh, q, w*Cin + c, v*Cout + co] = w[co, c, kh, w + PAD - 2v - q]
    (zero outside the 5-tap band; contraction rows zero-padded to k_dim).
    `row_slab @ R[kh, q]` evaluates, for horizontal pool phase q and every
    pooled column v, the full kw-sum of the conv at vertical tap kh; W-padding
    is folded into the band, not the activation.
    """
    Cout, Cin, KH, KW = w_oihw.shape
    w_hwio = jnp.transpose(w_oihw, (2, 3, 1, 0))             # (KH, KW, Cin, Cout)
    wp = np.arange(w_in)[:, None, None]
    q = np.arange(2)[None, :, None]
    v = np.arange(w_out)[None, None, :]
    kw = wp + PAD - 2 * v - q                                # (w_in, 2, w_out)
    valid = (kw >= 0) & (kw < KW)
    g = w_hwio[:, np.clip(kw, 0, KW - 1), :, :]              # (KH, w_in, 2, w_out, Cin, Cout)
    g = jnp.where(valid[None, :, :, :, None, None], g, 0.0)
    g = jnp.transpose(g, (0, 2, 1, 4, 3, 5))                 # (KH, 2, w_in, Cin, w_out, Cout)
    g = g.reshape(KH, 2, w_in * Cin, w_out * Cout)
    if k_dim > w_in * Cin:
        g = jnp.pad(g, ((0, 0), (0, 0), (0, k_dim - w_in * Cin), (0, 0)))
    return g.astype(jnp.bfloat16)


def prepare_params(params):
    """One-time re-layout of the PyTorch-style parameters for the fused kernel."""
    nc = params["b_fc"].shape[0]
    bf16 = jnp.bfloat16
    f32 = jnp.float32
    # fc rows permuted so the kernel's (h, w, c) flatten order matches
    # PyTorch's (c, h, w) flatten of the NCHW activation.
    wfc = (params["w_fc"].reshape(nc, C2, H2, W2)
           .transpose(2, 3, 1, 0).reshape(H2 * W2 * C2, nc))
    wfc1p = jnp.zeros((nc, NCP), f32).at[:, :nc].set(params["w_fc1"].T)
    bfc1p = jnp.zeros((1, NCP), f32).at[0, :nc].set(params["b_fc1"])
    return {
        "w1b": _banded_conv_weights(params["w_conv1"], W0, W1, XL),      # (5, 2, 128, 256)
        "b1t": jnp.tile(params["b_conv1"], W1).reshape(1, W1 * C1).astype(f32),
        "w2b": _banded_conv_weights(params["w_conv2"], W1, W2, W1 * C1),  # (5, 2, 256, 256)
        "b2t": jnp.tile(params["b_conv2"], W2).reshape(1, W2 * C2).astype(f32),
        "wfc": wfc.astype(bf16),
        "bfc": params["b_fc"].reshape(1, nc).astype(f32),
        "wfc1": wfc1p.astype(bf16),
        "bfc1": bfc1p,
    }


# ------------------------------- forward wrapper ------------------------------

def conv_adv_forward(x_nchw, kp, block_b=4):
    """Conv_adv_dro.forward: (B, 3, 32, 32) -> (B, num_classes)."""
    B = x_nchw.shape[0]
    nc = kp["bfc"].shape[-1]
    Bt = min(block_b, B)
    Bp = -(-B // Bt) * Bt                                   # batch padded to tile
    G = Bp // Bt

    # NCHW -> (B, 36, 128) H-padded rows with lanes = w*c (96 real + 32 zero).
    x = jnp.transpose(x_nchw, (0, 2, 3, 1)).reshape(B, H0, W0 * C0).astype(jnp.float32)
    if Bp != B:
        x = jnp.pad(x, ((0, Bp - B), (0, 0), (0, 0)))
    x = jnp.pad(x, ((0, 0), (PAD, PAD), (0, XL - W0 * C0)))              # (Bp, 36, 128)
    # Tap-stacked row slabs: xs[a, b*8 + u, :] = padded row 4u + a of batch b,
    # so every layer-1 kh tap is one contiguous slice in the kernel.
    xs = jnp.stack([x[:, a:a + 4 * (H1 // 2):4, :] for a in range(K + 3)], axis=0)
    xs = xs.reshape(K + 3, Bp * (H1 // 2), XL)

    rows_blk = Bt * (H1 // 2)
    out = pl.pallas_call(
        _fused_forward_kernel,
        out_shape=jax.ShapeDtypeStruct((G, Bt, NCP), jnp.float32),
        grid_spec=pltpu.PrefetchScalarGridSpec(
            num_scalar_prefetch=0,
            grid=(G,),
            in_specs=[
                pl.BlockSpec((K + 3, rows_blk, XL), lambda i: (0, i, 0)),
                pl.BlockSpec((K, 2, XL, W1 * C1), lambda i: (0, 0, 0, 0)),
                pl.BlockSpec((1, W1 * C1), lambda i: (0, 0)),
                pl.BlockSpec((K, 2, W1 * C1, W2 * C2), lambda i: (0, 0, 0, 0)),
                pl.BlockSpec((1, W2 * C2), lambda i: (0, 0)),
                pl.BlockSpec((H2 * W2 * C2, nc), lambda i: (0, 0)),
                pl.BlockSpec((1, nc), lambda i: (0, 0)),
                pl.BlockSpec((nc, NCP), lambda i: (0, 0)),
                pl.BlockSpec((1, NCP), lambda i: (0, 0)),
            ],
            out_specs=pl.BlockSpec((1, Bt, NCP), lambda i: (i, 0, 0)),
            scratch_shapes=[
                pltpu.VMEM((2, Bt, H1 // 2 + 2, W1 * C1), jnp.float32),
                pltpu.VMEM((Bt, H2 * W2 * C2), jnp.float32),
            ]),
        compiler_params=pltpu.CompilerParams(
            dimension_semantics=("parallel",),
            vmem_limit_bytes=32 * 1024 * 1024),
    )(xs, kp["w1b"], kp["b1t"], kp["w2b"], kp["b2t"],
      kp["wfc"], kp["bfc"], kp["wfc1"], kp["bfc1"])
    return out.reshape(Bp, NCP)[:B, :nc].astype(x_nchw.dtype)


# ------------------------------ pure-JAX reference ----------------------------

def reference_forward(x_nchw, params):
    hp = jax.lax.Precision.HIGHEST

    def conv(x, w, b):
        y = jax.lax.conv_general_dilated(
            x, w, (1, 1), ((PAD, PAD), (PAD, PAD)),
            dimension_numbers=("NCHW", "OIHW", "NCHW"), precision=hp)
        return y + b[None, :, None, None]

    def pool(x):
        return jax.lax.reduce_window(x, -jnp.inf, jax.lax.max,
                                     (1, 1, 2, 2), (1, 1, 2, 2), "VALID")

    h = pool(jax.nn.relu(conv(x_nchw, params["w_conv1"], params["b_conv1"])))
    h = pool(jax.nn.relu(conv(h, params["w_conv2"], params["b_conv2"])))
    h = h.reshape(h.shape[0], -1)
    h = jax.nn.relu(jnp.dot(h, params["w_fc"].T, precision=hp) + params["b_fc"])
    return jnp.dot(h, params["w_fc1"].T, precision=hp) + params["b_fc1"]


# ----------------------------------- main --------------------------------------

if __name__ == "__main__":
    num_classes = 10
    n_channels = C0
    B = 2                     # spatial 32x32 is forced by fc = Linear(8*8*32, nc)

    key = jax.random.PRNGKey(0)
    ks = jax.random.split(key, 9)
    f32 = jnp.float32
    params = {
        "w_conv1": 0.05 * jax.random.normal(ks[0], (C1, n_channels, K, K), f32),
        "b_conv1": 0.05 * jax.random.normal(ks[1], (C1,), f32),
        "w_conv2": 0.05 * jax.random.normal(ks[2], (C2, C1, K, K), f32),
        "b_conv2": 0.05 * jax.random.normal(ks[3], (C2,), f32),
        "w_fc":    0.05 * jax.random.normal(ks[4], (num_classes, H2 * W2 * C2), f32),
        "b_fc":    0.05 * jax.random.normal(ks[5], (num_classes,), f32),
        "w_fc1":   0.05 * jax.random.normal(ks[6], (num_classes, num_classes), f32),
        "b_fc1":   0.05 * jax.random.normal(ks[7], (num_classes,), f32),
    }
    x = jax.random.normal(ks[8], (B, n_channels, H0, W0), f32)

    kp = prepare_params(params)                 # one-time weight re-layout (bf16)
    out = jax.jit(conv_adv_forward)(x, kp)
    out = jax.block_until_ready(out)
    assert out.shape == (B, num_classes), out.shape

    ref = jax.block_until_ready(reference_forward(x, params))
    # bf16 weights + bf16 matmul operands (f32 accumulation) -> slightly wider
    # tolerance than the pure-f32 version.
    assert jnp.allclose(out, ref, rtol=2e-2, atol=2e-2), \
        f"max abs diff {jnp.max(jnp.abs(out - ref))}"

    print("KERNEL_OK")
</pallas_src>

<mosaic_0001>
module attributes {stable_mosaic.version = 11 : i64} {
  func.func @_fused_forward_kernel(%arg0: i32, %arg1: memref<8x16x128xf32, #tpu.memory_space<vmem>>, %arg2: memref<5x2x128x256xbf16, #tpu.memory_space<vmem>>, %arg3: memref<1x256xf32, #tpu.memory_space<vmem>>, %arg4: memref<5x2x256x256xbf16, #tpu.memory_space<vmem>>, %arg5: memref<1x256xf32, #tpu.memory_space<vmem>>, %arg6: memref<2048x10xbf16, #tpu.memory_space<vmem>>, %arg7: memref<1x10xf32, #tpu.memory_space<vmem>>, %arg8: memref<10x128xbf16, #tpu.memory_space<vmem>>, %arg9: memref<1x128xf32, #tpu.memory_space<vmem>>, %arg10: memref<1x2x128xf32, #tpu.memory_space<vmem>>, %arg11: memref<2x2x10x256xf32, #tpu.memory_space<vmem>>, %arg12: memref<2x2048xf32, #tpu.memory_space<vmem>>) attributes {dimension_semantics = [#tpu.dimension_semantics<parallel>], iteration_bounds = array<i64: 1>, scalar_prefetch = 0 : i64, scratch_operands = 2 : i64, tpu.core_type = #tpu.core_type<tc>, window_params = [{transform_indices = @transform_0, window_bounds = array<i64: 8, 16, 128>}, {pipeline_mode = #tpu.pipeline_mode<synchronous>, transform_indices = @transform_1, window_bounds = array<i64: 5, 2, 128, 256>}, {pipeline_mode = #tpu.pipeline_mode<synchronous>, transform_indices = @transform_2, window_bounds = array<i64: 1, 256>}, {pipeline_mode = #tpu.pipeline_mode<synchronous>, transform_indices = @transform_3, window_bounds = array<i64: 5, 2, 256, 256>}, {pipeline_mode = #tpu.pipeline_mode<synchronous>, transform_indices = @transform_4, window_bounds = array<i64: 1, 256>}, {pipeline_mode = #tpu.pipeline_mode<synchronous>, transform_indices = @transform_5, window_bounds = array<i64: 2048, 10>}, {pipeline_mode = #tpu.pipeline_mode<synchronous>, transform_indices = @transform_6, window_bounds = array<i64: 1, 10>}, {pipeline_mode = #tpu.pipeline_mode<synchronous>, transform_indices = @transform_7, window_bounds = array<i64: 10, 128>}, {pipeline_mode = #tpu.pipeline_mode<synchronous>, transform_indices = @transform_8, window_bounds = array<i64: 1, 128>}, {transform_indices = @transform_9, window_bounds = array<i64: 1, 2, 128>}]} {
    %cst = arith.constant 0.000000e+00 : f32
    %0 = vector.broadcast %cst : f32 to vector<2x1x256xf32>
    %c0 = arith.constant 0 : index
    %c0_0 = arith.constant 0 : index
    %c0_1 = arith.constant 0 : index
    %c0_2 = arith.constant 0 : index
    %1 = vector.load %arg11[%c0, %c0_0, %c0_1, %c0_2] : memref<2x2x10x256xf32, #tpu.memory_space<vmem>>, vector<1x2x1x256xf32>
    %2 = vector.shape_cast %1 : vector<1x2x1x256xf32> to vector<2x1x256xf32>
    %3 = vector.shape_cast %0 : vector<2x1x256xf32> to vector<1x2x1x256xf32>
    tpu.vector_store %arg11[%c0, %c0_0, %c0_1, %c0_2], %3 {strides = array<i32>} : memref<2x2x10x256xf32, #tpu.memory_space<vmem>>, vector<1x2x1x256xf32>,
    %c0_3 = arith.constant 0 : index
    %c0_4 = arith.constant 0 : index
    %c9 = arith.constant 9 : index
    %c0_5 = arith.constant 0 : index
    %4 = vector.load %arg11[%c0_3, %c0_4, %c9, %c0_5] : memref<2x2x10x256xf32, #tpu.memory_space<vmem>>, vector<1x2x1x256xf32>
    %5 = vector.shape_cast %4 : vector<1x2x1x256xf32> to vector<2x1x256xf32>
    %6 = vector.shape_cast %0 : vector<2x1x256xf32> to vector<1x2x1x256xf32>
    tpu.vector_store %arg11[%c0_3, %c0_4, %c9, %c0_5], %6 {strides = array<i32>} : memref<2x2x10x256xf32, #tpu.memory_space<vmem>>, vector<1x2x1x256xf32>,
    %c1 = arith.constant 1 : index
    %c0_6 = arith.constant 0 : index
    %c0_7 = arith.constant 0 : index
    %c0_8 = arith.constant 0 : index
    %7 = vector.load %arg11[%c1, %c0_6, %c0_7, %c0_8] : memref<2x2x10x256xf32, #tpu.memory_space<vmem>>, vector<1x2x1x256xf32>
    %8 = vector.shape_cast %7 : vector<1x2x1x256xf32> to vector<2x1x256xf32>
    %9 = vector.shape_cast %0 : vector<2x1x256xf32> to vector<1x2x1x256xf32>
    tpu.vector_store %arg11[%c1, %c0_6, %c0_7, %c0_8], %9 {strides = array<i32>} : memref<2x2x10x256xf32, #tpu.memory_space<vmem>>, vector<1x2x1x256xf32>,
    %c1_9 = arith.constant 1 : index
    %c0_10 = arith.constant 0 : index
    %c9_11 = arith.constant 9 : index
    %c0_12 = arith.constant 0 : index
    %10 = vector.load %arg11[%c1_9, %c0_10, %c9_11, %c0_12] : memref<2x2x10x256xf32, #tpu.memory_space<vmem>>, vector<1x2x1x256xf32>
    %11 = vector.shape_cast %10 : vector<1x2x1x256xf32> to vector<2x1x256xf32>
    %12 = vector.shape_cast %0 : vector<2x1x256xf32> to vector<1x2x1x256xf32>
    tpu.vector_store %arg11[%c1_9, %c0_10, %c9_11, %c0_12], %12 {strides = array<i32>} : memref<2x2x10x256xf32, #tpu.memory_space<vmem>>, vector<1x2x1x256xf32>,
    %c0_13 = arith.constant 0 : index
    %c0_14 = arith.constant 0 : index
    %c0_15 = arith.constant 0 : index
    %13 = vector.load %arg1[%c0_13, %c0_14, %c0_15] : memref<8x16x128xf32, #tpu.memory_space<vmem>>, vector<4x16x128xf32>
    %14 = vector.shape_cast %13 : vector<4x16x128xf32> to vector<64x128xf32>
    %15 = arith.truncf %14 : vector<64x128xf32> to vector<64x128xbf16>
    %c0_16 = arith.constant 0 : index
    %c0_17 = arith.constant 0 : index
    %c0_18 = arith.constant 0 : index
    %c0_19 = arith.constant 0 : index
    %16 = vector.load %arg2[%c0_16, %c0_17, %c0_18, %c0_19] : memref<5x2x128x256xbf16, #tpu.memory_space<vmem>>, vector<1x1x128x256xbf16>
    %17 = vector.shape_cast %16 : vector<1x1x128x256xbf16> to vector<128x256xbf16>
    %cst_20 = arith.constant dense<0.000000e+00> : vector<64x256xf32>
    %18 = tpu.matmul %15, %17, %cst_20 {dimension_numbers = #tpu.dot_dimension_numbers<[1], [0], [0], [1], [0, 0, 1, 1], [], []>} : vector<64x128xbf16>, vector<128x256xbf16>, vector<64x256xf32> -> vector<64x256xf32>
    %c0_21 = arith.constant 0 : index
    %c1_22 = arith.constant 1 : index
    %c0_23 = arith.constant 0 : index
    %c0_24 = arith.constant 0 : index
    %19 = vector.load %arg2[%c0_21, %c1_22, %c0_23, %c0_24] : memref<5x2x128x256xbf16, #tpu.memory_space<vmem>>, vector<1x1x128x256xbf16>
    %20 = vector.shape_cast %19 : vector<1x1x128x256xbf16> to vector<128x256xbf16>
    %cst_25 = arith.constant dense<0.000000e+00> : vector<64x256xf32>
    %21 = tpu.matmul %15, %20, %cst_25 {dimension_numbers = #tpu.dot_dimension_numbers<[1], [0], [0], [1], [0, 0, 1, 1], [], []>} : vector<64x128xbf16>, vector<128x256xbf16>, vector<64x256xf32> -> vector<64x256xf32>
    %c1_26 = arith.constant 1 : index
    %c0_27 = arith.constant 0 : index
    %c0_28 = arith.constant 0 : index
    %22 = vector.load %arg1[%c1_26, %c0_27, %c0_28] : memref<8x16x128xf32, #tpu.memory_space<vmem>>, vector<4x16x128xf32>
    %23 = vector.shape_cast %22 : vector<4x16x128xf32> to vector<64x128xf32>
    %24 = arith.truncf %23 : vector<64x128xf32> to vector<64x128xbf16>
    %c1_29 = arith.constant 1 : index
    %c0_30 = arith.constant 0 : index
    %c0_31 = arith.constant 0 : index
    %c0_32 = arith.constant 0 : index
    %25 = vector.load %arg2[%c1_29, %c0_30, %c0_31, %c0_32] : memref<5x2x128x256xbf16, #tpu.memory_space<vmem>>, vector<1x1x128x256xbf16>
    %26 = vector.shape_cast %25 : vector<1x1x128x256xbf16> to vector<128x256xbf16>
    %cst_33 = arith.constant dense<0.000000e+00> : vector<64x256xf32>
    %27 = tpu.matmul %24, %26, %cst_33 {dimension_numbers = #tpu.dot_dimension_numbers<[1], [0], [0], [1], [0, 0, 1, 1], [], []>} : vector<64x128xbf16>, vector<128x256xbf16>, vector<64x256xf32> -> vector<64x256xf32>
    %28 = arith.addf %18, %27 : vector<64x256xf32>
    %c1_34 = arith.constant 1 : index
    %c1_35 = arith.constant 1 : index
    %c0_36 = arith.constant 0 : index
    %c0_37 = arith.constant 0 : index
    %29 = vector.load %arg2[%c1_34, %c1_35, %c0_36, %c0_37] : memref<5x2x128x256xbf16, #tpu.memory_space<vmem>>, vector<1x1x128x256xbf16>
    %30 = vector.shape_cast %29 : vector<1x1x128x256xbf16> to vector<128x256xbf16>
    %cst_38 = arith.constant dense<0.000000e+00> : vector<64x256xf32>
    %31 = tpu.matmul %24, %30, %cst_38 {dimension_numbers = #tpu.dot_dimension_numbers<[1], [0], [0], [1], [0, 0, 1, 1], [], []>} : vector<64x128xbf16>, vector<128x256xbf16>, vector<64x256xf32> -> vector<64x256xf32>
    %32 = arith.addf %21, %31 : vector<64x256xf32>
    %c2 = arith.constant 2 : index
    %c0_39 = arith.constant 0 : index
    %c0_40 = arith.constant 0 : index
    %33 = vector.load %arg1[%c2, %c0_39, %c0_40] : memref<8x16x128xf32, #tpu.memory_space<vmem>>, vector<4x16x128xf32>
    %34 = vector.shape_cast %33 : vector<4x16x128xf32> to vector<64x128xf32>
    %35 = arith.truncf %34 : vector<64x128xf32> to vector<64x128xbf16>
    %c2_41 = arith.constant 2 : index
    %c0_42 = arith.constant 0 : index
    %c0_43 = arith.constant 0 : index
    %c0_44 = arith.constant 0 : index
    %36 = vector.load %arg2[%c2_41, %c0_42, %c0_43, %c0_44] : memref<5x2x128x256xbf16, #tpu.memory_space<vmem>>, vector<1x1x128x256xbf16>
    %37 = vector.shape_cast %36 : vector<1x1x128x256xbf16> to vector<128x256xbf16>
    %cst_45 = arith.constant dense<0.000000e+00> : vector<64x256xf32>
    %38 = tpu.matmul %35, %37, %cst_45 {dimension_numbers = #tpu.dot_dimension_numbers<[1], [0], [0], [1], [0, 0, 1, 1], [], []>} : vector<64x128xbf16>, vector<128x256xbf16>, vector<64x256xf32> -> vector<64x256xf32>
    %39 = arith.addf %28, %38 : vector<64x256xf32>
    %c2_46 = arith.constant 2 : index
    %c1_47 = arith.constant 1 : index
    %c0_48 = arith.constant 0 : index
    %c0_49 = arith.constant 0 : index
    %40 = vector.load %arg2[%c2_46, %c1_47, %c0_48, %c0_49] : memref<5x2x128x256xbf16, #tpu.memory_space<vmem>>, vector<1x1x128x256xbf16>
    %41 = vector.shape_cast %40 : vector<1x1x128x256xbf16> to vector<128x256xbf16>
    %cst_50 = arith.constant dense<0.000000e+00> : vector<64x256xf32>
    %42 = tpu.matmul %35, %41, %cst_50 {dimension_numbers = #tpu.dot_dimension_numbers<[1], [0], [0], [1], [0, 0, 1, 1], [], []>} : vector<64x128xbf16>, vector<128x256xbf16>, vector<64x256xf32> -> vector<64x256xf32>
    %43 = arith.addf %32, %42 : vector<64x256xf32>
    %c3 = arith.constant 3 : index
    %c0_51 = arith.constant 0 : index
    %c0_52 = arith.constant 0 : index
    %44 = vector.load %arg1[%c3, %c0_51, %c0_52] : memref<8x16x128xf32, #tpu.memory_space<vmem>>, vector<4x16x128xf32>
    %45 = vector.shape_cast %44 : vector<4x16x128xf32> to vector<64x128xf32>
    %46 = arith.truncf %45 : vector<64x128xf32> to vector<64x128xbf16>
    %c3_53 = arith.constant 3 : index
    %c0_54 = arith.constant 0 : index
    %c0_55 = arith.constant 0 : index
    %c0_56 = arith.constant 0 : index
    %47 = vector.load %arg2[%c3_53, %c0_54, %c0_55, %c0_56] : memref<5x2x128x256xbf16, #tpu.memory_space<vmem>>, vector<1x1x128x256xbf16>
    %48 = vector.shape_cast %47 : vector<1x1x128x256xbf16> to vector<128x256xbf16>
    %cst_57 = arith.constant dense<0.000000e+00> : vector<64x256xf32>
    %49 = tpu.matmul %46, %48, %cst_57 {dimension_numbers = #tpu.dot_dimension_numbers<[1], [0], [0], [1], [0, 0, 1, 1], [], []>} : vector<64x128xbf16>, vector<128x256xbf16>, vector<64x256xf32> -> vector<64x256xf32>
    %50 = arith.addf %39, %49 : vector<64x256xf32>
    %c3_58 = arith.constant 3 : index
    %c1_59 = arith.constant 1 : index
    %c0_60 = arith.constant 0 : index
    %c0_61 = arith.constant 0 : index
    %51 = vector.load %arg2[%c3_58, %c1_59, %c0_60, %c0_61] : memref<5x2x128x256xbf16, #tpu.memory_space<vmem>>, vector<1x1x128x256xbf16>
    %52 = vector.shape_cast %51 : vector<1x1x128x256xbf16> to vector<128x256xbf16>
    %cst_62 = arith.constant dense<0.000000e+00> : vector<64x256xf32>
    %53 = tpu.matmul %46, %52, %cst_62 {dimension_numbers = #tpu.dot_dimension_numbers<[1], [0], [0], [1], [0, 0, 1, 1], [], []>} : vector<64x128xbf16>, vector<128x256xbf16>, vector<64x256xf32> -> vector<64x256xf32>
    %54 = arith.addf %43, %53 : vector<64x256xf32>
    %c4 = arith.constant 4 : index
    %c0_63 = arith.constant 0 : index
    %c0_64 = arith.constant 0 : index
    %55 = vector.load %arg1[%c4, %c0_63, %c0_64] : memref<8x16x128xf32, #tpu.memory_space<vmem>>, vector<4x16x128xf32>
    %56 = vector.shape_cast %55 : vector<4x16x128xf32> to vector<64x128xf32>
    %57 = arith.truncf %56 : vector<64x128xf32> to vector<64x128xbf16>
    %c4_65 = arith.constant 4 : index
    %c0_66 = arith.constant 0 : index
    %c0_67 = arith.constant 0 : index
    %c0_68 = arith.constant 0 : index
    %58 = vector.load %arg2[%c4_65, %c0_66, %c0_67, %c0_68] : memref<5x2x128x256xbf16, #tpu.memory_space<vmem>>, vector<1x1x128x256xbf16>
    %59 = vector.shape_cast %58 : vector<1x1x128x256xbf16> to vector<128x256xbf16>
    %cst_69 = arith.constant dense<0.000000e+00> : vector<64x256xf32>
    %60 = tpu.matmul %57, %59, %cst_69 {dimension_numbers = #tpu.dot_dimension_numbers<[1], [0], [0], [1], [0, 0, 1, 1], [], []>} : vector<64x128xbf16>, vector<128x256xbf16>, vector<64x256xf32> -> vector<64x256xf32>
    %61 = arith.addf %50, %60 : vector<64x256xf32>
    %c4_70 = arith.constant 4 : index
    %c1_71 = arith.constant 1 : index
    %c0_72 = arith.constant 0 : index
    %c0_73 = arith.constant 0 : index
    %62 = vector.load %arg2[%c4_70, %c1_71, %c0_72, %c0_73] : memref<5x2x128x256xbf16, #tpu.memory_space<vmem>>, vector<1x1x128x256xbf16>
    %63 = vector.shape_cast %62 : vector<1x1x128x256xbf16> to vector<128x256xbf16>
    %cst_74 = arith.constant dense<0.000000e+00> : vector<64x256xf32>
    %64 = tpu.matmul %57, %63, %cst_74 {dimension_numbers = #tpu.dot_dimension_numbers<[1], [0], [0], [1], [0, 0, 1, 1], [], []>} : vector<64x128xbf16>, vector<128x256xbf16>, vector<64x256xf32> -> vector<64x256xf32>
    %65 = arith.addf %54, %64 : vector<64x256xf32>
    %c0_75 = arith.constant 0 : index
    %c0_76 = arith.constant 0 : index
    %66 = vector.load %arg3[%c0_75, %c0_76] : memref<1x256xf32, #tpu.memory_space<vmem>>, vector<1x256xf32>
    %67 = vector.extract_strided_slice %61 {offsets = [0, 0], sizes = [16, 256], strides = [1, 1]} : vector<64x256xf32> to vector<16x256xf32>
    %68 = vector.extract_strided_slice %61 {offsets = [16, 0], sizes = [16, 256], strides = [1, 1]} : vector<64x256xf32> to vector<16x256xf32>
    %69 = arith.maximumf %67, %68 : vector<16x256xf32>
    %70 = vector.extract_strided_slice %65 {offsets = [0, 0], sizes = [16, 256], strides = [1, 1]} : vector<64x256xf32> to vector<16x256xf32>
    %71 = vector.extract_strided_slice %65 {offsets = [16, 0], sizes = [16, 256], strides = [1, 1]} : vector<64x256xf32> to vector<16x256xf32>
    %72 = arith.maximumf %70, %71 : vector<16x256xf32>
    %73 = arith.maximumf %69, %72 : vector<16x256xf32>
    %74 = vector.broadcast %66 : vector<1x256xf32> to vector<16x256xf32>
    %75 = arith.addf %73, %74 : vector<16x256xf32>
    %cst_77 = arith.constant 0.000000e+00 : f32
    %76 = vector.broadcast %cst_77 : f32 to vector<16x256xf32>
    %77 = arith.maximumf %75, %76 : vector<16x256xf32>
    %78 = vector.shape_cast %77 : vector<16x256xf32> to vector<2x8x256xf32>
    %c0_78 = arith.constant 0 : index
    %c0_79 = arith.constant 0 : index
    %c1_80 = arith.constant 1 : index
    %c0_81 = arith.constant 0 : index
    %79 = vector.load %arg11[%c0_78, %c0_79, %c1_80, %c0_81] : memref<2x2x10x256xf32, #tpu.memory_space<vmem>>, vector<1x2x8x256xf32>
    %80 = vector.shape_cast %79 : vector<1x2x8x256xf32> to vector<2x8x256xf32>
    %81 = vector.shape_cast %78 : vector<2x8x256xf32> to vector<1x2x8x256xf32>
    tpu.vector_store %arg11[%c0_78, %c0_79, %c1_80, %c0_81], %81 {strides = array<i32>} : memref<2x2x10x256xf32, #tpu.memory_space<vmem>>, vector<1x2x8x256xf32>,
    %82 = vector.extract_strided_slice %61 {offsets = [32, 0], sizes = [16, 256], strides = [1, 1]} : vector<64x256xf32> to vector<16x256xf32>
    %83 = vector.extract_strided_slice %61 {offsets = [48, 0], sizes = [16, 256], strides = [1, 1]} : vector<64x256xf32> to vector<16x256xf32>
    %84 = arith.maximumf %82, %83 : vector<16x256xf32>
    %85 = vector.extract_strided_slice %65 {offsets = [32, 0], sizes = [16, 256], strides = [1, 1]} : vector<64x256xf32> to vector<16x256xf32>
    %86 = vector.extract_strided_slice %65 {offsets = [48, 0], sizes = [16, 256], strides = [1, 1]} : vector<64x256xf32> to vector<16x256xf32>
    %87 = arith.maximumf %85, %86 : vector<16x256xf32>
    %88 = arith.maximumf %84, %87 : vector<16x256xf32>
    %89 = vector.broadcast %66 : vector<1x256xf32> to vector<16x256xf32>
    %90 = arith.addf %88, %89 : vector<16x256xf32>
    %cst_82 = arith.constant 0.000000e+00 : f32
    %91 = vector.broadcast %cst_82 : f32 to vector<16x256xf32>
    %92 = arith.maximumf %90, %91 : vector<16x256xf32>
    %93 = vector.shape_cast %92 : vector<16x256xf32> to vector<2x8x256xf32>
    %c1_83 = arith.constant 1 : index
    %c0_84 = arith.constant 0 : index
    %c1_85 = arith.constant 1 : index
    %c0_86 = arith.constant 0 : index
    %94 = vector.load %arg11[%c1_83, %c0_84, %c1_85, %c0_86] : memref<2x2x10x256xf32, #tpu.memory_space<vmem>>, vector<1x2x8x256xf32>
    %95 = vector.shape_cast %94 : vector<1x2x8x256xf32> to vector<2x8x256xf32>
    %96 = vector.shape_cast %93 : vector<2x8x256xf32> to vector<1x2x8x256xf32>
    tpu.vector_store %arg11[%c1_83, %c0_84, %c1_85, %c0_86], %96 {strides = array<i32>} : memref<2x2x10x256xf32, #tpu.memory_space<vmem>>, vector<1x2x8x256xf32>,
    %c0_87 = arith.constant 0 : index
    %c0_88 = arith.constant 0 : index
    %c0_89 = arith.constant 0 : index
    %c0_90 = arith.constant 0 : index
    %97 = vector.load %arg11[%c0_87, %c0_88, %c0_89, %c0_90] : memref<2x2x10x256xf32, #tpu.memory_space<vmem>>, vector<1x2x8x256xf32>
    %98 = vector.shape_cast %97 : vector<1x2x8x256xf32> to vector<2x8x256xf32>
    %99 = vector.shape_cast %98 : vector<2x8x256xf32> to vector<16x256xf32>
    %c1_91 = arith.constant 1 : index
    %c0_92 = arith.constant 0 : index
    %c0_93 = arith.constant 0 : index
    %c0_94 = arith.constant 0 : index
    %100 = vector.load %arg11[%c1_91, %c0_92, %c0_93, %c0_94] : memref<2x2x10x256xf32, #tpu.memory_space<vmem>>, vector<1x2x8x256xf32>
    %101 = vector.shape_cast %100 : vector<1x2x8x256xf32> to vector<2x8x256xf32>
    %102 = vector.shape_cast %101 : vector<2x8x256xf32> to vector<16x256xf32>
    %c0_95 = arith.constant 0 : index
    %c0_96 = arith.constant 0 : index
    %c1_97 = arith.constant 1 : index
    %c0_98 = arith.constant 0 : index
    %103 = vector.load %arg11[%c0_95, %c0_96, %c1_97, %c0_98] : memref<2x2x10x256xf32, #tpu.memory_space<vmem>>, vector<1x2x8x256xf32>
    %104 = vector.shape_cast %103 : vector<1x2x8x256xf32> to vector<2x8x256xf32>
    %105 = vector.shape_cast %104 : vector<2x8x256xf32> to vector<16x256xf32>
    %c1_99 = arith.constant 1 : index
    %c0_100 = arith.constant 0 : index
    %c1_101 = arith.constant 1 : index
    %c0_102 = arith.constant 0 : index
    %106 = vector.load %arg11[%c1_99, %c0_100, %c1_101, %c0_102] : memref<2x2x10x256xf32, #tpu.memory_space<vmem>>, vector<1x2x8x256xf32>
    %107 = vector.shape_cast %106 : vector<1x2x8x256xf32> to vector<2x8x256xf32>
    %108 = vector.shape_cast %107 : vector<2x8x256xf32> to vector<16x256xf32>
    %c0_103 = arith.constant 0 : index
    %c0_104 = arith.constant 0 : index
    %c2_105 = arith.constant 2 : index
    %c0_106 = arith.constant 0 : index
    %109 = vector.load %arg11[%c0_103, %c0_104, %c2_105, %c0_106] : memref<2x2x10x256xf32, #tpu.memory_space<vmem>>, vector<1x2x8x256xf32>
    %110 = vector.shape_cast %109 : vector<1x2x8x256xf32> to vector<2x8x256xf32>
    %111 = vector.shape_cast %110 : vector<2x8x256xf32> to vector<16x256xf32>
    %c1_107 = arith.constant 1 : index
    %c0_108 = arith.constant 0 : index
    %c2_109 = arith.constant 2 : index
    %c0_110 = arith.constant 0 : index
    %112 = vector.load %arg11[%c1_107, %c0_108, %c2_109, %c0_110] : memref<2x2x10x256xf32, #tpu.memory_space<vmem>>, vector<1x2x8x256xf32>
    %113 = vector.shape_cast %112 : vector<1x2x8x256xf32> to vector<2x8x256xf32>
    %114 = vector.shape_cast %113 : vector<2x8x256xf32> to vector<16x256xf32>
    %115 = tpu.concatenate %99, %102 in 0 : vector<16x256xf32>, vector<16x256xf32> -> vector<32x256xf32>
    %116 = arith.truncf %115 : vector<32x256xf32> to vector<32x256xbf16>
    %c0_111 = arith.constant 0 : index
    %c0_112 = arith.constant 0 : index
    %c0_113 = arith.constant 0 : index
    %c0_114 = arith.constant 0 : index
    %117 = vector.load %arg4[%c0_111, %c0_112, %c0_113, %c0_114] : memref<5x2x256x256xbf16, #tpu.memory_space<vmem>>, vector<1x1x256x256xbf16>
    %118 = vector.shape_cast %117 : vector<1x1x256x256xbf16> to vector<256x256xbf16>
    %cst_115 = arith.constant dense<0.000000e+00> : vector<32x256xf32>
    %119 = tpu.matmul %116, %118, %cst_115 {dimension_numbers = #tpu.dot_dimension_numbers<[1], [0], [0], [1], [0, 0, 1, 1], [], []>} : vector<32x256xbf16>, vector<256x256xbf16>, vector<32x256xf32> -> vector<32x256xf32>
    %c0_116 = arith.constant 0 : index
    %c1_117 = arith.constant 1 : index
    %c0_118 = arith.constant 0 : index
    %c0_119 = arith.constant 0 : index
    %120 = vector.load %arg4[%c0_116, %c1_117, %c0_118, %c0_119] : memref<5x2x256x256xbf16, #tpu.memory_space<vmem>>, vector<1x1x256x256xbf16>
    %121 = vector.shape_cast %120 : vector<1x1x256x256xbf16> to vector<256x256xbf16>
    %cst_120 = arith.constant dense<0.000000e+00> : vector<32x256xf32>
    %122 = tpu.matmul %116, %121, %cst_120 {dimension_numbers = #tpu.dot_dimension_numbers<[1], [0], [0], [1], [0, 0, 1, 1], [], []>} : vector<32x256xbf16>, vector<256x256xbf16>, vector<32x256xf32> -> vector<32x256xf32>
    %123 = tpu.concatenate %102, %105 in 0 : vector<16x256xf32>, vector<16x256xf32> -> vector<32x256xf32>
    %124 = arith.truncf %123 : vector<32x256xf32> to vector<32x256xbf16>
    %c1_121 = arith.constant 1 : index
    %c0_122 = arith.constant 0 : index
    %c0_123 = arith.constant 0 : index
    %c0_124 = arith.constant 0 : index
    %125 = vector.load %arg4[%c1_121, %c0_122, %c0_123, %c0_124] : memref<5x2x256x256xbf16, #tpu.memory_space<vmem>>, vector<1x1x256x256xbf16>
    %126 = vector.shape_cast %125 : vector<1x1x256x256xbf16> to vector<256x256xbf16>
    %cst_125 = arith.constant dense<0.000000e+00> : vector<32x256xf32>
    %127 = tpu.matmul %124, %126, %cst_125 {dimension_numbers = #tpu.dot_dimension_numbers<[1], [0], [0], [1], [0, 0, 1, 1], [], []>} : vector<32x256xbf16>, vector<256x256xbf16>, vector<32x256xf32> -> vector<32x256xf32>
    %128 = arith.addf %119, %127 : vector<32x256xf32>
    %c1_126 = arith.constant 1 : index
    %c1_127 = arith.constant 1 : index
    %c0_128 = arith.constant 0 : index
    %c0_129 = arith.constant 0 : index
    %129 = vector.load %arg4[%c1_126, %c1_127, %c0_128, %c0_129] : memref<5x2x256x256xbf16, #tpu.memory_space<vmem>>, vector<1x1x256x256xbf16>
    %130 = vector.shape_cast %129 : vector<1x1x256x256xbf16> to vector<256x256xbf16>
    %cst_130 = arith.constant dense<0.000000e+00> : vector<32x256xf32>
    %131 = tpu.matmul %124, %130, %cst_130 {dimension_numbers = #tpu.dot_dimension_numbers<[1], [0], [0], [1], [0, 0, 1, 1], [], []>} : vector<32x256xbf16>, vector<256x256xbf16>, vector<32x256xf32> -> vector<32x256xf32>
    %132 = arith.addf %122, %131 : vector<32x256xf32>
    %133 = tpu.concatenate %105, %108 in 0 : vector<16x256xf32>, vector<16x256xf32> -> vector<32x256xf32>
    %134 = arith.truncf %133 : vector<32x256xf32> to vector<32x256xbf16>
    %c2_131 = arith.constant 2 : index
    %c0_132 = arith.constant 0 : index
    %c0_133 = arith.constant 0 : index
    %c0_134 = arith.constant 0 : index
    %135 = vector.load %arg4[%c2_131, %c0_132, %c0_133, %c0_134] : memref<5x2x256x256xbf16, #tpu.memory_space<vmem>>, vector<1x1x256x256xbf16>
    %136 = vector.shape_cast %135 : vector<1x1x256x256xbf16> to vector<256x256xbf16>
    %cst_135 = arith.constant dense<0.000000e+00> : vector<32x256xf32>
    %137 = tpu.matmul %134, %136, %cst_135 {dimension_numbers = #tpu.dot_dimension_numbers<[1], [0], [0], [1], [0, 0, 1, 1], [], []>} : vector<32x256xbf16>, vector<256x256xbf16>, vector<32x256xf32> -> vector<32x256xf32>
    %138 = arith.addf %128, %137 : vector<32x256xf32>
    %c2_136 = arith.constant 2 : index
    %c1_137 = arith.constant 1 : index
    %c0_138 = arith.constant 0 : index
    %c0_139 = arith.constant 0 : index
    %139 = vector.load %arg4[%c2_136, %c1_137, %c0_138, %c0_139] : memref<5x2x256x256xbf16, #tpu.memory_space<vmem>>, vector<1x1x256x256xbf16>
    %140 = vector.shape_cast %139 : vector<1x1x256x256xbf16> to vector<256x256xbf16>
    %cst_140 = arith.constant dense<0.000000e+00> : vector<32x256xf32>
    %141 = tpu.matmul %134, %140, %cst_140 {dimension_numbers = #tpu.dot_dimension_numbers<[1], [0], [0], [1], [0, 0, 1, 1], [], []>} : vector<32x256xbf16>, vector<256x256xbf16>, vector<32x256xf32> -> vector<32x256xf32>
    %142 = arith.addf %132, %141 : vector<32x256xf32>
    %143 = tpu.concatenate %108, %111 in 0 : vector<16x256xf32>, vector<16x256xf32> -> vector<32x256xf32>
    %144 = arith.truncf %143 : vector<32x256xf32> to vector<32x256xbf16>
    %c3_141 = arith.constant 3 : index
    %c0_142 = arith.constant 0 : index
    %c0_143 = arith.constant 0 : index
    %c0_144 = arith.constant 0 : index
    %145 = vector.load %arg4[%c3_141, %c0_142, %c0_143, %c0_144] : memref<5x2x256x256xbf16, #tpu.memory_space<vmem>>, vector<1x1x256x256xbf16>
    %146 = vector.shape_cast %145 : vector<1x1x256x256xbf16> to vector<256x256xbf16>
    %cst_145 = arith.constant dense<0.000000e+00> : vector<32x256xf32>
    %147 = tpu.matmul %144, %146, %cst_145 {dimension_numbers = #tpu.dot_dimension_numbers<[1], [0], [0], [1], [0, 0, 1, 1], [], []>} : vector<32x256xbf16>, vector<256x256xbf16>, vector<32x256xf32> -> vector<32x256xf32>
    %148 = arith.addf %138, %147 : vector<32x256xf32>
    %c3_146 = arith.constant 3 : index
    %c1_147 = arith.constant 1 : index
    %c0_148 = arith.constant 0 : index
    %c0_149 = arith.constant 0 : index
    %149 = vector.load %arg4[%c3_146, %c1_147, %c0_148, %c0_149] : memref<5x2x256x256xbf16, #tpu.memory_space<vmem>>, vector<1x1x256x256xbf16>
    %150 = vector.shape_cast %149 : vector<1x1x256x256xbf16> to vector<256x256xbf16>
    %cst_150 = arith.constant dense<0.000000e+00> : vector<32x256xf32>
    %151 = tpu.matmul %144, %150, %cst_150 {dimension_numbers = #tpu.dot_dimension_numbers<[1], [0], [0], [1], [0, 0, 1, 1], [], []>} : vector<32x256xbf16>, vector<256x256xbf16>, vector<32x256xf32> -> vector<32x256xf32>
    %152 = arith.addf %142, %151 : vector<32x256xf32>
    %153 = tpu.concatenate %111, %114 in 0 : vector<16x256xf32>, vector<16x256xf32> -> vector<32x256xf32>
    %154 = arith.truncf %153 : vector<32x256xf32> to vector<32x256xbf16>
    %c4_151 = arith.constant 4 : index
    %c0_152 = arith.constant 0 : index
    %c0_153 = arith.constant 0 : index
    %c0_154 = arith.constant 0 : index
    %155 = vector.load %arg4[%c4_151, %c0_152, %c0_153, %c0_154] : memref<5x2x256x256xbf16, #tpu.memory_space<vmem>>, vector<1x1x256x256xbf16>
    %156 = vector.shape_cast %155 : vector<1x1x256x256xbf16> to vector<256x256xbf16>
    %cst_155 = arith.constant dense<0.000000e+00> : vector<32x256xf32>
    %157 = tpu.matmul %154, %156, %cst_155 {dimension_numbers = #tpu.dot_dimension_numbers<[1], [0], [0], [1], [0, 0, 1, 1], [], []>} : vector<32x256xbf16>, vector<256x256xbf16>, vector<32x256xf32> -> vector<32x256xf32>
    %158 = arith.addf %148, %157 : vector<32x256xf32>
    %c4_156 = arith.constant 4 : index
    %c1_157 = arith.constant 1 : index
    %c0_158 = arith.constant 0 : index
    %c0_159 = arith.constant 0 : index
    %159 = vector.load %arg4[%c4_156, %c1_157, %c0_158, %c0_159] : memref<5x2x256x256xbf16, #tpu.memory_space<vmem>>, vector<1x1x256x256xbf16>
    %160 = vector.shape_cast %159 : vector<1x1x256x256xbf16> to vector<256x256xbf16>
    %cst_160 = arith.constant dense<0.000000e+00> : vector<32x256xf32>
    %161 = tpu.matmul %154, %160, %cst_160 {dimension_numbers = #tpu.dot_dimension_numbers<[1], [0], [0], [1], [0, 0, 1, 1], [], []>} : vector<32x256xbf16>, vector<256x256xbf16>, vector<32x256xf32> -> vector<32x256xf32>
    %162 = arith.addf %152, %161 : vector<32x256xf32>
    %163 = vector.extract_strided_slice %158 {offsets = [0, 0], sizes = [16, 256], strides = [1, 1]} : vector<32x256xf32> to vector<16x256xf32>
    %164 = vector.extract_strided_slice %158 {offsets = [16, 0], sizes = [16, 256], strides = [1, 1]} : vector<32x256xf32> to vector<16x256xf32>
    %165 = arith.maximumf %163, %164 : vector<16x256xf32>
    %166 = vector.extract_strided_slice %162 {offsets = [0, 0], sizes = [16, 256], strides = [1, 1]} : vector<32x256xf32> to vector<16x256xf32>
    %167 = vector.extract_strided_slice %162 {offsets = [16, 0], sizes = [16, 256], strides = [1, 1]} : vector<32x256xf32> to vector<16x256xf32>
    %168 = arith.maximumf %166, %167 : vector<16x256xf32>
    %169 = arith.maximumf %165, %168 : vector<16x256xf32>
    %c0_161 = arith.constant 0 : index
    %c0_162 = arith.constant 0 : index
    %170 = vector.load %arg5[%c0_161, %c0_162] : memref<1x256xf32, #tpu.memory_space<vmem>>, vector<1x256xf32>
    %171 = vector.broadcast %170 : vector<1x256xf32> to vector<16x256xf32>
    %172 = arith.addf %169, %171 : vector<16x256xf32>
    %cst_163 = arith.constant 0.000000e+00 : f32
    %173 = vector.broadcast %cst_163 : f32 to vector<16x256xf32>
    %174 = arith.maximumf %172, %173 : vector<16x256xf32>
    %175 = vector.shape_cast %174 : vector<16x256xf32> to vector<2x8x256xf32>
    %176 = vector.extract_strided_slice %175 {offsets = [0, 0, 0], sizes = [2, 1, 256], strides = [1, 1, 1]} : vector<2x8x256xf32> to vector<2x1x256xf32>
    %177 = vector.shape_cast %176 : vector<2x1x256xf32> to vector<2x256xf32>
    %c0_164 = arith.constant 0 : index
    %c0_165 = arith.constant 0 : index
    %178 = vector.load %arg12[%c0_164, %c0_165] : memref<2x2048xf32, #tpu.memory_space<vmem>>, vector<2x256xf32>
    tpu.vector_store %arg12[%c0_164, %c0_165], %177 {strides = array<i32>} : memref<2x2048xf32, #tpu.memory_space<vmem>>, vector<2x256xf32>,
    %179 = vector.extract_strided_slice %175 {offsets = [0, 1, 0], sizes = [2, 1, 256], strides = [1, 1, 1]} : vector<2x8x256xf32> to vector<2x1x256xf32>
    %180 = vector.shape_cast %179 : vector<2x1x256xf32> to vector<2x256xf32>
    %c0_166 = arith.constant 0 : index
    %c256 = arith.constant 256 : index
    %181 = vector.load %arg12[%c0_166, %c256] : memref<2x2048xf32, #tpu.memory_space<vmem>>, vector<2x256xf32>
    tpu.vector_store %arg12[%c0_166, %c256], %180 {strides = array<i32>} : memref<2x2048xf32, #tpu.memory_space<vmem>>, vector<2x256xf32>,
    %182 = vector.extract_strided_slice %175 {offsets = [0, 2, 0], sizes = [2, 1, 256], strides = [1, 1, 1]} : vector<2x8x256xf32> to vector<2x1x256xf32>
    %183 = vector.shape_cast %182 : vector<2x1x256xf32> to vector<2x256xf32>
    %c0_167 = arith.constant 0 : index
    %c512 = arith.constant 512 : index
    %184 = vector.load %arg12[%c0_167, %c512] : memref<2x2048xf32, #tpu.memory_space<vmem>>, vector<2x256xf32>
    tpu.vector_store %arg12[%c0_167, %c512], %183 {strides = array<i32>} : memref<2x2048xf32, #tpu.memory_space<vmem>>, vector<2x256xf32>,
    %185 = vector.extract_strided_slice %175 {offsets = [0, 3, 0], sizes = [2, 1, 256], strides = [1, 1, 1]} : vector<2x8x256xf32> to vector<2x1x256xf32>
    %186 = vector.shape_cast %185 : vector<2x1x256xf32> to vector<2x256xf32>
    %c0_168 = arith.constant 0 : index
    %c768 = arith.constant 768 : index
    %187 = vector.load %arg12[%c0_168, %c768] : memref<2x2048xf32, #tpu.memory_space<vmem>>, vector<2x256xf32>
    tpu.vector_store %arg12[%c0_168, %c768], %186 {strides = array<i32>} : memref<2x2048xf32, #tpu.memory_space<vmem>>, vector<2x256xf32>,
    %188 = vector.extract_strided_slice %175 {offsets = [0, 4, 0], sizes = [2, 1, 256], strides = [1, 1, 1]} : vector<2x8x256xf32> to vector<2x1x256xf32>
    %189 = vector.shape_cast %188 : vector<2x1x256xf32> to vector<2x256xf32>
    %c0_169 = arith.constant 0 : index
    %c1024 = arith.constant 1024 : index
    %190 = vector.load %arg12[%c0_169, %c1024] : memref<2x2048xf32, #tpu.memory_space<vmem>>, vector<2x256xf32>
    tpu.vector_store %arg12[%c0_169, %c1024], %189 {strides = array<i32>} : memref<2x2048xf32, #tpu.memory_space<vmem>>, vector<2x256xf32>,
    %191 = vector.extract_strided_slice %175 {offsets = [0, 5, 0], sizes = [2, 1, 256], strides = [1, 1, 1]} : vector<2x8x256xf32> to vector<2x1x256xf32>
    %192 = vector.shape_cast %191 : vector<2x1x256xf32> to vector<2x256xf32>
    %c0_170 = arith.constant 0 : index
    %c1280 = arith.constant 1280 : index
    %193 = vector.load %arg12[%c0_170, %c1280] : memref<2x2048xf32, #tpu.memory_space<vmem>>, vector<2x256xf32>
    tpu.vector_store %arg12[%c0_170, %c1280], %192 {strides = array<i32>} : memref<2x2048xf32, #tpu.memory_space<vmem>>, vector<2x256xf32>,
    %194 = vector.extract_strided_slice %175 {offsets = [0, 6, 0], sizes = [2, 1, 256], strides = [1, 1, 1]} : vector<2x8x256xf32> to vector<2x1x256xf32>
    %195 = vector.shape_cast %194 : vector<2x1x256xf32> to vector<2x256xf32>
    %c0_171 = arith.constant 0 : index
    %c1536 = arith.constant 1536 : index
    %196 = vector.load %arg12[%c0_171, %c1536] : memref<2x2048xf32, #tpu.memory_space<vmem>>, vector<2x256xf32>
    tpu.vector_store %arg12[%c0_171, %c1536], %195 {strides = array<i32>} : memref<2x2048xf32, #tpu.memory_space<vmem>>, vector<2x256xf32>,
    %197 = vector.extract_strided_slice %175 {offsets = [0, 7, 0], sizes = [2, 1, 256], strides = [1, 1, 1]} : vector<2x8x256xf32> to vector<2x1x256xf32>
    %198 = vector.shape_cast %197 : vector<2x1x256xf32> to vector<2x256xf32>
    %c0_172 = arith.constant 0 : index
    %c1792 = arith.constant 1792 : index
    %199 = vector.load %arg12[%c0_172, %c1792] : memref<2x2048xf32, #tpu.memory_space<vmem>>, vector<2x256xf32>
    tpu.vector_store %arg12[%c0_172, %c1792], %198 {strides = array<i32>} : memref<2x2048xf32, #tpu.memory_space<vmem>>, vector<2x256xf32>,
    %c0_173 = arith.constant 0 : index
    %c0_174 = arith.constant 0 : index
    %200 = vector.load %arg12[%c0_173, %c0_174] : memref<2x2048xf32, #tpu.memory_space<vmem>>, vector<2x2048xf32>
    %201 = arith.truncf %200 : vector<2x2048xf32> to vector<2x2048xbf16>
    %c0_175 = arith.constant 0 : index
    %c0_176 = arith.constant 0 : index
    %202 = vector.load %arg6[%c0_175, %c0_176] : memref<2048x10xbf16, #tpu.memory_space<vmem>>, vector<2048x10xbf16>
    %cst_177 = arith.constant dense<0.000000e+00> : vector<2x10xf32>
    %203 = tpu.matmul %201, %202, %cst_177 {dimension_numbers = #tpu.dot_dimension_numbers<[1], [0], [0], [1], [0, 0, 1, 1], [], []>} : vector<2x2048xbf16>, vector<2048x10xbf16>, vector<2x10xf32> -> vector<2x10xf32>
    %c0_178 = arith.constant 0 : index
    %c0_179 = arith.constant 0 : index
    %204 = vector.load %arg7[%c0_178, %c0_179] : memref<1x10xf32, #tpu.memory_space<vmem>>, vector<1x10xf32>
    %205 = vector.broadcast %204 : vector<1x10xf32> to vector<2x10xf32>
    %206 = arith.addf %203, %205 : vector<2x10xf32>
    %cst_180 = arith.constant 0.000000e+00 : f32
    %207 = vector.broadcast %cst_180 : f32 to vector<2x10xf32>
    %208 = arith.maximumf %206, %207 : vector<2x10xf32>
    %209 = arith.truncf %208 : vector<2x10xf32> to vector<2x10xbf16>
    %c0_181 = arith.constant 0 : index
    %c0_182 = arith.constant 0 : index
    %210 = vector.load %arg8[%c0_181, %c0_182] : memref<10x128xbf16, #tpu.memory_space<vmem>>, vector<10x128xbf16>
    %cst_183 = arith.constant dense<0.000000e+00> : vector<2x128xf32>
    %211 = tpu.matmul %209, %210, %cst_183 {dimension_numbers = #tpu.dot_dimension_numbers<[1], [0], [0], [1], [0, 0, 1, 1], [], []>} : vector<2x10xbf16>, vector<10x128xbf16>, vector<2x128xf32> -> vector<2x128xf32>
    %c0_184 = arith.constant 0 : index
    %c0_185 = arith.constant 0 : index
    %212 = vector.load %arg9[%c0_184, %c0_185] : memref<1x128xf32, #tpu.memory_space<vmem>>, vector<1x128xf32>
    %213 = vector.broadcast %212 : vector<1x128xf32> to vector<2x128xf32>
    %214 = arith.addf %211, %213 : vector<2x128xf32>
    %c0_186 = arith.constant 0 : index
    %c0_187 = arith.constant 0 : index
    %c0_188 = arith.constant 0 : index
    %215 = vector.load %arg10[%c0_186, %c0_187, %c0_188] : memref<1x2x128xf32, #tpu.memory_space<vmem>>, vector<1x2x128xf32>
    %216 = vector.shape_cast %215 : vector<1x2x128xf32> to vector<2x128xf32>
    %217 = vector.shape_cast %214 : vector<2x128xf32> to vector<1x2x128xf32>
    tpu.vector_store %arg10[%c0_186, %c0_187, %c0_188], %217 {strides = array<i32>} : memref<1x2x128xf32, #tpu.memory_space<vmem>>, vector<1x2x128xf32>,
    return
  }
  func.func @transform_0(%arg0: i32) -> (i32, i32, i32) {
    %c0_i32 = arith.constant 0 : i32
    %c0_i32_0 = arith.constant 0 : i32
    %c0_i32_1 = arith.constant 0 : i32
    return %c0_i32, %arg0, %c0_i32_0 : i32, i32, i32
  }
  func.func @transform_1(%arg0: i32) -> (i32, i32, i32, i32) {
    %c0_i32 = arith.constant 0 : i32
    %c0_i32_0 = arith.constant 0 : i32
    %c0_i32_1 = arith.constant 0 : i32
    %c0_i32_2 = arith.constant 0 : i32
    %c0_i32_3 = arith.constant 0 : i32
    return %c0_i32, %c0_i32_0, %c0_i32_1, %c0_i32_2 : i32, i32, i32, i32
  }
  func.func @transform_2(%arg0: i32) -> (i32, i32) {
    %c0_i32 = arith.constant 0 : i32
    %c0_i32_0 = arith.constant 0 : i32
    %c0_i32_1 = arith.constant 0 : i32
    return %c0_i32, %c0_i32_0 : i32, i32
  }
  func.func @transform_3(%arg0: i32) -> (i32, i32, i32, i32) {
    %c0_i32 = arith.constant 0 : i32
    %c0_i32_0 = arith.constant 0 : i32
    %c0_i32_1 = arith.constant 0 : i32
    %c0_i32_2 = arith.constant 0 : i32
    %c0_i32_3 = arith.constant 0 : i32
    return %c0_i32, %c0_i32_0, %c0_i32_1, %c0_i32_2 : i32, i32, i32, i32
  }
  func.func @transform_4(%arg0: i32) -> (i32, i32) {
    %c0_i32 = arith.constant 0 : i32
    %c0_i32_0 = arith.constant 0 : i32
    %c0_i32_1 = arith.constant 0 : i32
    return %c0_i32, %c0_i32_0 : i32, i32
  }
  func.func @transform_5(%arg0: i32) -> (i32, i32) {
    %c0_i32 = arith.constant 0 : i32
    %c0_i32_0 = arith.constant 0 : i32
    %c0_i32_1 = arith.constant 0 : i32
    return %c0_i32, %c0_i32_0 : i32, i32
  }
  func.func @transform_6(%arg0: i32) -> (i32, i32) {
    %c0_i32 = arith.constant 0 : i32
    %c0_i32_0 = arith.constant 0 : i32
    %c0_i32_1 = arith.constant 0 : i32
    return %c0_i32, %c0_i32_0 : i32, i32
  }
  func.func @transform_7(%arg0: i32) -> (i32, i32) {
    %c0_i32 = arith.constant 0 : i32
    %c0_i32_0 = arith.constant 0 : i32
    %c0_i32_1 = arith.constant 0 : i32
    return %c0_i32, %c0_i32_0 : i32, i32
  }
  func.func @transform_8(%arg0: i32) -> (i32, i32) {
    %c0_i32 = arith.constant 0 : i32
    %c0_i32_0 = arith.constant 0 : i32
    %c0_i32_1 = arith.constant 0 : i32
    return %c0_i32, %c0_i32_0 : i32, i32
  }
  func.func @transform_9(%arg0: i32) -> (i32, i32, i32) {
    %c0_i32 = arith.constant 0 : i32
    %c0_i32_0 = arith.constant 0 : i32
    %c0_i32_1 = arith.constant 0 : i32
    return %arg0, %c0_i32, %c0_i32_0 : i32, i32, i32
  }
}

</mosaic_0001>

<llo_original>
// kernel: conv_adv_forward.1
$region0: #{conv_adv_forward.1}
  #allocation0 [shape = 'u32[]', space=smem, size = 0x4, offset = 0x4, fixed_abs, tag = 'smem constant byte address 0x4 - core index']
  #allocation1 [shape = 'u32[144,128]{1,0:T(1,128)}', space=vmem, size = 0x12000, scoped, tag = 'internal scratch']
  #allocation2 [shape = 'f32[2,2,10,256]{3,2,1,0:T(8,128)}', space=vmem, size = 0x10000, scoped, tag = 'scratch operand']
  #allocation3 [shape = 'f32[2,2048]{1,0:T(2,128)}', space=vmem, size = 0x4000, scoped, tag = 'scratch operand']
  %s0 = inlined_call_operand.vmem [shape: f32[8,16,128], index: 0, kind: input, shape index: {}]
  %s1 = inlined_call_operand.vmem [shape: bf16[5,2,128,256], index: 1, kind: input, shape index: {}]
  %s2 = inlined_call_operand.vmem [shape: f32[1,256], index: 2, kind: input, shape index: {}]
  %s3 = inlined_call_operand.vmem [shape: bf16[5,2,256,256], index: 3, kind: input, shape index: {}]
  %s4 = inlined_call_operand.vmem [shape: f32[1,256], index: 4, kind: input, shape index: {}]
  %s5 = inlined_call_operand.vmem [shape: bf16[2048,10], index: 5, kind: input, shape index: {}]
  %s6 = inlined_call_operand.vmem [shape: f32[1,10], index: 6, kind: input, shape index: {}]
  %s7 = inlined_call_operand.vmem [shape: bf16[10,128], index: 7, kind: input, shape index: {}]
  %s8 = inlined_call_operand.vmem [shape: f32[1,128], index: 8, kind: input, shape index: {}]
  %s9 = inlined_call_operand.hbm [shape: f32[1,2,128], index: 9, kind: output, shape index: {}]
  %s10 = sld [smem:[#allocation0]]
  $region46: #{conv_adv_forward.1} parent=0
    _
  %s12 = ssub.s32 1, %s10
  %s13 = scalar_select 0, %s12, %s10
  $region1: #{conv_adv_forward.1} parent=0
    #allocation4 [shape = 'u8[1024]{0}', space=vmem, size = 0x400, scoped, tag = 'output window, operand 0, single buffered']
    #allocation5 [shape = 's32[1]{0}', space=sflag, size = 0x4, scoped, tag = 'scoped memory for conv_adv_forward.1']
    %14 = vsyncpa [#allocation5], 0
    // Predicated region
    $region2: #{conv_adv_forward.1} parent=1 // pred_check
      _
    $region3: #{conv_adv_forward.1} parent=1 // pred_check_branch
      %16 = sbr.rel (0) target = $region5
    $region4: #{conv_adv_forward.1} parent=1 // pred_region
      _
    $region5: #{conv_adv_forward.1} parent=1 // pred_fallthru
      _
    // Predicated region
    $region6: #{conv_adv_forward.1} parent=1 // pred_check
      _
    $region7: #{conv_adv_forward.1} parent=1 // pred_check_branch
      %18 = sbr.rel (0) target = $region9
    $region8: #{conv_adv_forward.1} parent=1 // pred_region
      _
    $region9: #{conv_adv_forward.1} parent=1 // pred_fallthru
      _
    // Predicated region
    $region10: #{conv_adv_forward.1} parent=1 // pred_check
      _
    $region11: #{conv_adv_forward.1} parent=1 // pred_check_branch
      %20 = sbr.rel (0) target = $region13
    $region12: #{conv_adv_forward.1} parent=1 // pred_region
      _
    $region13: #{conv_adv_forward.1} parent=1 // pred_fallthru
      _
    // Predicated region
    $region14: #{conv_adv_forward.1} parent=1 // pred_check
      _
    $region15: #{conv_adv_forward.1} parent=1 // pred_check_branch
      %22 = sbr.rel (0) target = $region17
    $region16: #{conv_adv_forward.1} parent=1 // pred_region
      _
    $region17: #{conv_adv_forward.1} parent=1 // pred_fallthru
      _
    // Predicated region
    $region18: #{conv_adv_forward.1} parent=1 // pred_check
      _
    $region19: #{conv_adv_forward.1} parent=1 // pred_check_branch
      %24 = sbr.rel (0) target = $region21
    $region20: #{conv_adv_forward.1} parent=1 // pred_region
      _
    $region21: #{conv_adv_forward.1} parent=1 // pred_fallthru
      _
    // Predicated region
    $region22: #{conv_adv_forward.1} parent=1 // pred_check
      _
    $region23: #{conv_adv_forward.1} parent=1 // pred_check_branch
      %26 = sbr.rel (0) target = $region25
    $region24: #{conv_adv_forward.1} parent=1 // pred_region
      _
    $region25: #{conv_adv_forward.1} parent=1 // pred_fallthru
      _
    // Predicated region
    $region26: #{conv_adv_forward.1} parent=1 // pred_check
      _
    $region27: #{conv_adv_forward.1} parent=1 // pred_check_branch
      %28 = sbr.rel (0) target = $region29
    $region28: #{conv_adv_forward.1} parent=1 // pred_region
      _
    $region29: #{conv_adv_forward.1} parent=1 // pred_fallthru
      _
    // Predicated region
    $region30: #{conv_adv_forward.1} parent=1 // pred_check
      _
    $region31: #{conv_adv_forward.1} parent=1 // pred_check_branch
      %30 = sbr.rel (0) target = $region33
    $region32: #{conv_adv_forward.1} parent=1 // pred_region
      _
    $region33: #{conv_adv_forward.1} parent=1 // pred_fallthru
      _
    // Predicated region
    $region34: #{conv_adv_forward.1} parent=1 // pred_check
      _
    $region35: #{conv_adv_forward.1} parent=1 // pred_check_branch
      %32 = sbr.rel (0) target = $region37
    $region36: #{conv_adv_forward.1} parent=1 // pred_region
      _
    $region37: #{conv_adv_forward.1} parent=1 // pred_fallthru
      _
    %v34 = vlaneseq
    %vm35 = vcmp.ge.s32.totalorder %v34, 0
    %vm36 = vcmp.lt.s32.totalorder %v34, 256
    %vm37 = vmand %vm35, %vm36
    %38 = vst.msk [vmem:[#allocation2] ss:$8 sm:$0x3] %vm37, 0.0
    %39 = vst.msk [vmem:[#allocation2] ss:$8 sm:$0x0] %vm37, 0.0
    %s40 = scalar_lea.vmem [#allocation2], 32
    %41 = vst.msk [vmem:[%s40] ss:$8 sm:$0x3] %vm37, 0.0
    %42 = vst.msk [vmem:[%s40] ss:$8 sm:$0x0] %vm37, 0.0
    %s43 = scalar_lea.vmem [#allocation2], 17
    %44 = vst.msk [vmem:[%s43] ss:$8 sm:$0x3] %vm37, 0.0
    %45 = vst.msk [vmem:[%s43] ss:$8 sm:$0x0] %vm37, 0.0
    %s46 = scalar_lea.vmem [#allocation2], 49
    %47 = vst.msk [vmem:[%s46] ss:$8 sm:$0x3] %vm37, 0.0
    %48 = vst.msk [vmem:[%s46] ss:$8 sm:$0x0] %vm37, 0.0
    %s49 = scalar_lea.vmem [#allocation2], 64
    %50 = vst.msk [vmem:[%s49] ss:$8 sm:$0x3] %vm37, 0.0
    %51 = vst.msk [vmem:[%s49] ss:$8 sm:$0x0] %vm37, 0.0
    %s52 = scalar_lea.vmem %s49, 32 [#allocation2]
    %53 = vst.msk [vmem:[%s52] ss:$8 sm:$0x3] %vm37, 0.0
    %54 = vst.msk [vmem:[%s52] ss:$8 sm:$0x0] %vm37, 0.0
    %s55 = scalar_lea.vmem %s49, 17 [#allocation2]
    %56 = vst.msk [vmem:[%s55] ss:$8 sm:$0x3] %vm37, 0.0
    %57 = vst.msk [vmem:[%s55] ss:$8 sm:$0x0] %vm37, 0.0
    %s58 = scalar_lea.vmem %s49, 49 [#allocation2]
    %59 = vst.msk [vmem:[%s58] ss:$8 sm:$0x3] %vm37, 0.0
    %60 = vst.msk [vmem:[%s58] ss:$8 sm:$0x0] %vm37, 0.0
    %v61 = vld [vmem:[%s0] sm:$0xff]
    %v62 = vld [vmem:[%s0 + $0x8] sm:$0xff]
    %v63 = vld [vmem:[%s0 + $0x10] sm:$0xff]
    %v64 = vld [vmem:[%s0 + $0x18] sm:$0xff]
    %v65 = vld [vmem:[%s0 + $0x20] sm:$0xff]
    %v66 = vld [vmem:[%s0 + $0x28] sm:$0xff]
    %v67 = vld [vmem:[%s0 + $0x30] sm:$0xff]
    %v68 = vld [vmem:[%s0 + $0x38] sm:$0xff]
    %v69 = vpack.c.bf16 %v62, %v61
    %v70 = vpack.c.bf16 %v64, %v63
    %v71 = vpack.c.bf16 %v66, %v65
    %v72 = vpack.c.bf16 %v68, %v67
    %v73 = vld [vmem:[%s1] sm:$0xff]
    %v74 = vld [vmem:[%s1 + $0x8] sm:$0xff]
    %v75 = vld [vmem:[%s1 + $0x10] sm:$0xff]
    %v76 = vld [vmem:[%s1 + $0x18] sm:$0xff]
    %v77 = vld [vmem:[%s1 + $0x20] sm:$0xff]
    %v78 = vld [vmem:[%s1 + $0x28] sm:$0xff]
    %v79 = vld [vmem:[%s1 + $0x30] sm:$0xff]
    %v80 = vld [vmem:[%s1 + $0x38] sm:$0xff]
    %v81 = vld [vmem:[%s1 + $0x40] sm:$0xff]
    %v82 = vld [vmem:[%s1 + $0x48] sm:$0xff]
    %v83 = vld [vmem:[%s1 + $0x50] sm:$0xff]
    %v84 = vld [vmem:[%s1 + $0x58] sm:$0xff]
    %v85 = vld [vmem:[%s1 + $0x60] sm:$0xff]
    %v86 = vld [vmem:[%s1 + $0x68] sm:$0xff]
    %v87 = vld [vmem:[%s1 + $0x70] sm:$0xff]
    %v88 = vld [vmem:[%s1 + $0x78] sm:$0xff]
    %s89 = scalar_lea.vmem %s1, 128
    %v90 = vld [vmem:[%s89] sm:$0xff]
    %v91 = vld [vmem:[%s89 + $0x8] sm:$0xff]
    %v92 = vld [vmem:[%s89 + $0x10] sm:$0xff]
    %v93 = vld [vmem:[%s89 + $0x18] sm:$0xff]
    %v94 = vld [vmem:[%s89 + $0x20] sm:$0xff]
    %v95 = vld [vmem:[%s89 + $0x28] sm:$0xff]
    %v96 = vld [vmem:[%s89 + $0x30] sm:$0xff]
    %v97 = vld [vmem:[%s89 + $0x38] sm:$0xff]
    %v98 = vld [vmem:[%s89 + $0x40] sm:$0xff]
    %v99 = vld [vmem:[%s89 + $0x48] sm:$0xff]
    %v100 = vld [vmem:[%s89 + $0x50] sm:$0xff]
    %v101 = vld [vmem:[%s89 + $0x58] sm:$0xff]
    %v102 = vld [vmem:[%s89 + $0x60] sm:$0xff]
    %v103 = vld [vmem:[%s89 + $0x68] sm:$0xff]
    %v104 = vld [vmem:[%s89 + $0x70] sm:$0xff]
    %v105 = vld [vmem:[%s89 + $0x78] sm:$0xff]
    %s106 = scalar_lea.vmem %s0, 16
    %v107 = vld [vmem:[%s106] sm:$0xff]
    %v108 = vld [vmem:[%s106 + $0x8] sm:$0xff]
    %v109 = vld [vmem:[%s106 + $0x10] sm:$0xff]
    %v110 = vld [vmem:[%s106 + $0x18] sm:$0xff]
    %v111 = vld [vmem:[%s106 + $0x20] sm:$0xff]
    %v112 = vld [vmem:[%s106 + $0x28] sm:$0xff]
    %v113 = vld [vmem:[%s106 + $0x30] sm:$0xff]
    %v114 = vld [vmem:[%s106 + $0x38] sm:$0xff]
    %v115 = vpack.c.bf16 %v108, %v107
    %v116 = vpack.c.bf16 %v110, %v109
    %v117 = vpack.c.bf16 %v112, %v111
    %v118 = vpack.c.bf16 %v114, %v113
    %s119 = scalar_lea.vmem %s1, 256
    %v120 = vld [vmem:[%s119] sm:$0xff]
    %v121 = vld [vmem:[%s119 + $0x8] sm:$0xff]
    %v122 = vld [vmem:[%s119 + $0x10] sm:$0xff]
    %v123 = vld [vmem:[%s119 + $0x18] sm:$0xff]
    %v124 = vld [vmem:[%s119 + $0x20] sm:$0xff]
    %v125 = vld [vmem:[%s119 + $0x28] sm:$0xff]
    %v126 = vld [vmem:[%s119 + $0x30] sm:$0xff]
    %v127 = vld [vmem:[%s119 + $0x38] sm:$0xff]
    %v128 = vld [vmem:[%s119 + $0x40] sm:$0xff]
    %v129 = vld [vmem:[%s119 + $0x48] sm:$0xff]
    %v130 = vld [vmem:[%s119 + $0x50] sm:$0xff]
    %v131 = vld [vmem:[%s119 + $0x58] sm:$0xff]
    %v132 = vld [vmem:[%s119 + $0x60] sm:$0xff]
    %v133 = vld [vmem:[%s119 + $0x68] sm:$0xff]
    %v134 = vld [vmem:[%s119 + $0x70] sm:$0xff]
    %v135 = vld [vmem:[%s119 + $0x78] sm:$0xff]
    %v152 = vunpack.c.l.b16 %v120
    %v153 = vunpack.c.h.b16 %v120
    %v154 = vunpack.c.l.b16 %v121
    %v155 = vunpack.c.h.b16 %v121
    %v156 = vunpack.c.l.b16 %v122
    %v157 = vunpack.c.h.b16 %v122
    %v158 = vunpack.c.l.b16 %v123
    %v159 = vunpack.c.h.b16 %v123
    %v160 = vunpack.c.l.b16 %v124
    %v161 = vunpack.c.h.b16 %v124
    %v162 = vunpack.c.l.b16 %v125
    %v163 = vunpack.c.h.b16 %v125
    %v164 = vunpack.c.l.b16 %v126
    %v165 = vunpack.c.h.b16 %v126
    %v166 = vunpack.c.l.b16 %v127
    %v167 = vunpack.c.h.b16 %v127
    %v168 = vunpack.c.l.b16 %v128
    %v169 = vunpack.c.h.b16 %v128
    %v170 = vunpack.c.l.b16 %v129
    %v171 = vunpack.c.h.b16 %v129
    %v172 = vunpack.c.l.b16 %v130
    %v173 = vunpack.c.h.b16 %v130
    %v174 = vunpack.c.l.b16 %v131
    %v175 = vunpack.c.h.b16 %v131
    %v176 = vunpack.c.l.b16 %v132
    %v177 = vunpack.c.h.b16 %v132
    %v178 = vunpack.c.l.b16 %v133
    %v179 = vunpack.c.h.b16 %v133
    %v180 = vunpack.c.l.b16 %v134
    %v181 = vunpack.c.h.b16 %v134
    %v182 = vunpack.c.l.b16 %v135
    %v183 = vunpack.c.h.b16 %v135
    %v184 = vpack.c.b16 %v154, %v152
    %v185 = vpack.c.b16 %v155, %v153
    %v186 = vpack.c.b16 %v158, %v156
    %v187 = vpack.c.b16 %v159, %v157
    %v188 = vpack.c.b16 %v162, %v160
    %v189 = vpack.c.b16 %v163, %v161
    %v190 = vpack.c.b16 %v166, %v164
    %v191 = vpack.c.b16 %v167, %v165
    %v192 = vpack.c.b16 %v170, %v168
    %v193 = vpack.c.b16 %v171, %v169
    %v194 = vpack.c.b16 %v174, %v172
    %v195 = vpack.c.b16 %v175, %v173
    %v196 = vpack.c.b16 %v178, %v176
    %v197 = vpack.c.b16 %v179, %v177
    %v198 = vpack.c.b16 %v182, %v180
    %v199 = vpack.c.b16 %v183, %v181
    %216 = vmatprep.subr.bf16.mxu0 %v185
    %217 = vmatpush1.bf16.msra.mxu0 %v184
    %218 = vmatprep.subr.bf16.mxu0 %v187
    %219 = vmatpush1.bf16.msra.mxu0 %v186
    %220 = vmatprep.subr.bf16.mxu0 %v189
    %221 = vmatpush1.bf16.msra.mxu0 %v188
    %222 = vmatprep.subr.bf16.mxu0 %v191
    %223 = vmatpush1.bf16.msra.mxu0 %v190
    %224 = vmatprep.subr.bf16.mxu0 %v193
    %225 = vmatpush1.bf16.msra.mxu0 %v192
    %226 = vmatprep.subr.bf16.mxu0 %v195
    %227 = vmatpush1.bf16.msra.mxu0 %v194
    %228 = vmatprep.subr.bf16.mxu0 %v197
    %229 = vmatpush1.bf16.msra.mxu0 %v196
    %230 = vmatprep.subr.bf16.mxu0 %v199
    %231 = vmatpush1.bf16.msra.mxu0 %v198
    %232 = vmatprep.subr.bf16.mxu0 0
    %233 = vmatpush1.bf16.msra.mxu0 0
    %234 = vmatprep.subr.bf16.mxu0 0
    %235 = vmatpush1.bf16.msra.mxu0 0
    %236 = vmatprep.subr.bf16.mxu0 0
    %237 = vmatpush1.bf16.msra.mxu0 0
    %238 = vmatprep.subr.bf16.mxu0 0
    %239 = vmatpush1.bf16.msra.mxu0 0
    %240 = vmatprep.subr.bf16.mxu0 0
    %241 = vmatpush1.bf16.msra.mxu0 0
    %242 = vmatprep.subr.bf16.mxu0 0
    %243 = vmatpush1.bf16.msra.mxu0 0
    %244 = vmatprep.subr.bf16.mxu0 0
    %245 = vmatpush1.bf16.msra.mxu0 0
    %246 = vmatprep.subr.bf16.mxu0 0
    %247 = vmatpush1.bf16.msra.mxu0 0
    %248 = vmatprep.mubr.bf16.mxu0 0
    %249 = vmatmul.mubr.bf16.gmra.mrb[0].mxu0 %v115
    %v250 = vpop.f32.mrb[0].mxu0
    %v251 = vadd.f32 0.0, %v250
    %v252 = vpop.f32.mrb[0].mxu0
    %v253 = vadd.f32 0.0, %v252
    %v254 = vpop.f32.mrb[0].mxu0
    %v255 = vadd.f32 0.0, %v254
    %v256 = vpop.f32.mrb[0].mxu0
    %v257 = vadd.f32 0.0, %v256
    %258 = vmatprep.mubr.bf16.mxu0 0
    %259 = vmatmul.mubr.bf16.gmra.mrb[0].mxu0 %v116
    %v260 = vpop.f32.mrb[0].mxu0
    %v261 = vadd.f32 0.0, %v260
    %v262 = vpop.f32.mrb[0].mxu0
    %v263 = vadd.f32 0.0, %v262
    %v264 = vpop.f32.mrb[0].mxu0
    %v265 = vadd.f32 0.0, %v264
    %v266 = vpop.f32.mrb[0].mxu0
    %v267 = vadd.f32 0.0, %v266
    %268 = vmatprep.mubr.bf16.mxu0 0
    %269 = vmatmul.mubr.bf16.gmra.mrb[0].mxu0 %v117
    %v270 = vpop.f32.mrb[0].mxu0
    %v271 = vadd.f32 0.0, %v270
    %v272 = vpop.f32.mrb[0].mxu0
    %v273 = vadd.f32 0.0, %v272
    %v274 = vpop.f32.mrb[0].mxu0
    %v275 = vadd.f32 0.0, %v274
    %v276 = vpop.f32.mrb[0].mxu0
    %v277 = vadd.f32 0.0, %v276
    %278 = vmatprep.mubr.bf16.mxu0 0
    %279 = vmatmul.mubr.bf16.gmra.mrb[0].mxu0 %v118
    %v280 = vpop.f32.mrb[0].mxu0
    %v281 = vadd.f32 0.0, %v280
    %v282 = vpop.f32.mrb[0].mxu0
    %v283 = vadd.f32 0.0, %v282
    %v284 = vpop.f32.mrb[0].mxu0
    %v285 = vadd.f32 0.0, %v284
    %v286 = vpop.f32.mrb[0].mxu0
    %v287 = vadd.f32 0.0, %v286
    %288 = vdwg.mxu0
    %v305 = vunpack.c.l.b16 %v73
    %v306 = vunpack.c.h.b16 %v73
    %v307 = vunpack.c.l.b16 %v74
    %v308 = vunpack.c.h.b16 %v74
    %v309 = vunpack.c.l.b16 %v75
    %v310 = vunpack.c.h.b16 %v75
    %v311 = vunpack.c.l.b16 %v76
    %v312 = vunpack.c.h.b16 %v76
    %v313 = vunpack.c.l.b16 %v77
    %v314 = vunpack.c.h.b16 %v77
    %v315 = vunpack.c.l.b16 %v78
    %v316 = vunpack.c.h.b16 %v78
    %v317 = vunpack.c.l.b16 %v79
    %v318 = vunpack.c.h.b16 %v79
    %v319 = vunpack.c.l.b16 %v80
    %v320 = vunpack.c.h.b16 %v80
    %v321 = vunpack.c.l.b16 %v81
    %v322 = vunpack.c.h.b16 %v81
    %v323 = vunpack.c.l.b16 %v82
    %v324 = vunpack.c.h.b16 %v82
    %v325 = vunpack.c.l.b16 %v83
    %v326 = vunpack.c.h.b16 %v83
    %v327 = vunpack.c.l.b16 %v84
    %v328 = vunpack.c.h.b16 %v84
    %v329 = vunpack.c.l.b16 %v85
    %v330 = vunpack.c.h.b16 %v85
    %v331 = vunpack.c.l.b16 %v86
    %v332 = vunpack.c.h.b16 %v86
    %v333 = vunpack.c.l.b16 %v87
    %v334 = vunpack.c.h.b16 %v87
    %v335 = vunpack.c.l.b16 %v88
    %v336 = vunpack.c.h.b16 %v88
    %v337 = vpack.c.b16 %v307, %v305
    %v338 = vpack.c.b16 %v308, %v306
    %v339 = vpack.c.b16 %v311, %v309
    %v340 = vpack.c.b16 %v312, %v310
    %v341 = vpack.c.b16 %v315, %v313
    %v342 = vpack.c.b16 %v316, %v314
    %v343 = vpack.c.b16 %v319, %v317
    %v344 = vpack.c.b16 %v320, %v318
    %v345 = vpack.c.b16 %v323, %v321
    %v346 = vpack.c.b16 %v324, %v322
    %v347 = vpack.c.b16 %v327, %v325
    %v348 = vpack.c.b16 %v328, %v326
    %v349 = vpack.c.b16 %v331, %v329
    %v350 = vpack.c.b16 %v332, %v330
    %v351 = vpack.c.b16 %v335, %v333
    %v352 = vpack.c.b16 %v336, %v334
    %369 = vmatprep.subr.bf16.mxu0 %v338
    %370 = vmatpush1.bf16.msra.mxu0 %v337
    %371 = vmatprep.subr.bf16.mxu0 %v340
    %372 = vmatpush1.bf16.msra.mxu0 %v339
    %373 = vmatprep.subr.bf16.mxu0 %v342
    %374 = vmatpush1.bf16.msra.mxu0 %v341
    %375 = vmatprep.subr.bf16.mxu0 %v344
    %376 = vmatpush1.bf16.msra.mxu0 %v343
    %377 = vmatprep.subr.bf16.mxu0 %v346
    %378 = vmatpush1.bf16.msra.mxu0 %v345
    %379 = vmatprep.subr.bf16.mxu0 %v348
    %380 = vmatpush1.bf16.msra.mxu0 %v347
    %381 = vmatprep.subr.bf16.mxu0 %v350
    %382 = vmatpush1.bf16.msra.mxu0 %v349
    %383 = vmatprep.subr.bf16.mxu0 %v352
    %384 = vmatpush1.bf16.msra.mxu0 %v351
    %385 = vmatprep.subr.bf16.mxu0 0
    %386 = vmatpush1.bf16.msra.mxu0 0
    %387 = vmatprep.subr.bf16.mxu0 0
    %388 = vmatpush1.bf16.msra.mxu0 0
    %389 = vmatprep.subr.bf16.mxu0 0
    %390 = vmatpush1.bf16.msra.mxu0 0
    %391 = vmatprep.subr.bf16.mxu0 0
    %392 = vmatpush1.bf16.msra.mxu0 0
    %393 = vmatprep.subr.bf16.mxu0 0
    %394 = vmatpush1.bf16.msra.mxu0 0
    %395 = vmatprep.subr.bf16.mxu0 0
    %396 = vmatpush1.bf16.msra.mxu0 0
    %397 = vmatprep.subr.bf16.mxu0 0
    %398 = vmatpush1.bf16.msra.mxu0 0
    %399 = vmatprep.subr.bf16.mxu0 0
    %400 = vmatpush1.bf16.msra.mxu0 0
    %401 = vmatprep.mubr.bf16.mxu0 0
    %402 = vmatmul.mubr.bf16.gmra.mrb[0].mxu0 %v69
    %v403 = vpop.f32.mrb[0].mxu0
    %v404 = vadd.f32 %v251, %v403
    %v405 = vpop.f32.mrb[0].mxu0
    %v406 = vadd.f32 %v253, %v405
    %v407 = vpop.f32.mrb[0].mxu0
    %v408 = vadd.f32 %v255, %v407
    %v409 = vpop.f32.mrb[0].mxu0
    %v410 = vadd.f32 %v257, %v409
    %411 = vmatprep.mubr.bf16.mxu0 0
    %412 = vmatmul.mubr.bf16.gmra.mrb[0].mxu0 %v70
    %v413 = vpop.f32.mrb[0].mxu0
    %v414 = vadd.f32 %v261, %v413
    %v415 = vpop.f32.mrb[0].mxu0
    %v416 = vadd.f32 %v263, %v415
    %v417 = vpop.f32.mrb[0].mxu0
    %v418 = vadd.f32 %v265, %v417
    %v419 = vpop.f32.mrb[0].mxu0
    %v420 = vadd.f32 %v267, %v419
    %421 = vmatprep.mubr.bf16.mxu0 0
    %422 = vmatmul.mubr.bf16.gmra.mrb[0].mxu0 %v71
    %v423 = vpop.f32.mrb[0].mxu0
    %v424 = vadd.f32 %v271, %v423
    %v425 = vpop.f32.mrb[0].mxu0
    %v426 = vadd.f32 %v273, %v425
    %v427 = vpop.f32.mrb[0].mxu0
    %v428 = vadd.f32 %v275, %v427
    %v429 = vpop.f32.mrb[0].mxu0
    %v430 = vadd.f32 %v277, %v429
    %431 = vmatprep.mubr.bf16.mxu0 0
    %432 = vmatmul.mubr.bf16.gmra.mrb[0].mxu0 %v72
    %v433 = vpop.f32.mrb[0].mxu0
    %v434 = vadd.f32 %v281, %v433
    %v435 = vpop.f32.mrb[0].mxu0
    %v436 = vadd.f32 %v283, %v435
    %v437 = vpop.f32.mrb[0].mxu0
    %v438 = vadd.f32 %v285, %v437
    %v439 = vpop.f32.mrb[0].mxu0
    %v440 = vadd.f32 %v287, %v439
    %441 = vdwg.mxu0
    %s442 = scalar_lea.vmem %s1, 384
    %v443 = vld [vmem:[%s442] sm:$0xff]
    %v444 = vld [vmem:[%s442 + $0x8] sm:$0xff]
    %v445 = vld [vmem:[%s442 + $0x10] sm:$0xff]
    %v446 = vld [vmem:[%s442 + $0x18] sm:$0xff]
    %v447 = vld [vmem:[%s442 + $0x20] sm:$0xff]
    %v448 = vld [vmem:[%s442 + $0x28] sm:$0xff]
    %v449 = vld [vmem:[%s442 + $0x30] sm:$0xff]
    %v450 = vld [vmem:[%s442 + $0x38] sm:$0xff]
    %v451 = vld [vmem:[%s442 + $0x40] sm:$0xff]
    %v452 = vld [vmem:[%s442 + $0x48] sm:$0xff]
    %v453 = vld [vmem:[%s442 + $0x50] sm:$0xff]
    %v454 = vld [vmem:[%s442 + $0x58] sm:$0xff]
    %v455 = vld [vmem:[%s442 + $0x60] sm:$0xff]
    %v456 = vld [vmem:[%s442 + $0x68] sm:$0xff]
    %v457 = vld [vmem:[%s442 + $0x70] sm:$0xff]
    %v458 = vld [vmem:[%s442 + $0x78] sm:$0xff]
    %v475 = vunpack.c.l.b16 %v443
    %v476 = vunpack.c.h.b16 %v443
    %v477 = vunpack.c.l.b16 %v444
    %v478 = vunpack.c.h.b16 %v444
    %v479 = vunpack.c.l.b16 %v445
    %v480 = vunpack.c.h.b16 %v445
    %v481 = vunpack.c.l.b16 %v446
    %v482 = vunpack.c.h.b16 %v446
    %v483 = vunpack.c.l.b16 %v447
    %v484 = vunpack.c.h.b16 %v447
    %v485 = vunpack.c.l.b16 %v448
    %v486 = vunpack.c.h.b16 %v448
    %v487 = vunpack.c.l.b16 %v449
    %v488 = vunpack.c.h.b16 %v449
    %v489 = vunpack.c.l.b16 %v450
    %v490 = vunpack.c.h.b16 %v450
    %v491 = vunpack.c.l.b16 %v451
    %v492 = vunpack.c.h.b16 %v451
    %v493 = vunpack.c.l.b16 %v452
    %v494 = vunpack.c.h.b16 %v452
    %v495 = vunpack.c.l.b16 %v453
    %v496 = vunpack.c.h.b16 %v453
    %v497 = vunpack.c.l.b16 %v454
    %v498 = vunpack.c.h.b16 %v454
    %v499 = vunpack.c.l.b16 %v455
    %v500 = vunpack.c.h.b16 %v455
    %v501 = vunpack.c.l.b16 %v456
    %v502 = vunpack.c.h.b16 %v456
    %v503 = vunpack.c.l.b16 %v457
    %v504 = vunpack.c.h.b16 %v457
    %v505 = vunpack.c.l.b16 %v458
    %v506 = vunpack.c.h.b16 %v458
    %v507 = vpack.c.b16 %v477, %v475
    %v508 = vpack.c.b16 %v478, %v476
    %v509 = vpack.c.b16 %v481, %v479
    %v510 = vpack.c.b16 %v482, %v480
    %v511 = vpack.c.b16 %v485, %v483
    %v512 = vpack.c.b16 %v486, %v484
    %v513 = vpack.c.b16 %v489, %v487
    %v514 = vpack.c.b16 %v490, %v488
    %v515 = vpack.c.b16 %v493, %v491
    %v516 = vpack.c.b16 %v494, %v492
    %v517 = vpack.c.b16 %v497, %v495
    %v518 = vpack.c.b16 %v498, %v496
    %v519 = vpack.c.b16 %v501, %v499
    %v520 = vpack.c.b16 %v502, %v500
    %v521 = vpack.c.b16 %v505, %v503
    %v522 = vpack.c.b16 %v506, %v504
    %539 = vmatprep.subr.bf16.mxu0 %v508
    %540 = vmatpush1.bf16.msra.mxu0 %v507
    %541 = vmatprep.subr.bf16.mxu0 %v510
    %542 = vmatpush1.bf16.msra.mxu0 %v509
    %543 = vmatprep.subr.bf16.mxu0 %v512
    %544 = vmatpush1.bf16.msra.mxu0 %v511
    %545 = vmatprep.subr.bf16.mxu0 %v514
    %546 = vmatpush1.bf16.msra.mxu0 %v513
    %547 = vmatprep.subr.bf16.mxu0 %v516
    %548 = vmatpush1.bf16.msra.mxu0 %v515
    %549 = vmatprep.subr.bf16.mxu0 %v518
    %550 = vmatpush1.bf16.msra.mxu0 %v517
    %551 = vmatprep.subr.bf16.mxu0 %v520
    %552 = vmatpush1.bf16.msra.mxu0 %v519
    %553 = vmatprep.subr.bf16.mxu0 %v522
    %554 = vmatpush1.bf16.msra.mxu0 %v521
    %555 = vmatprep.subr.bf16.mxu0 0
    %556 = vmatpush1.bf16.msra.mxu0 0
    %557 = vmatprep.subr.bf16.mxu0 0
    %558 = vmatpush1.bf16.msra.mxu0 0
    %559 = vmatprep.subr.bf16.mxu0 0
    %560 = vmatpush1.bf16.msra.mxu0 0
    %561 = vmatprep.subr.bf16.mxu0 0
    %562 = vmatpush1.bf16.msra.mxu0 0
    %563 = vmatprep.subr.bf16.mxu0 0
    %564 = vmatpush1.bf16.msra.mxu0 0
    %565 = vmatprep.subr.bf16.mxu0 0
    %566 = vmatpush1.bf16.msra.mxu0 0
    %567 = vmatprep.subr.bf16.mxu0 0
    %568 = vmatpush1.bf16.msra.mxu0 0
    %569 = vmatprep.subr.bf16.mxu0 0
    %570 = vmatpush1.bf16.msra.mxu0 0
    %571 = vmatprep.mubr.bf16.mxu0 0
    %572 = vmatmul.mubr.bf16.gmra.mrb[0].mxu0 %v115
    %v573 = vpop.f32.mrb[0].mxu0
    %v574 = vadd.f32 0.0, %v573
    %v575 = vpop.f32.mrb[0].mxu0
    %v576 = vadd.f32 0.0, %v575
    %v577 = vpop.f32.mrb[0].mxu0
    %v578 = vadd.f32 0.0, %v577
    %v579 = vpop.f32.mrb[0].mxu0
    %v580 = vadd.f32 0.0, %v579
    %581 = vmatprep.mubr.bf16.mxu0 0
    %582 = vmatmul.mubr.bf16.gmra.mrb[0].mxu0 %v116
    %v583 = vpop.f32.mrb[0].mxu0
    %v584 = vadd.f32 0.0, %v583
    %v585 = vpop.f32.mrb[0].mxu0
    %v586 = vadd.f32 0.0, %v585
    %v587 = vpop.f32.mrb[0].mxu0
    %v588 = vadd.f32 0.0, %v587
    %v589 = vpop.f32.mrb[0].mxu0
    %v590 = vadd.f32 0.0, %v589
    %591 = vmatprep.mubr.bf16.mxu0 0
    %592 = vmatmul.mubr.bf16.gmra.mrb[0].mxu0 %v117
    %v593 = vpop.f32.mrb[0].mxu0
    %v594 = vadd.f32 0.0, %v593
    %v595 = vpop.f32.mrb[0].mxu0
    %v596 = vadd.f32 0.0, %v595
    %v597 = vpop.f32.mrb[0].mxu0
    %v598 = vadd.f32 0.0, %v597
    %v599 = vpop.f32.mrb[0].mxu0
    %v600 = vadd.f32 0.0, %v599
    %601 = vmatprep.mubr.bf16.mxu0 0
    %602 = vmatmul.mubr.bf16.gmra.mrb[0].mxu0 %v118
    %v603 = vpop.f32.mrb[0].mxu0
    %v604 = vadd.f32 0.0, %v603
    %v605 = vpop.f32.mrb[0].mxu0
    %v606 = vadd.f32 0.0, %v605
    %v607 = vpop.f32.mrb[0].mxu0
    %v608 = vadd.f32 0.0, %v607
    %v609 = vpop.f32.mrb[0].mxu0
    %v610 = vadd.f32 0.0, %v609
    %611 = vdwg.mxu0
    %v628 = vunpack.c.l.b16 %v90
    %v629 = vunpack.c.h.b16 %v90
    %v630 = vunpack.c.l.b16 %v91
    %v631 = vunpack.c.h.b16 %v91
    %v632 = vunpack.c.l.b16 %v92
    %v633 = vunpack.c.h.b16 %v92
    %v634 = vunpack.c.l.b16 %v93
    %v635 = vunpack.c.h.b16 %v93
    %v636 = vunpack.c.l.b16 %v94
    %v637 = vunpack.c.h.b16 %v94
    %v638 = vunpack.c.l.b16 %v95
    %v639 = vunpack.c.h.b16 %v95
    %v640 = vunpack.c.l.b16 %v96
    %v641 = vunpack.c.h.b16 %v96
    %v642 = vunpack.c.l.b16 %v97
    %v643 = vunpack.c.h.b16 %v97
    %v644 = vunpack.c.l.b16 %v98
    %v645 = vunpack.c.h.b16 %v98
    %v646 = vunpack.c.l.b16 %v99
    %v647 = vunpack.c.h.b16 %v99
    %v648 = vunpack.c.l.b16 %v100
    %v649 = vunpack.c.h.b16 %v100
    %v650 = vunpack.c.l.b16 %v101
    %v651 = vunpack.c.h.b16 %v101
    %v652 = vunpack.c.l.b16 %v102
    %v653 = vunpack.c.h.b16 %v102
    %v654 = vunpack.c.l.b16 %v103
    %v655 = vunpack.c.h.b16 %v103
    %v656 = vunpack.c.l.b16 %v104
    %v657 = vunpack.c.h.b16 %v104
    %v658 = vunpack.c.l.b16 %v105
    %v659 = vunpack.c.h.b16 %v105
    %v660 = vpack.c.b16 %v630, %v628
    %v661 = vpack.c.b16 %v631, %v629
    %v662 = vpack.c.b16 %v634, %v632
    %v663 = vpack.c.b16 %v635, %v633
    %v664 = vpack.c.b16 %v638, %v636
    %v665 = vpack.c.b16 %v639, %v637
    %v666 = vpack.c.b16 %v642, %v640
    %v667 = vpack.c.b16 %v643, %v641
    %v668 = vpack.c.b16 %v646, %v644
    %v669 = vpack.c.b16 %v647, %v645
    %v670 = vpack.c.b16 %v650, %v648
    %v671 = vpack.c.b16 %v651, %v649
    %v672 = vpack.c.b16 %v654, %v652
    %v673 = vpack.c.b16 %v655, %v653
    %v674 = vpack.c.b16 %v658, %v656
    %v675 = vpack.c.b16 %v659, %v657
    %692 = vmatprep.subr.bf16.mxu0 %v661
    %693 = vmatpush1.bf16.msra.mxu0 %v660
    %694 = vmatprep.subr.bf16.mxu0 %v663
    %695 = vmatpush1.bf16.msra.mxu0 %v662
    %696 = vmatprep.subr.bf16.mxu0 %v665
    %697 = vmatpush1.bf16.msra.mxu0 %v664
    %698 = vmatprep.subr.bf16.mxu0 %v667
    %699 = vmatpush1.bf16.msra.mxu0 %v666
    %700 = vmatprep.subr.bf16.mxu0 %v669
    %701 = vmatpush1.bf16.msra.mxu0 %v668
    %702 = vmatprep.subr.bf16.mxu0 %v671
    %703 = vmatpush1.bf16.msra.mxu0 %v670
    %704 = vmatprep.subr.bf16.mxu0 %v673
    %705 = vmatpush1.bf16.msra.mxu0 %v672
    %706 = vmatprep.subr.bf16.mxu0 %v675
    %707 = vmatpush1.bf16.msra.mxu0 %v674
    %708 = vmatprep.subr.bf16.mxu0 0
    %709 = vmatpush1.bf16.msra.mxu0 0
    %710 = vmatprep.subr.bf16.mxu0 0
    %711 = vmatpush1.bf16.msra.mxu0 0
    %712 = vmatprep.subr.bf16.mxu0 0
    %713 = vmatpush1.bf16.msra.mxu0 0
    %714 = vmatprep.subr.bf16.mxu0 0
    %715 = vmatpush1.bf16.msra.mxu0 0
    %716 = vmatprep.subr.bf16.mxu0 0
    %717 = vmatpush1.bf16.msra.mxu0 0
    %718 = vmatprep.subr.bf16.mxu0 0
    %719 = vmatpush1.bf16.msra.mxu0 0
    %720 = vmatprep.subr.bf16.mxu0 0
    %721 = vmatpush1.bf16.msra.mxu0 0
    %722 = vmatprep.subr.bf16.mxu0 0
    %723 = vmatpush1.bf16.msra.mxu0 0
    %724 = vmatprep.mubr.bf16.mxu0 0
    %725 = vmatmul.mubr.bf16.gmra.mrb[0].mxu0 %v69
    %v726 = vpop.f32.mrb[0].mxu0
    %v727 = vadd.f32 %v574, %v726
    %v728 = vpop.f32.mrb[0].mxu0
    %v729 = vadd.f32 %v576, %v728
    %v730 = vpop.f32.mrb[0].mxu0
    %v731 = vadd.f32 %v578, %v730
    %v732 = vpop.f32.mrb[0].mxu0
    %v733 = vadd.f32 %v580, %v732
    %734 = vmatprep.mubr.bf16.mxu0 0
    %735 = vmatmul.mubr.bf16.gmra.mrb[0].mxu0 %v70
    %v736 = vpop.f32.mrb[0].mxu0
    %v737 = vadd.f32 %v584, %v736
    %v738 = vpop.f32.mrb[0].mxu0
    %v739 = vadd.f32 %v586, %v738
    %v740 = vpop.f32.mrb[0].mxu0
    %v741 = vadd.f32 %v588, %v740
    %v742 = vpop.f32.mrb[0].mxu0
    %v743 = vadd.f32 %v590, %v742
    %744 = vmatprep.mubr.bf16.mxu0 0
    %745 = vmatmul.mubr.bf16.gmra.mrb[0].mxu0 %v71
    %v746 = vpop.f32.mrb[0].mxu0
    %v747 = vadd.f32 %v594, %v746
    %v748 = vpop.f32.mrb[0].mxu0
    %v749 = vadd.f32 %v596, %v748
    %v750 = vpop.f32.mrb[0].mxu0
    %v751 = vadd.f32 %v598, %v750
    %v752 = vpop.f32.mrb[0].mxu0
    %v753 = vadd.f32 %v600, %v752
    %754 = vmatprep.mubr.bf16.mxu0 0
    %755 = vmatmul.mubr.bf16.gmra.mrb[0].mxu0 %v72
    %v756 = vpop.f32.mrb[0].mxu0
    %v757 = vadd.f32 %v604, %v756
    %v758 = vpop.f32.mrb[0].mxu0
    %v759 = vadd.f32 %v606, %v758
    %v760 = vpop.f32.mrb[0].mxu0
    %v761 = vadd.f32 %v608, %v760
    %v762 = vpop.f32.mrb[0].mxu0
    %v763 = vadd.f32 %v610, %v762
    %764 = vdwg.mxu0
    %s765 = scalar_lea.vmem %s0, 32
    %v766 = vld [vmem:[%s765] sm:$0xff]
    %v767 = vld [vmem:[%s765 + $0x8] sm:$0xff]
    %v768 = vld [vmem:[%s765 + $0x10] sm:$0xff]
    %v769 = vld [vmem:[%s765 + $0x18] sm:$0xff]
    %v770 = vld [vmem:[%s765 + $0x20] sm:$0xff]
    %v771 = vld [vmem:[%s765 + $0x28] sm:$0xff]
    %v772 = vld [vmem:[%s765 + $0x30] sm:$0xff]
    %v773 = vld [vmem:[%s765 + $0x38] sm:$0xff]
    %v774 = vpack.c.bf16 %v767, %v766
    %v775 = vpack.c.bf16 %v769, %v768
    %v776 = vpack.c.bf16 %v771, %v770
    %v777 = vpack.c.bf16 %v773, %v772
    %s778 = scalar_lea.vmem %s1, 512
    %v779 = vld [vmem:[%s778] sm:$0xff]
    %v780 = vld [vmem:[%s778 + $0x8] sm:$0xff]
    %v781 = vld [vmem:[%s778 + $0x10] sm:$0xff]
    %v782 = vld [vmem:[%s778 + $0x18] sm:$0xff]
    %v783 = vld [vmem:[%s778 + $0x20] sm:$0xff]
    %v784 = vld [vmem:[%s778 + $0x28] sm:$0xff]
    %v785 = vld [vmem:[%s778 + $0x30] sm:$0xff]
    %v786 = vld [vmem:[%s778 + $0x38] sm:$0xff]
    %v787 = vld [vmem:[%s778 + $0x40] sm:$0xff]
    %v788 = vld [vmem:[%s778 + $0x48] sm:$0xff]
    %v789 = vld [vmem:[%s778 + $0x50] sm:$0xff]
    %v790 = vld [vmem:[%s778 + $0x58] sm:$0xff]
    %v791 = vld [vmem:[%s778 + $0x60] sm:$0xff]
    %v792 = vld [vmem:[%s778 + $0x68] sm:$0xff]
    %v793 = vld [vmem:[%s778 + $0x70] sm:$0xff]
    %v794 = vld [vmem:[%s778 + $0x78] sm:$0xff]
    %v811 = vunpack.c.l.b16 %v779
    %v812 = vunpack.c.h.b16 %v779
    %v813 = vunpack.c.l.b16 %v780
    %v814 = vunpack.c.h.b16 %v780
    %v815 = vunpack.c.l.b16 %v781
    %v816 = vunpack.c.h.b16 %v781
    %v817 = vunpack.c.l.b16 %v782
    %v818 = vunpack.c.h.b16 %v782
    %v819 = vunpack.c.l.b16 %v783
    %v820 = vunpack.c.h.b16 %v783
    %v821 = vunpack.c.l.b16 %v784
    %v822 = vunpack.c.h.b16 %v784
    %v823 = vunpack.c.l.b16 %v785
    %v824 = vunpack.c.h.b16 %v785
    %v825 = vunpack.c.l.b16 %v786
    %v826 = vunpack.c.h.b16 %v786
    %v827 = vunpack.c.l.b16 %v787
    %v828 = vunpack.c.h.b16 %v787
    %v829 = vunpack.c.l.b16 %v788
    %v830 = vunpack.c.h.b16 %v788
    %v831 = vunpack.c.l.b16 %v789
    %v832 = vunpack.c.h.b16 %v789
    %v833 = vunpack.c.l.b16 %v790
    %v834 = vunpack.c.h.b16 %v790
    %v835 = vunpack.c.l.b16 %v791
    %v836 = vunpack.c.h.b16 %v791
    %v837 = vunpack.c.l.b16 %v792
    %v838 = vunpack.c.h.b16 %v792
    %v839 = vunpack.c.l.b16 %v793
    %v840 = vunpack.c.h.b16 %v793
    %v841 = vunpack.c.l.b16 %v794
    %v842 = vunpack.c.h.b16 %v794
    %v843 = vpack.c.b16 %v813, %v811
    %v844 = vpack.c.b16 %v814, %v812
    %v845 = vpack.c.b16 %v817, %v815
    %v846 = vpack.c.b16 %v818, %v816
    %v847 = vpack.c.b16 %v821, %v819
    %v848 = vpack.c.b16 %v822, %v820
    %v849 = vpack.c.b16 %v825, %v823
    %v850 = vpack.c.b16 %v826, %v824
    %v851 = vpack.c.b16 %v829, %v827
    %v852 = vpack.c.b16 %v830, %v828
    %v853 = vpack.c.b16 %v833, %v831
    %v854 = vpack.c.b16 %v834, %v832
    %v855 = vpack.c.b16 %v837, %v835
    %v856 = vpack.c.b16 %v838, %v836
    %v857 = vpack.c.b16 %v841, %v839
    %v858 = vpack.c.b16 %v842, %v840
    %875 = vmatprep.subr.bf16.mxu0 %v844
    %876 = vmatpush1.bf16.msra.mxu0 %v843
    %877 = vmatprep.subr.bf16.mxu0 %v846
    %878 = vmatpush1.bf16.msra.mxu0 %v845
    %879 = vmatprep.subr.bf16.mxu0 %v848
    %880 = vmatpush1.bf16.msra.mxu0 %v847
    %881 = vmatprep.subr.bf16.mxu0 %v850
    %882 = vmatpush1.bf16.msra.mxu0 %v849
    %883 = vmatprep.subr.bf16.mxu0 %v852
    %884 = vmatpush1.bf16.msra.mxu0 %v851
    %885 = vmatprep.subr.bf16.mxu0 %v854
    %886 = vmatpush1.bf16.msra.mxu0 %v853
    %887 = vmatprep.subr.bf16.mxu0 %v856
    %888 = vmatpush1.bf16.msra.mxu0 %v855
    %889 = vmatprep.subr.bf16.mxu0 %v858
    %890 = vmatpush1.bf16.msra.mxu0 %v857
    %891 = vmatprep.subr.bf16.mxu0 0
    %892 = vmatpush1.bf16.msra.mxu0 0
    %893 = vmatprep.subr.bf16.mxu0 0
    %894 = vmatpush1.bf16.msra.mxu0 0
    %895 = vmatprep.subr.bf16.mxu0 0
    %896 = vmatpush1.bf16.msra.mxu0 0
    %897 = vmatprep.subr.bf16.mxu0 0
    %898 = vmatpush1.bf16.msra.mxu0 0
    %899 = vmatprep.subr.bf16.mxu0 0
    %900 = vmatpush1.bf16.msra.mxu0 0
    %901 = vmatprep.subr.bf16.mxu0 0
    %902 = vmatpush1.bf16.msra.mxu0 0
    %903 = vmatprep.subr.bf16.mxu0 0
    %904 = vmatpush1.bf16.msra.mxu0 0
    %905 = vmatprep.subr.bf16.mxu0 0
    %906 = vmatpush1.bf16.msra.mxu0 0
    %907 = vmatprep.mubr.bf16.mxu0 0
    %908 = vmatmul.mubr.bf16.gmra.mrb[0].mxu0 %v774
    %v909 = vpop.f32.mrb[0].mxu0
    %v910 = vadd.f32 0.0, %v909
    %v911 = vpop.f32.mrb[0].mxu0
    %v912 = vadd.f32 0.0, %v911
    %v913 = vpop.f32.mrb[0].mxu0
    %v914 = vadd.f32 0.0, %v913
    %v915 = vpop.f32.mrb[0].mxu0
    %v916 = vadd.f32 0.0, %v915
    %917 = vmatprep.mubr.bf16.mxu0 0
    %918 = vmatmul.mubr.bf16.gmra.mrb[0].mxu0 %v775
    %v919 = vpop.f32.mrb[0].mxu0
    %v920 = vadd.f32 0.0, %v919
    %v921 = vpop.f32.mrb[0].mxu0
    %v922 = vadd.f32 0.0, %v921
    %v923 = vpop.f32.mrb[0].mxu0
    %v924 = vadd.f32 0.0, %v923
    %v925 = vpop.f32.mrb[0].mxu0
    %v926 = vadd.f32 0.0, %v925
    %927 = vmatprep.mubr.bf16.mxu0 0
    %928 = vmatmul.mubr.bf16.gmra.mrb[0].mxu0 %v776
    %v929 = vpop.f32.mrb[0].mxu0
    %v930 = vadd.f32 0.0, %v929
    %v931 = vpop.f32.mrb[0].mxu0
    %v932 = vadd.f32 0.0, %v931
    %v933 = vpop.f32.mrb[0].mxu0
    %v934 = vadd.f32 0.0, %v933
    %v935 = vpop.f32.mrb[0].mxu0
    %v936 = vadd.f32 0.0, %v935
    %937 = vmatprep.mubr.bf16.mxu0 0
    %938 = vmatmul.mubr.bf16.gmra.mrb[0].mxu0 %v777
    %v939 = vpop.f32.mrb[0].mxu0
    %v940 = vadd.f32 0.0, %v939
    %v941 = vpop.f32.mrb[0].mxu0
    %v942 = vadd.f32 0.0, %v941
    %v943 = vpop.f32.mrb[0].mxu0
    %v944 = vadd.f32 0.0, %v943
    %v945 = vpop.f32.mrb[0].mxu0
    %v946 = vadd.f32 0.0, %v945
    %947 = vdwg.mxu0
    %v948 = vadd.f32 %v404, %v910
    %v949 = vadd.f32 %v406, %v912
    %v950 = vadd.f32 %v408, %v914
    %v951 = vadd.f32 %v410, %v916
    %v952 = vadd.f32 %v414, %v920
    %v953 = vadd.f32 %v416, %v922
    %v954 = vadd.f32 %v418, %v924
    %v955 = vadd.f32 %v420, %v926
    %v956 = vadd.f32 %v424, %v930
    %v957 = vadd.f32 %v426, %v932
    %v958 = vadd.f32 %v428, %v934
    %v959 = vadd.f32 %v430, %v936
    %v960 = vadd.f32 %v434, %v940
    %v961 = vadd.f32 %v436, %v942
    %v962 = vadd.f32 %v438, %v944
    %v963 = vadd.f32 %v440, %v946
    %s964 = scalar_lea.vmem %s1, 640
    %v965 = vld [vmem:[%s964] sm:$0xff]
    %v966 = vld [vmem:[%s964 + $0x8] sm:$0xff]
    %v967 = vld [vmem:[%s964 + $0x10] sm:$0xff]
    %v968 = vld [vmem:[%s964 + $0x18] sm:$0xff]
    %v969 = vld [vmem:[%s964 + $0x20] sm:$0xff]
    %v970 = vld [vmem:[%s964 + $0x28] sm:$0xff]
    %v971 = vld [vmem:[%s964 + $0x30] sm:$0xff]
    %v972 = vld [vmem:[%s964 + $0x38] sm:$0xff]
    %v973 = vld [vmem:[%s964 + $0x40] sm:$0xff]
    %v974 = vld [vmem:[%s964 + $0x48] sm:$0xff]
    %v975 = vld [vmem:[%s964 + $0x50] sm:$0xff]
    %v976 = vld [vmem:[%s964 + $0x58] sm:$0xff]
    %v977 = vld [vmem:[%s964 + $0x60] sm:$0xff]
    %v978 = vld [vmem:[%s964 + $0x68] sm:$0xff]
    %v979 = vld [vmem:[%s964 + $0x70] sm:$0xff]
    %v980 = vld [vmem:[%s964 + $0x78] sm:$0xff]
    %v997 = vunpack.c.l.b16 %v965
    %v998 = vunpack.c.h.b16 %v965
    %v999 = vunpack.c.l.b16 %v966
    %v1000 = vunpack.c.h.b16 %v966
    %v1001 = vunpack.c.l.b16 %v967
    %v1002 = vunpack.c.h.b16 %v967
    %v1003 = vunpack.c.l.b16 %v968
    %v1004 = vunpack.c.h.b16 %v968
    %v1005 = vunpack.c.l.b16 %v969
    %v1006 = vunpack.c.h.b16 %v969
    %v1007 = vunpack.c.l.b16 %v970
    %v1008 = vunpack.c.h.b16 %v970
    %v1009 = vunpack.c.l.b16 %v971
    %v1010 = vunpack.c.h.b16 %v971
    %v1011 = vunpack.c.l.b16 %v972
    %v1012 = vunpack.c.h.b16 %v972
    %v1013 = vunpack.c.l.b16 %v973
    %v1014 = vunpack.c.h.b16 %v973
    %v1015 = vunpack.c.l.b16 %v974
    %v1016 = vunpack.c.h.b16 %v974
    %v1017 = vunpack.c.l.b16 %v975
    %v1018 = vunpack.c.h.b16 %v975
    %v1019 = vunpack.c.l.b16 %v976
    %v1020 = vunpack.c.h.b16 %v976
    %v1021 = vunpack.c.l.b16 %v977
    %v1022 = vunpack.c.h.b16 %v977
    %v1023 = vunpack.c.l.b16 %v978
    %v1024 = vunpack.c.h.b16 %v978
    %v1025 = vunpack.c.l.b16 %v979
    %v1026 = vunpack.c.h.b16 %v979
    %v1027 = vunpack.c.l.b16 %v980
    %v1028 = vunpack.c.h.b16 %v980
    %v1029 = vpack.c.b16 %v999, %v997
    %v1030 = vpack.c.b16 %v1000, %v998
    %v1031 = vpack.c.b16 %v1003, %v1001
    %v1032 = vpack.c.b16 %v1004, %v1002
    %v1033 = vpack.c.b16 %v1007, %v1005
    %v1034 = vpack.c.b16 %v1008, %v1006
    %v1035 = vpack.c.b16 %v1011, %v1009
    %v1036 = vpack.c.b16 %v1012, %v1010
    %v1037 = vpack.c.b16 %v1015, %v1013
    %v1038 = vpack.c.b16 %v1016, %v1014
    %v1039 = vpack.c.b16 %v1019, %v1017
    %v1040 = vpack.c.b16 %v1020, %v1018
    %v1041 = vpack.c.b16 %v1023, %v1021
    %v1042 = vpack.c.b16 %v1024, %v1022
    %v1043 = vpack.c.b16 %v1027, %v1025
    %v1044 = vpack.c.b16 %v1028, %v1026
    %1061 = vmatprep.subr.bf16.mxu0 %v1030
    %1062 = vmatpush1.bf16.msra.mxu0 %v1029
    %1063 = vmatprep.subr.bf16.mxu0 %v1032
    %1064 = vmatpush1.bf16.msra.mxu0 %v1031
    %1065 = vmatprep.subr.bf16.mxu0 %v1034
    %1066 = vmatpush1.bf16.msra.mxu0 %v1033
    %1067 = vmatprep.subr.bf16.mxu0 %v1036
    %1068 = vmatpush1.bf16.msra.mxu0 %v1035
    %1069 = vmatprep.subr.bf16.mxu0 %v1038
    %1070 = vmatpush1.bf16.msra.mxu0 %v1037
    %1071 = vmatprep.subr.bf16.mxu0 %v1040
    %1072 = vmatpush1.bf16.msra.mxu0 %v1039
    %1073 = vmatprep.subr.bf16.mxu0 %v1042
    %1074 = vmatpush1.bf16.msra.mxu0 %v1041
    %1075 = vmatprep.subr.bf16.mxu0 %v1044
    %1076 = vmatpush1.bf16.msra.mxu0 %v1043
    %1077 = vmatprep.subr.bf16.mxu0 0
    %1078 = vmatpush1.bf16.msra.mxu0 0
    %1079 = vmatprep.subr.bf16.mxu0 0
    %1080 = vmatpush1.bf16.msra.mxu0 0
    %1081 = vmatprep.subr.bf16.mxu0 0
    %1082 = vmatpush1.bf16.msra.mxu0 0
    %1083 = vmatprep.subr.bf16.mxu0 0
    %1084 = vmatpush1.bf16.msra.mxu0 0
    %1085 = vmatprep.subr.bf16.mxu0 0
    %1086 = vmatpush1.bf16.msra.mxu0 0
    %1087 = vmatprep.subr.bf16.mxu0 0
    %1088 = vmatpush1.bf16.msra.mxu0 0
    %1089 = vmatprep.subr.bf16.mxu0 0
    %1090 = vmatpush1.bf16.msra.mxu0 0
    %1091 = vmatprep.subr.bf16.mxu0 0
    %1092 = vmatpush1.bf16.msra.mxu0 0
    %1093 = vmatprep.mubr.bf16.mxu0 0
    %1094 = vmatmul.mubr.bf16.gmra.mrb[0].mxu0 %v774
    %v1095 = vpop.f32.mrb[0].mxu0
    %v1096 = vadd.f32 0.0, %v1095
    %v1097 = vpop.f32.mrb[0].mxu0
    %v1098 = vadd.f32 0.0, %v1097
    %v1099 = vpop.f32.mrb[0].mxu0
    %v1100 = vadd.f32 0.0, %v1099
    %v1101 = vpop.f32.mrb[0].mxu0
    %v1102 = vadd.f32 0.0, %v1101
    %1103 = vmatprep.mubr.bf16.mxu0 0
    %1104 = vmatmul.mubr.bf16.gmra.mrb[0].mxu0 %v775
    %v1105 = vpop.f32.mrb[0].mxu0
    %v1106 = vadd.f32 0.0, %v1105
    %v1107 = vpop.f32.mrb[0].mxu0
    %v1108 = vadd.f32 0.0, %v1107
    %v1109 = vpop.f32.mrb[0].mxu0
    %v1110 = vadd.f32 0.0, %v1109
    %v1111 = vpop.f32.mrb[0].mxu0
    %v1112 = vadd.f32 0.0, %v1111
    %1113 = vmatprep.mubr.bf16.mxu0 0
    %1114 = vmatmul.mubr.bf16.gmra.mrb[0].mxu0 %v776
    %v1115 = vpop.f32.mrb[0].mxu0
    %v1116 = vadd.f32 0.0, %v1115
    %v1117 = vpop.f32.mrb[0].mxu0
    %v1118 = vadd.f32 0.0, %v1117
    %v1119 = vpop.f32.mrb[0].mxu0
    %v1120 = vadd.f32 0.0, %v1119
    %v1121 = vpop.f32.mrb[0].mxu0
    %v1122 = vadd.f32 0.0, %v1121
    %1123 = vmatprep.mubr.bf16.mxu0 0
    %1124 = vmatmul.mubr.bf16.gmra.mrb[0].mxu0 %v777
    %v1125 = vpop.f32.mrb[0].mxu0
    %v1126 = vadd.f32 0.0, %v1125
    %v1127 = vpop.f32.mrb[0].mxu0
    %v1128 = vadd.f32 0.0, %v1127
    %v1129 = vpop.f32.mrb[0].mxu0
    %v1130 = vadd.f32 0.0, %v1129
    %v1131 = vpop.f32.mrb[0].mxu0
    %v1132 = vadd.f32 0.0, %v1131
    %1133 = vdwg.mxu0
    %v1134 = vadd.f32 %v727, %v1096
    %v1135 = vadd.f32 %v729, %v1098
    %v1136 = vadd.f32 %v731, %v1100
    %v1137 = vadd.f32 %v733, %v1102
    %v1138 = vadd.f32 %v737, %v1106
    %v1139 = vadd.f32 %v739, %v1108
    %v1140 = vadd.f32 %v741, %v1110
    %v1141 = vadd.f32 %v743, %v1112
    %v1142 = vadd.f32 %v747, %v1116
    %v1143 = vadd.f32 %v749, %v1118
    %v1144 = vadd.f32 %v751, %v1120
    %v1145 = vadd.f32 %v753, %v1122
    %v1146 = vadd.f32 %v757, %v1126
    %v1147 = vadd.f32 %v759, %v1128
    %v1148 = vadd.f32 %v761, %v1130
    %v1149 = vadd.f32 %v763, %v1132
    %s1150 = scalar_lea.vmem %s0, 48
    %v1151 = vld [vmem:[%s1150] sm:$0xff]
    %v1152 = vld [vmem:[%s1150 + $0x8] sm:$0xff]
    %v1153 = vld [vmem:[%s1150 + $0x10] sm:$0xff]
    %v1154 = vld [vmem:[%s1150 + $0x18] sm:$0xff]
    %v1155 = vld [vmem:[%s1150 + $0x20] sm:$0xff]
    %v1156 = vld [vmem:[%s1150 + $0x28] sm:$0xff]
    %v1157 = vld [vmem:[%s1150 + $0x30] sm:$0xff]
    %v1158 = vld [vmem:[%s1150 + $0x38] sm:$0xff]
    %v1159 = vpack.c.bf16 %v1152, %v1151
    %v1160 = vpack.c.bf16 %v1154, %v1153
    %v1161 = vpack.c.bf16 %v1156, %v1155
    %v1162 = vpack.c.bf16 %v1158, %v1157
    %s1163 = scalar_lea.vmem %s1, 768
    %v1164 = vld [vmem:[%s1163] sm:$0xff]
    %v1165 = vld [vmem:[%s1163 + $0x8] sm:$0xff]
    %v1166 = vld [vmem:[%s1163 + $0x10] sm:$0xff]
    %v1167 = vld [vmem:[%s1163 + $0x18] sm:$0xff]
    %v1168 = vld [vmem:[%s1163 + $0x20] sm:$0xff]
    %v1169 = vld [vmem:[%s1163 + $0x28] sm:$0xff]
    %v1170 = vld [vmem:[%s1163 + $0x30] sm:$0xff]
    %v1171 = vld [vmem:[%s1163 + $0x38] sm:$0xff]
    %v1172 = vld [vmem:[%s1163 + $0x40] sm:$0xff]
    %v1173 = vld [vmem:[%s1163 + $0x48] sm:$0xff]
    %v1174 = vld [vmem:[%s1163 + $0x50] sm:$0xff]
    %v1175 = vld [vmem:[%s1163 + $0x58] sm:$0xff]
    %v1176 = vld [vmem:[%s1163 + $0x60] sm:$0xff]
    %v1177 = vld [vmem:[%s1163 + $0x68] sm:$0xff]
    %v1178 = vld [vmem:[%s1163 + $0x70] sm:$0xff]
    %v1179 = vld [vmem:[%s1163 + $0x78] sm:$0xff]
    %v1196 = vunpack.c.l.b16 %v1164
    %v1197 = vunpack.c.h.b16 %v1164
    %v1198 = vunpack.c.l.b16 %v1165
    %v1199 = vunpack.c.h.b16 %v1165
    %v1200 = vunpack.c.l.b16 %v1166
    %v1201 = vunpack.c.h.b16 %v1166
    %v1202 = vunpack.c.l.b16 %v1167
    %v1203 = vunpack.c.h.b16 %v1167
    %v1204 = vunpack.c.l.b16 %v1168
    %v1205 = vunpack.c.h.b16 %v1168
    %v1206 = vunpack.c.l.b16 %v1169
    %v1207 = vunpack.c.h.b16 %v1169
    %v1208 = vunpack.c.l.b16 %v1170
    %v1209 = vunpack.c.h.b16 %v1170
    %v1210 = vunpack.c.l.b16 %v1171
    %v1211 = vunpack.c.h.b16 %v1171
    %v1212 = vunpack.c.l.b16 %v1172
    %v1213 = vunpack.c.h.b16 %v1172
    %v1214 = vunpack.c.l.b16 %v1173
    %v1215 = vunpack.c.h.b16 %v1173
    %v1216 = vunpack.c.l.b16 %v1174
    %v1217 = vunpack.c.h.b16 %v1174
    %v1218 = vunpack.c.l.b16 %v1175
    %v1219 = vunpack.c.h.b16 %v1175
    %v1220 = vunpack.c.l.b16 %v1176
    %v1221 = vunpack.c.h.b16 %v1176
    %v1222 = vunpack.c.l.b16 %v1177
    %v1223 = vunpack.c.h.b16 %v1177
    %v1224 = vunpack.c.l.b16 %v1178
    %v1225 = vunpack.c.h.b16 %v1178
    %v1226 = vunpack.c.l.b16 %v1179
    %v1227 = vunpack.c.h.b16 %v1179
    %v1228 = vpack.c.b16 %v1198, %v1196
    %v1229 = vpack.c.b16 %v1199, %v1197
    %v1230 = vpack.c.b16 %v1202, %v1200
    %v1231 = vpack.c.b16 %v1203, %v1201
    %v1232 = vpack.c.b16 %v1206, %v1204
    %v1233 = vpack.c.b16 %v1207, %v1205
    %v1234 = vpack.c.b16 %v1210, %v1208
    %v1235 = vpack.c.b16 %v1211, %v1209
    %v1236 = vpack.c.b16 %v1214, %v1212
    %v1237 = vpack.c.b16 %v1215, %v1213
    %v1238 = vpack.c.b16 %v1218, %v1216
    %v1239 = vpack.c.b16 %v1219, %v1217
    %v1240 = vpack.c.b16 %v1222, %v1220
    %v1241 = vpack.c.b16 %v1223, %v1221
    %v1242 = vpack.c.b16 %v1226, %v1224
    %v1243 = vpack.c.b16 %v1227, %v1225
    %1260 = vmatprep.subr.bf16.mxu0 %v1229
    %1261 = vmatpush1.bf16.msra.mxu0 %v1228
    %1262 = vmatprep.subr.bf16.mxu0 %v1231
    %1263 = vmatpush1.bf16.msra.mxu0 %v1230
    %1264 = vmatprep.subr.bf16.mxu0 %v1233
    %1265 = vmatpush1.bf16.msra.mxu0 %v1232
    %1266 = vmatprep.subr.bf16.mxu0 %v1235
    %1267 = vmatpush1.bf16.msra.mxu0 %v1234
    %1268 = vmatprep.subr.bf16.mxu0 %v1237
    %1269 = vmatpush1.bf16.msra.mxu0 %v1236
    %1270 = vmatprep.subr.bf16.mxu0 %v1239
    %1271 = vmatpush1.bf16.msra.mxu0 %v1238
    %1272 = vmatprep.subr.bf16.mxu0 %v1241
    %1273 = vmatpush1.bf16.msra.mxu0 %v1240
    %1274 = vmatprep.subr.bf16.mxu0 %v1243
    %1275 = vmatpush1.bf16.msra.mxu0 %v1242
    %1276 = vmatprep.subr.bf16.mxu0 0
    %1277 = vmatpush1.bf16.msra.mxu0 0
    %1278 = vmatprep.subr.bf16.mxu0 0
    %1279 = vmatpush1.bf16.msra.mxu0 0
    %1280 = vmatprep.subr.bf16.mxu0 0
    %1281 = vmatpush1.bf16.msra.mxu0 0
    %1282 = vmatprep.subr.bf16.mxu0 0
    %1283 = vmatpush1.bf16.msra.mxu0 0
    %1284 = vmatprep.subr.bf16.mxu0 0
    %1285 = vmatpush1.bf16.msra.mxu0 0
    %1286 = vmatprep.subr.bf16.mxu0 0
    %1287 = vmatpush1.bf16.msra.mxu0 0
    %1288 = vmatprep.subr.bf16.mxu0 0
    %1289 = vmatpush1.bf16.msra.mxu0 0
    %1290 = vmatprep.subr.bf16.mxu0 0
    %1291 = vmatpush1.bf16.msra.mxu0 0
    %1292 = vmatprep.mubr.bf16.mxu0 0
    %1293 = vmatmul.mubr.bf16.gmra.mrb[0].mxu0 %v1159
    %v1294 = vpop.f32.mrb[0].mxu0
    %v1295 = vadd.f32 0.0, %v1294
    %v1296 = vpop.f32.mrb[0].mxu0
    %v1297 = vadd.f32 0.0, %v1296
    %v1298 = vpop.f32.mrb[0].mxu0
    %v1299 = vadd.f32 0.0, %v1298
    %v1300 = vpop.f32.mrb[0].mxu0
    %v1301 = vadd.f32 0.0, %v1300
    %1302 = vmatprep.mubr.bf16.mxu0 0
    %1303 = vmatmul.mubr.bf16.gmra.mrb[0].mxu0 %v1160
    %v1304 = vpop.f32.mrb[0].mxu0
    %v1305 = vadd.f32 0.0, %v1304
    %v1306 = vpop.f32.mrb[0].mxu0
    %v1307 = vadd.f32 0.0, %v1306
    %v1308 = vpop.f32.mrb[0].mxu0
    %v1309 = vadd.f32 0.0, %v1308
    %v1310 = vpop.f32.mrb[0].mxu0
    %v1311 = vadd.f32 0.0, %v1310
    %1312 = vmatprep.mubr.bf16.mxu0 0
    %1313 = vmatmul.mubr.bf16.gmra.mrb[0].mxu0 %v1161
    %v1314 = vpop.f32.mrb[0].mxu0
    %v1315 = vadd.f32 0.0, %v1314
    %v1316 = vpop.f32.mrb[0].mxu0
    %v1317 = vadd.f32 0.0, %v1316
    %v1318 = vpop.f32.mrb[0].mxu0
    %v1319 = vadd.f32 0.0, %v1318
    %v1320 = vpop.f32.mrb[0].mxu0
    %v1321 = vadd.f32 0.0, %v1320
    %1322 = vmatprep.mubr.bf16.mxu0 0
    %1323 = vmatmul.mubr.bf16.gmra.mrb[0].mxu0 %v1162
    %v1324 = vpop.f32.mrb[0].mxu0
    %v1325 = vadd.f32 0.0, %v1324
    %v1326 = vpop.f32.mrb[0].mxu0
    %v1327 = vadd.f32 0.0, %v1326
    %v1328 = vpop.f32.mrb[0].mxu0
    %v1329 = vadd.f32 0.0, %v1328
    %v1330 = vpop.f32.mrb[0].mxu0
    %v1331 = vadd.f32 0.0, %v1330
    %1332 = vdwg.mxu0
    %v1333 = vadd.f32 %v948, %v1295
    %v1334 = vadd.f32 %v949, %v1297
    %v1335 = vadd.f32 %v950, %v1299
    %v1336 = vadd.f32 %v951, %v1301
    %v1337 = vadd.f32 %v952, %v1305
    %v1338 = vadd.f32 %v953, %v1307
    %v1339 = vadd.f32 %v954, %v1309
    %v1340 = vadd.f32 %v955, %v1311
    %v1341 = vadd.f32 %v956, %v1315
    %v1342 = vadd.f32 %v957, %v1317
    %v1343 = vadd.f32 %v958, %v1319
    %v1344 = vadd.f32 %v959, %v1321
    %v1345 = vadd.f32 %v960, %v1325
    %v1346 = vadd.f32 %v961, %v1327
    %v1347 = vadd.f32 %v962, %v1329
    %v1348 = vadd.f32 %v963, %v1331
    %s1349 = scalar_lea.vmem %s1, 896
    %v1350 = vld [vmem:[%s1349] sm:$0xff]
    %v1351 = vld [vmem:[%s1349 + $0x8] sm:$0xff]
    %v1352 = vld [vmem:[%s1349 + $0x10] sm:$0xff]
    %v1353 = vld [vmem:[%s1349 + $0x18] sm:$0xff]
    %v1354 = vld [vmem:[%s1349 + $0x20] sm:$0xff]
    %v1355 = vld [vmem:[%s1349 + $0x28] sm:$0xff]
    %v1356 = vld [vmem:[%s1349 + $0x30] sm:$0xff]
    %v1357 = vld [vmem:[%s1349 + $0x38] sm:$0xff]
    %v1358 = vld [vmem:[%s1349 + $0x40] sm:$0xff]
    %v1359 = vld [vmem:[%s1349 + $0x48] sm:$0xff]
    %v1360 = vld [vmem:[%s1349 + $0x50] sm:$0xff]
    %v1361 = vld [vmem:[%s1349 + $0x58] sm:$0xff]
    %v1362 = vld [vmem:[%s1349 + $0x60] sm:$0xff]
    %v1363 = vld [vmem:[%s1349 + $0x68] sm:$0xff]
    %v1364 = vld [vmem:[%s1349 + $0x70] sm:$0xff]
    %v1365 = vld [vmem:[%s1349 + $0x78] sm:$0xff]
    %v1382 = vunpack.c.l.b16 %v1350
    %v1383 = vunpack.c.h.b16 %v1350
    %v1384 = vunpack.c.l.b16 %v1351
    %v1385 = vunpack.c.h.b16 %v1351
    %v1386 = vunpack.c.l.b16 %v1352
    %v1387 = vunpack.c.h.b16 %v1352
    %v1388 = vunpack.c.l.b16 %v1353
    %v1389 = vunpack.c.h.b16 %v1353
    %v1390 = vunpack.c.l.b16 %v1354
    %v1391 = vunpack.c.h.b16 %v1354
    %v1392 = vunpack.c.l.b16 %v1355
    %v1393 = vunpack.c.h.b16 %v1355
    %v1394 = vunpack.c.l.b16 %v1356
    %v1395 = vunpack.c.h.b16 %v1356
    %v1396 = vunpack.c.l.b16 %v1357
    %v1397 = vunpack.c.h.b16 %v1357
    %v1398 = vunpack.c.l.b16 %v1358
    %v1399 = vunpack.c.h.b16 %v1358
    %v1400 = vunpack.c.l.b16 %v1359
    %v1401 = vunpack.c.h.b16 %v1359
    %v1402 = vunpack.c.l.b16 %v1360
    %v1403 = vunpack.c.h.b16 %v1360
    %v1404 = vunpack.c.l.b16 %v1361
    %v1405 = vunpack.c.h.b16 %v1361
    %v1406 = vunpack.c.l.b16 %v1362
    %v1407 = vunpack.c.h.b16 %v1362
    %v1408 = vunpack.c.l.b16 %v1363
    %v1409 = vunpack.c.h.b16 %v1363
    %v1410 = vunpack.c.l.b16 %v1364
    %v1411 = vunpack.c.h.b16 %v1364
    %v1412 = vunpack.c.l.b16 %v1365
    %v1413 = vunpack.c.h.b16 %v1365
    %v1414 = vpack.c.b16 %v1384, %v1382
    %v1415 = vpack.c.b16 %v1385, %v1383
    %v1416 = vpack.c.b16 %v1388, %v1386
    %v1417 = vpack.c.b16 %v1389, %v1387
    %v1418 = vpack.c.b16 %v1392, %v1390
    %v1419 = vpack.c.b16 %v1393, %v1391
    %v1420 = vpack.c.b16 %v1396, %v1394
    %v1421 = vpack.c.b16 %v1397, %v1395
    %v1422 = vpack.c.b16 %v1400, %v1398
    %v1423 = vpack.c.b16 %v1401, %v1399
    %v1424 = vpack.c.b16 %v1404, %v1402
    %v1425 = vpack.c.b16 %v1405, %v1403
    %v1426 = vpack.c.b16 %v1408, %v1406
    %v1427 = vpack.c.b16 %v1409, %v1407
    %v1428 = vpack.c.b16 %v1412, %v1410
    %v1429 = vpack.c.b16 %v1413, %v1411
    %1446 = vmatprep.subr.bf16.mxu0 %v1415
    %1447 = vmatpush1.bf16.msra.mxu0 %v1414
    %1448 = vmatprep.subr.bf16.mxu0 %v1417
    %1449 = vmatpush1.bf16.msra.mxu0 %v1416
    %1450 = vmatprep.subr.bf16.mxu0 %v1419
    %1451 = vmatpush1.bf16.msra.mxu0 %v1418
    %1452 = vmatprep.subr.bf16.mxu0 %v1421
    %1453 = vmatpush1.bf16.msra.mxu0 %v1420
    %1454 = vmatprep.subr.bf16.mxu0 %v1423
    %1455 = vmatpush1.bf16.msra.mxu0 %v1422
    %1456 = vmatprep.subr.bf16.mxu0 %v1425
    %1457 = vmatpush1.bf16.msra.mxu0 %v1424
    %1458 = vmatprep.subr.bf16.mxu0 %v1427
    %1459 = vmatpush1.bf16.msra.mxu0 %v1426
    %1460 = vmatprep.subr.bf16.mxu0 %v1429
    %1461 = vmatpush1.bf16.msra.mxu0 %v1428
    %1462 = vmatprep.subr.bf16.mxu0 0
    %1463 = vmatpush1.bf16.msra.mxu0 0
    %1464 = vmatprep.subr.bf16.mxu0 0
    %1465 = vmatpush1.bf16.msra.mxu0 0
    %1466 = vmatprep.subr.bf16.mxu0 0
    %1467 = vmatpush1.bf16.msra.mxu0 0
    %1468 = vmatprep.subr.bf16.mxu0 0
    %1469 = vmatpush1.bf16.msra.mxu0 0
    %1470 = vmatprep.subr.bf16.mxu0 0
    %1471 = vmatpush1.bf16.msra.mxu0 0
    %1472 = vmatprep.subr.bf16.mxu0 0
    %1473 = vmatpush1.bf16.msra.mxu0 0
    %1474 = vmatprep.subr.bf16.mxu0 0
    %1475 = vmatpush1.bf16.msra.mxu0 0
    %1476 = vmatprep.subr.bf16.mxu0 0
    %1477 = vmatpush1.bf16.msra.mxu0 0
    %1478 = vmatprep.mubr.bf16.mxu0 0
    %1479 = vmatmul.mubr.bf16.gmra.mrb[0].mxu0 %v1159
    %v1480 = vpop.f32.mrb[0].mxu0
    %v1481 = vadd.f32 0.0, %v1480
    %v1482 = vpop.f32.mrb[0].mxu0
    %v1483 = vadd.f32 0.0, %v1482
    %v1484 = vpop.f32.mrb[0].mxu0
    %v1485 = vadd.f32 0.0, %v1484
    %v1486 = vpop.f32.mrb[0].mxu0
    %v1487 = vadd.f32 0.0, %v1486
    %1488 = vmatprep.mubr.bf16.mxu0 0
    %1489 = vmatmul.mubr.bf16.gmra.mrb[0].mxu0 %v1160
    %v1490 = vpop.f32.mrb[0].mxu0
    %v1491 = vadd.f32 0.0, %v1490
    %v1492 = vpop.f32.mrb[0].mxu0
    %v1493 = vadd.f32 0.0, %v1492
    %v1494 = vpop.f32.mrb[0].mxu0
    %v1495 = vadd.f32 0.0, %v1494
    %v1496 = vpop.f32.mrb[0].mxu0
    %v1497 = vadd.f32 0.0, %v1496
    %1498 = vmatprep.mubr.bf16.mxu0 0
    %1499 = vmatmul.mubr.bf16.gmra.mrb[0].mxu0 %v1161
    %v1500 = vpop.f32.mrb[0].mxu0
    %v1501 = vadd.f32 0.0, %v1500
    %v1502 = vpop.f32.mrb[0].mxu0
    %v1503 = vadd.f32 0.0, %v1502
    %v1504 = vpop.f32.mrb[0].mxu0
    %v1505 = vadd.f32 0.0, %v1504
    %v1506 = vpop.f32.mrb[0].mxu0
    %v1507 = vadd.f32 0.0, %v1506
    %1508 = vmatprep.mubr.bf16.mxu0 0
    %1509 = vmatmul.mubr.bf16.gmra.mrb[0].mxu0 %v1162
    %v1510 = vpop.f32.mrb[0].mxu0
    %v1511 = vadd.f32 0.0, %v1510
    %v1512 = vpop.f32.mrb[0].mxu0
    %v1513 = vadd.f32 0.0, %v1512
    %v1514 = vpop.f32.mrb[0].mxu0
    %v1515 = vadd.f32 0.0, %v1514
    %v1516 = vpop.f32.mrb[0].mxu0
    %v1517 = vadd.f32 0.0, %v1516
    %1518 = vdwg.mxu0
    %v1519 = vadd.f32 %v1134, %v1481
    %v1520 = vadd.f32 %v1135, %v1483
    %v1521 = vadd.f32 %v1136, %v1485
    %v1522 = vadd.f32 %v1137, %v1487
    %v1523 = vadd.f32 %v1138, %v1491
    %v1524 = vadd.f32 %v1139, %v1493
    %v1525 = vadd.f32 %v1140, %v1495
    %v1526 = vadd.f32 %v1141, %v1497
    %v1527 = vadd.f32 %v1142, %v1501
    %v1528 = vadd.f32 %v1143, %v1503
    %v1529 = vadd.f32 %v1144, %v1505
    %v1530 = vadd.f32 %v1145, %v1507
    %v1531 = vadd.f32 %v1146, %v1511
    %v1532 = vadd.f32 %v1147, %v1513
    %v1533 = vadd.f32 %v1148, %v1515
    %v1534 = vadd.f32 %v1149, %v1517
    %s1535 = scalar_lea.vmem %s0, 64
    %v1536 = vld [vmem:[%s1535] sm:$0xff]
    %v1537 = vld [vmem:[%s1535 + $0x8] sm:$0xff]
    %v1538 = vld [vmem:[%s1535 + $0x10] sm:$0xff]
    %v1539 = vld [vmem:[%s1535 + $0x18] sm:$0xff]
    %v1540 = vld [vmem:[%s1535 + $0x20] sm:$0xff]
    %v1541 = vld [vmem:[%s1535 + $0x28] sm:$0xff]
    %v1542 = vld [vmem:[%s1535 + $0x30] sm:$0xff]
    %v1543 = vld [vmem:[%s1535 + $0x38] sm:$0xff]
    %v1544 = vpack.c.bf16 %v1537, %v1536
    %v1545 = vpack.c.bf16 %v1539, %v1538
    %v1546 = vpack.c.bf16 %v1541, %v1540
    %v1547 = vpack.c.bf16 %v1543, %v1542
    %s1548 = scalar_lea.vmem %s1, 1024
    %v1549 = vld [vmem:[%s1548] sm:$0xff]
    %v1550 = vld [vmem:[%s1548 + $0x8] sm:$0xff]
    %v1551 = vld [vmem:[%s1548 + $0x10] sm:$0xff]
    %v1552 = vld [vmem:[%s1548 + $0x18] sm:$0xff]
    %v1553 = vld [vmem:[%s1548 + $0x20] sm:$0xff]
    %v1554 = vld [vmem:[%s1548 + $0x28] sm:$0xff]
    %v1555 = vld [vmem:[%s1548 + $0x30] sm:$0xff]
    %v1556 = vld [vmem:[%s1548 + $0x38] sm:$0xff]
    %v1557 = vld [vmem:[%s1548 + $0x40] sm:$0xff]
    %v1558 = vld [vmem:[%s1548 + $0x48] sm:$0xff]
    %v1559 = vld [vmem:[%s1548 + $0x50] sm:$0xff]
    %v1560 = vld [vmem:[%s1548 + $0x58] sm:$0xff]
    %v1561 = vld [vmem:[%s1548 + $0x60] sm:$0xff]
    %v1562 = vld [vmem:[%s1548 + $0x68] sm:$0xff]
    %v1563 = vld [vmem:[%s1548 + $0x70] sm:$0xff]
    %v1564 = vld [vmem:[%s1548 + $0x78] sm:$0xff]
    %v1581 = vunpack.c.l.b16 %v1549
    %v1582 = vunpack.c.h.b16 %v1549
    %v1583 = vunpack.c.l.b16 %v1550
    %v1584 = vunpack.c.h.b16 %v1550
    %v1585 = vunpack.c.l.b16 %v1551
    %v1586 = vunpack.c.h.b16 %v1551
    %v1587 = vunpack.c.l.b16 %v1552
    %v1588 = vunpack.c.h.b16 %v1552
    %v1589 = vunpack.c.l.b16 %v1553
    %v1590 = vunpack.c.h.b16 %v1553
    %v1591 = vunpack.c.l.b16 %v1554
    %v1592 = vunpack.c.h.b16 %v1554
    %v1593 = vunpack.c.l.b16 %v1555
    %v1594 = vunpack.c.h.b16 %v1555
    %v1595 = vunpack.c.l.b16 %v1556
    %v1596 = vunpack.c.h.b16 %v1556
    %v1597 = vunpack.c.l.b16 %v1557
    %v1598 = vunpack.c.h.b16 %v1557
    %v1599 = vunpack.c.l.b16 %v1558
    %v1600 = vunpack.c.h.b16 %v1558
    %v1601 = vunpack.c.l.b16 %v1559
    %v1602 = vunpack.c.h.b16 %v1559
    %v1603 = vunpack.c.l.b16 %v1560
    %v1604 = vunpack.c.h.b16 %v1560
    %v1605 = vunpack.c.l.b16 %v1561
    %v1606 = vunpack.c.h.b16 %v1561
    %v1607 = vunpack.c.l.b16 %v1562
    %v1608 = vunpack.c.h.b16 %v1562
    %v1609 = vunpack.c.l.b16 %v1563
    %v1610 = vunpack.c.h.b16 %v1563
    %v1611 = vunpack.c.l.b16 %v1564
    %v1612 = vunpack.c.h.b16 %v1564
    %v1613 = vpack.c.b16 %v1583, %v1581
    %v1614 = vpack.c.b16 %v1584, %v1582
    %v1615 = vpack.c.b16 %v1587, %v1585
    %v1616 = vpack.c.b16 %v1588, %v1586
    %v1617 = vpack.c.b16 %v1591, %v1589
    %v1618 = vpack.c.b16 %v1592, %v1590
    %v1619 = vpack.c.b16 %v1595, %v1593
    %v1620 = vpack.c.b16 %v1596, %v1594
    %v1621 = vpack.c.b16 %v1599, %v1597
    %v1622 = vpack.c.b16 %v1600, %v1598
    %v1623 = vpack.c.b16 %v1603, %v1601
    %v1624 = vpack.c.b16 %v1604, %v1602
    %v1625 = vpack.c.b16 %v1607, %v1605
    %v1626 = vpack.c.b16 %v1608, %v1606
    %v1627 = vpack.c.b16 %v1611, %v1609
    %v1628 = vpack.c.b16 %v1612, %v1610
    %1645 = vmatprep.subr.bf16.mxu0 %v1614
    %1646 = vmatpush1.bf16.msra.mxu0 %v1613
    %1647 = vmatprep.subr.bf16.mxu0 %v1616
    %1648 = vmatpush1.bf16.msra.mxu0 %v1615
    %1649 = vmatprep.subr.bf16.mxu0 %v1618
    %1650 = vmatpush1.bf16.msra.mxu0 %v1617
    %1651 = vmatprep.subr.bf16.mxu0 %v1620
    %1652 = vmatpush1.bf16.msra.mxu0 %v1619
    %1653 = vmatprep.subr.bf16.mxu0 %v1622
    %1654 = vmatpush1.bf16.msra.mxu0 %v1621
    %1655 = vmatprep.subr.bf16.mxu0 %v1624
    %1656 = vmatpush1.bf16.msra.mxu0 %v1623
    %1657 = vmatprep.subr.bf16.mxu0 %v1626
    %1658 = vmatpush1.bf16.msra.mxu0 %v1625
    %1659 = vmatprep.subr.bf16.mxu0 %v1628
    %1660 = vmatpush1.bf16.msra.mxu0 %v1627
    %1661 = vmatprep.subr.bf16.mxu0 0
    %1662 = vmatpush1.bf16.msra.mxu0 0
    %1663 = vmatprep.subr.bf16.mxu0 0
    %1664 = vmatpush1.bf16.msra.mxu0 0
    %1665 = vmatprep.subr.bf16.mxu0 0
    %1666 = vmatpush1.bf16.msra.mxu0 0
    %1667 = vmatprep.subr.bf16.mxu0 0
    %1668 = vmatpush1.bf16.msra.mxu0 0
    %1669 = vmatprep.subr.bf16.mxu0 0
    %1670 = vmatpush1.bf16.msra.mxu0 0
    %1671 = vmatprep.subr.bf16.mxu0 0
    %1672 = vmatpush1.bf16.msra.mxu0 0
    %1673 = vmatprep.subr.bf16.mxu0 0
    %1674 = vmatpush1.bf16.msra.mxu0 0
    %1675 = vmatprep.subr.bf16.mxu0 0
    %1676 = vmatpush1.bf16.msra.mxu0 0
    %1677 = vmatprep.mubr.bf16.mxu0 0
    %1678 = vmatmul.mubr.bf16.gmra.mrb[0].mxu0 %v1544
    %v1679 = vpop.f32.mrb[0].mxu0
    %v1680 = vadd.f32 0.0, %v1679
    %v1681 = vpop.f32.mrb[0].mxu0
    %v1682 = vadd.f32 0.0, %v1681
    %v1683 = vpop.f32.mrb[0].mxu0
    %v1684 = vadd.f32 0.0, %v1683
    %v1685 = vpop.f32.mrb[0].mxu0
    %v1686 = vadd.f32 0.0, %v1685
    %1687 = vmatprep.mubr.bf16.mxu0 0
    %1688 = vmatmul.mubr.bf16.gmra.mrb[0].mxu0 %v1545
    %v1689 = vpop.f32.mrb[0].mxu0
    %v1690 = vadd.f32 0.0, %v1689
    %v1691 = vpop.f32.mrb[0].mxu0
    %v1692 = vadd.f32 0.0, %v1691
    %v1693 = vpop.f32.mrb[0].mxu0
    %v1694 = vadd.f32 0.0, %v1693
    %v1695 = vpop.f32.mrb[0].mxu0
    %v1696 = vadd.f32 0.0, %v1695
    %1697 = vmatprep.mubr.bf16.mxu0 0
    %1698 = vmatmul.mubr.bf16.gmra.mrb[0].mxu0 %v1546
    %v1699 = vpop.f32.mrb[0].mxu0
    %v1700 = vadd.f32 0.0, %v1699
    %v1701 = vpop.f32.mrb[0].mxu0
    %v1702 = vadd.f32 0.0, %v1701
    %v1703 = vpop.f32.mrb[0].mxu0
    %v1704 = vadd.f32 0.0, %v1703
    %v1705 = vpop.f32.mrb[0].mxu0
    %v1706 = vadd.f32 0.0, %v1705
    %1707 = vmatprep.mubr.bf16.mxu0 0
    %1708 = vmatmul.mubr.bf16.gmra.mrb[0].mxu0 %v1547
    %v1709 = vpop.f32.mrb[0].mxu0
    %v1710 = vadd.f32 0.0, %v1709
    %v1711 = vpop.f32.mrb[0].mxu0
    %v1712 = vadd.f32 0.0, %v1711
    %v1713 = vpop.f32.mrb[0].mxu0
    %v1714 = vadd.f32 0.0, %v1713
    %v1715 = vpop.f32.mrb[0].mxu0
    %v1716 = vadd.f32 0.0, %v1715
    %1717 = vdwg.mxu0
    %v1718 = vadd.f32 %v1333, %v1680
    %v1719 = vadd.f32 %v1334, %v1682
    %v1720 = vadd.f32 %v1335, %v1684
    %v1721 = vadd.f32 %v1336, %v1686
    %v1722 = vadd.f32 %v1337, %v1690
    %v1723 = vadd.f32 %v1338, %v1692
    %v1724 = vadd.f32 %v1339, %v1694
    %v1725 = vadd.f32 %v1340, %v1696
    %v1726 = vadd.f32 %v1341, %v1700
    %v1727 = vadd.f32 %v1342, %v1702
    %v1728 = vadd.f32 %v1343, %v1704
    %v1729 = vadd.f32 %v1344, %v1706
    %v1730 = vadd.f32 %v1345, %v1710
    %v1731 = vadd.f32 %v1346, %v1712
    %v1732 = vadd.f32 %v1347, %v1714
    %v1733 = vadd.f32 %v1348, %v1716
    %s1734 = scalar_lea.vmem %s1, 1152
    %v1735 = vld [vmem:[%s1734] sm:$0xff]
    %v1736 = vld [vmem:[%s1734 + $0x8] sm:$0xff]
    %v1737 = vld [vmem:[%s1734 + $0x10] sm:$0xff]
    %v1738 = vld [vmem:[%s1734 + $0x18] sm:$0xff]
    %v1739 = vld [vmem:[%s1734 + $0x20] sm:$0xff]
    %v1740 = vld [vmem:[%s1734 + $0x28] sm:$0xff]
    %v1741 = vld [vmem:[%s1734 + $0x30] sm:$0xff]
    %v1742 = vld [vmem:[%s1734 + $0x38] sm:$0xff]
    %v1743 = vld [vmem:[%s1734 + $0x40] sm:$0xff]
    %v1744 = vld [vmem:[%s1734 + $0x48] sm:$0xff]
    %v1745 = vld [vmem:[%s1734 + $0x50] sm:$0xff]
    %v1746 = vld [vmem:[%s1734 + $0x58] sm:$0xff]
    %v1747 = vld [vmem:[%s1734 + $0x60] sm:$0xff]
    %v1748 = vld [vmem:[%s1734 + $0x68] sm:$0xff]
    %v1749 = vld [vmem:[%s1734 + $0x70] sm:$0xff]
    %v1750 = vld [vmem:[%s1734 + $0x78] sm:$0xff]
    %v1767 = vunpack.c.l.b16 %v1735
    %v1768 = vunpack.c.h.b16 %v1735
    %v1769 = vunpack.c.l.b16 %v1736
    %v1770 = vunpack.c.h.b16 %v1736
    %v1771 = vunpack.c.l.b16 %v1737
    %v1772 = vunpack.c.h.b16 %v1737
    %v1773 = vunpack.c.l.b16 %v1738
    %v1774 = vunpack.c.h.b16 %v1738
    %v1775 = vunpack.c.l.b16 %v1739
    %v1776 = vunpack.c.h.b16 %v1739
    %v1777 = vunpack.c.l.b16 %v1740
    %v1778 = vunpack.c.h.b16 %v1740
    %v1779 = vunpack.c.l.b16 %v1741
    %v1780 = vunpack.c.h.b16 %v1741
    %v1781 = vunpack.c.l.b16 %v1742
    %v1782 = vunpack.c.h.b16 %v1742
    %v1783 = vunpack.c.l.b16 %v1743
    %v1784 = vunpack.c.h.b16 %v1743
    %v1785 = vunpack.c.l.b16 %v1744
    %v1786 = vunpack.c.h.b16 %v1744
    %v1787 = vunpack.c.l.b16 %v1745
    %v1788 = vunpack.c.h.b16 %v1745
    %v1789 = vunpack.c.l.b16 %v1746
    %v1790 = vunpack.c.h.b16 %v1746
    %v1791 = vunpack.c.l.b16 %v1747
    %v1792 = vunpack.c.h.b16 %v1747
    %v1793 = vunpack.c.l.b16 %v1748
    %v1794 = vunpack.c.h.b16 %v1748
    %v1795 = vunpack.c.l.b16 %v1749
    %v1796 = vunpack.c.h.b16 %v1749
    %v1797 = vunpack.c.l.b16 %v1750
    %v1798 = vunpack.c.h.b16 %v1750
    %v1799 = vpack.c.b16 %v1769, %v1767
    %v1800 = vpack.c.b16 %v1770, %v1768
    %v1801 = vpack.c.b16 %v1773, %v1771
    %v1802 = vpack.c.b16 %v1774, %v1772
    %v1803 = vpack.c.b16 %v1777, %v1775
    %v1804 = vpack.c.b16 %v1778, %v1776
    %v1805 = vpack.c.b16 %v1781, %v1779
    %v1806 = vpack.c.b16 %v1782, %v1780
    %v1807 = vpack.c.b16 %v1785, %v1783
    %v1808 = vpack.c.b16 %v1786, %v1784
    %v1809 = vpack.c.b16 %v1789, %v1787
    %v1810 = vpack.c.b16 %v1790, %v1788
    %v1811 = vpack.c.b16 %v1793, %v1791
    %v1812 = vpack.c.b16 %v1794, %v1792
    %v1813 = vpack.c.b16 %v1797, %v1795
    %v1814 = vpack.c.b16 %v1798, %v1796
    %1831 = vmatprep.subr.bf16.mxu0 %v1800
    %1832 = vmatpush1.bf16.msra.mxu0 %v1799
    %1833 = vmatprep.subr.bf16.mxu0 %v1802
    %1834 = vmatpush1.bf16.msra.mxu0 %v1801
    %1835 = vmatprep.subr.bf16.mxu0 %v1804
    %1836 = vmatpush1.bf16.msra.mxu0 %v1803
    %1837 = vmatprep.subr.bf16.mxu0 %v1806
    %1838 = vmatpush1.bf16.msra.mxu0 %v1805
    %1839 = vmatprep.subr.bf16.mxu0 %v1808
    %1840 = vmatpush1.bf16.msra.mxu0 %v1807
    %1841 = vmatprep.subr.bf16.mxu0 %v1810
    %1842 = vmatpush1.bf16.msra.mxu0 %v1809
    %1843 = vmatprep.subr.bf16.mxu0 %v1812
    %1844 = vmatpush1.bf16.msra.mxu0 %v1811
    %1845 = vmatprep.subr.bf16.mxu0 %v1814
    %1846 = vmatpush1.bf16.msra.mxu0 %v1813
    %1847 = vmatprep.subr.bf16.mxu0 0
    %1848 = vmatpush1.bf16.msra.mxu0 0
    %1849 = vmatprep.subr.bf16.mxu0 0
    %1850 = vmatpush1.bf16.msra.mxu0 0
    %1851 = vmatprep.subr.bf16.mxu0 0
    %1852 = vmatpush1.bf16.msra.mxu0 0
    %1853 = vmatprep.subr.bf16.mxu0 0
    %1854 = vmatpush1.bf16.msra.mxu0 0
    %1855 = vmatprep.subr.bf16.mxu0 0
    %1856 = vmatpush1.bf16.msra.mxu0 0
    %1857 = vmatprep.subr.bf16.mxu0 0
    %1858 = vmatpush1.bf16.msra.mxu0 0
    %1859 = vmatprep.subr.bf16.mxu0 0
    %1860 = vmatpush1.bf16.msra.mxu0 0
    %1861 = vmatprep.subr.bf16.mxu0 0
    %1862 = vmatpush1.bf16.msra.mxu0 0
    %1863 = vmatprep.mubr.bf16.mxu0 0
    %1864 = vmatmul.mubr.bf16.gmra.mrb[0].mxu0 %v1544
    %v1865 = vpop.f32.mrb[0].mxu0
    %v1866 = vadd.f32 0.0, %v1865
    %v1867 = vpop.f32.mrb[0].mxu0
    %v1868 = vadd.f32 0.0, %v1867
    %v1869 = vpop.f32.mrb[0].mxu0
    %v1870 = vadd.f32 0.0, %v1869
    %v1871 = vpop.f32.mrb[0].mxu0
    %v1872 = vadd.f32 0.0, %v1871
    %1873 = vmatprep.mubr.bf16.mxu0 0
    %1874 = vmatmul.mubr.bf16.gmra.mrb[0].mxu0 %v1545
    %v1875 = vpop.f32.mrb[0].mxu0
    %v1876 = vadd.f32 0.0, %v1875
    %v1877 = vpop.f32.mrb[0].mxu0
    %v1878 = vadd.f32 0.0, %v1877
    %v1879 = vpop.f32.mrb[0].mxu0
    %v1880 = vadd.f32 0.0, %v1879
    %v1881 = vpop.f32.mrb[0].mxu0
    %v1882 = vadd.f32 0.0, %v1881
    %1883 = vmatprep.mubr.bf16.mxu0 0
    %1884 = vmatmul.mubr.bf16.gmra.mrb[0].mxu0 %v1546
    %v1885 = vpop.f32.mrb[0].mxu0
    %v1886 = vadd.f32 0.0, %v1885
    %v1887 = vpop.f32.mrb[0].mxu0
    %v1888 = vadd.f32 0.0, %v1887
    %v1889 = vpop.f32.mrb[0].mxu0
    %v1890 = vadd.f32 0.0, %v1889
    %v1891 = vpop.f32.mrb[0].mxu0
    %v1892 = vadd.f32 0.0, %v1891
    %1893 = vmatprep.mubr.bf16.mxu0 0
    %1894 = vmatmul.mubr.bf16.gmra.mrb[0].mxu0 %v1547
    %v1895 = vpop.f32.mrb[0].mxu0
    %v1896 = vadd.f32 0.0, %v1895
    %v1897 = vpop.f32.mrb[0].mxu0
    %v1898 = vadd.f32 0.0, %v1897
    %v1899 = vpop.f32.mrb[0].mxu0
    %v1900 = vadd.f32 0.0, %v1899
    %v1901 = vpop.f32.mrb[0].mxu0
    %v1902 = vadd.f32 0.0, %v1901
    %1903 = vdwg.mxu0
    %v1904 = vadd.f32 %v1519, %v1866
    %v1905 = vadd.f32 %v1520, %v1868
    %v1906 = vadd.f32 %v1521, %v1870
    %v1907 = vadd.f32 %v1522, %v1872
    %v1908 = vadd.f32 %v1523, %v1876
    %v1909 = vadd.f32 %v1524, %v1878
    %v1910 = vadd.f32 %v1525, %v1880
    %v1911 = vadd.f32 %v1526, %v1882
    %v1912 = vadd.f32 %v1527, %v1886
    %v1913 = vadd.f32 %v1528, %v1888
    %v1914 = vadd.f32 %v1529, %v1890
    %v1915 = vadd.f32 %v1530, %v1892
    %v1916 = vadd.f32 %v1531, %v1896
    %v1917 = vadd.f32 %v1532, %v1898
    %v1918 = vadd.f32 %v1533, %v1900
    %v1919 = vadd.f32 %v1534, %v1902
    %v1920 = vld [vmem:[%s2] sm:$0x3]
    %v1921 = vmax.f32 %v1718, %v1722
    %v1922 = vmax.f32 %v1719, %v1723
    %v1923 = vmax.f32 %v1720, %v1724
    %v1924 = vmax.f32 %v1721, %v1725
    %v1925 = vmax.f32 %v1904, %v1908
    %v1926 = vmax.f32 %v1905, %v1909
    %v1927 = vmax.f32 %v1906, %v1910
    %v1928 = vmax.f32 %v1907, %v1911
    %v1929 = vmax.f32 %v1921, %v1925
    %v1930 = vmax.f32 %v1922, %v1926
    %v1931 = vmax.f32 %v1923, %v1927
    %v1932 = vmax.f32 %v1924, %v1928
    %v1934 = vlaneseq
    %v1935 = vshrl.u32 %v1934, 7
    %v1936 = vsub.s32 0, %v1935
    %v1937 = vrot.slane %v1920, %v1936
    %v1938 = vlaneseq
    %v1939 = vshrl.u32 %v1938, 7
    %v1940 = vsub.s32 1, %v1939
    %v1941 = vrot.slane %v1920, %v1940
    %v1944 = vadd.f32 %v1929, %v1937
    %v1945 = vadd.f32 %v1930, %v1941
    %v1946 = vadd.f32 %v1931, %v1937
    %v1947 = vadd.f32 %v1932, %v1941
    %v1948 = vmax.f32 %v1944, 0.0
    %v1949 = vmax.f32 %v1945, 0.0
    %v1950 = vmax.f32 %v1946, 0.0
    %v1951 = vmax.f32 %v1947, 0.0
    %v1956 = vrot.slane %v1948, 7
    %v1957 = vrot.slane %v1949, 7
    %v1958 = vrot.slane %v1950, 7
    %v1959 = vrot.slane %v1951, 7
    %1964 = vst [vmem:[#allocation2] sm:$0xfe] %v1956
    %1965 = vst [vmem:[#allocation2 + $0x8] sm:$0xfe] %v1957
    %1966 = vst [vmem:[#allocation2 + $0x10] sm:$0x1] %v1956
    %1967 = vst [vmem:[#allocation2 + $0x18] sm:$0x1] %v1957
    %1968 = vst [vmem:[#allocation2 + $0x20] sm:$0xfe] %v1958
    %1969 = vst [vmem:[#allocation2 + $0x28] sm:$0xfe] %v1959
    %1970 = vst [vmem:[#allocation2 + $0x30] sm:$0x1] %v1958
    %1971 = vst [vmem:[#allocation2 + $0x38] sm:$0x1] %v1959
    %v1972 = vmax.f32 %v1726, %v1730
    %v1973 = vmax.f32 %v1727, %v1731
    %v1974 = vmax.f32 %v1728, %v1732
    %v1975 = vmax.f32 %v1729, %v1733
    %v1976 = vmax.f32 %v1912, %v1916
    %v1977 = vmax.f32 %v1913, %v1917
    %v1978 = vmax.f32 %v1914, %v1918
    %v1979 = vmax.f32 %v1915, %v1919
    %v1980 = vmax.f32 %v1972, %v1976
    %v1981 = vmax.f32 %v1973, %v1977
    %v1982 = vmax.f32 %v1974, %v1978
    %v1983 = vmax.f32 %v1975, %v1979
    %v1984 = vadd.f32 %v1980, %v1937
    %v1985 = vadd.f32 %v1981, %v1941
    %v1986 = vadd.f32 %v1982, %v1937
    %v1987 = vadd.f32 %v1983, %v1941
    %v1988 = vmax.f32 %v1984, 0.0
    %v1989 = vmax.f32 %v1985, 0.0
    %v1990 = vmax.f32 %v1986, 0.0
    %v1991 = vmax.f32 %v1987, 0.0
    %v1996 = vrot.slane %v1988, 7
    %v1997 = vrot.slane %v1989, 7
    %v1998 = vrot.slane %v1990, 7
    %v1999 = vrot.slane %v1991, 7
    %2004 = vst [vmem:[%s49] sm:$0xfe] %v1996
    %2005 = vst [vmem:[%s49 + $0x8] sm:$0xfe] %v1997
    %2006 = vst [vmem:[%s49 + $0x10] sm:$0x1] %v1996
    %2007 = vst [vmem:[%s49 + $0x18] sm:$0x1] %v1997
    %2008 = vst [vmem:[%s49 + $0x20] sm:$0xfe] %v1998
    %2009 = vst [vmem:[%s49 + $0x28] sm:$0xfe] %v1999
    %2010 = vst [vmem:[%s49 + $0x30] sm:$0x1] %v1998
    %2011 = vst [vmem:[%s49 + $0x38] sm:$0x1] %v1999
    %v2012 = vld [vmem:[#allocation2] sm:$0xff]
    %v2013 = vld [vmem:[#allocation2 + $0x8] sm:$0xff]
    %v2014 = vld [vmem:[#allocation2 + $0x20] sm:$0xff]
    %v2015 = vld [vmem:[#allocation2 + $0x28] sm:$0xff]
    %v2016 = vld [vmem:[%s49] sm:$0xff]
    %v2017 = vld [vmem:[%s49 + $0x8] sm:$0xff]
    %v2018 = vld [vmem:[%s49 + $0x20] sm:$0xff]
    %v2019 = vld [vmem:[%s49 + $0x28] sm:$0xff]
    %v2020 = vld [vmem:[#allocation2] sm:$0xfe]
    %v2021 = vld [vmem:[#allocation2 + $0x8] sm:$0xfe]
    %v2022 = vld [vmem:[#allocation2 + $0x10] sm:$0x1]
    %v2023 = vld [vmem:[#allocation2 + $0x18] sm:$0x1]
    %v2024 = vld [vmem:[#allocation2 + $0x20] sm:$0xfe]
    %v2025 = vld [vmem:[#allocation2 + $0x28] sm:$0xfe]
    %v2026 = vld [vmem:[#allocation2 + $0x30] sm:$0x1]
    %v2027 = vld [vmem:[#allocation2 + $0x38] sm:$0x1]
    %vm2036 = vcmask 1046528
    %v2037 = vrot.slane %v2020, 1
    %v2038 = vrot.slane %v2022, 1
    %v2039 = vsel %vm2036, %v2037, %v2038
    %v2040 = vrot.slane %v2021, 1
    %v2041 = vrot.slane %v2023, 1
    %v2042 = vsel %vm2036, %v2040, %v2041
    %v2043 = vrot.slane %v2024, 1
    %v2044 = vrot.slane %v2026, 1
    %v2045 = vsel %vm2036, %v2043, %v2044
    %v2046 = vrot.slane %v2025, 1
    %v2047 = vrot.slane %v2027, 1
    %v2048 = vsel %vm2036, %v2046, %v2047
    %v2053 = vld [vmem:[%s49] sm:$0xfe]
    %v2054 = vld [vmem:[%s49 + $0x8] sm:$0xfe]
    %v2055 = vld [vmem:[%s49 + $0x10] sm:$0x1]
    %v2056 = vld [vmem:[%s49 + $0x18] sm:$0x1]
    %v2057 = vld [vmem:[%s49 + $0x20] sm:$0xfe]
    %v2058 = vld [vmem:[%s49 + $0x28] sm:$0xfe]
    %v2059 = vld [vmem:[%s49 + $0x30] sm:$0x1]
    %v2060 = vld [vmem:[%s49 + $0x38] sm:$0x1]
    %v2069 = vrot.slane %v2053, 1
    %v2070 = vrot.slane %v2055, 1
    %v2071 = vsel %vm2036, %v2069, %v2070
    %v2072 = vrot.slane %v2054, 1
    %v2073 = vrot.slane %v2056, 1
    %v2074 = vsel %vm2036, %v2072, %v2073
    %v2075 = vrot.slane %v2057, 1
    %v2076 = vrot.slane %v2059, 1
    %v2077 = vsel %vm2036, %v2075, %v2076
    %v2078 = vrot.slane %v2058, 1
    %v2079 = vrot.slane %v2060, 1
    %v2080 = vsel %vm2036, %v2078, %v2079
    %v2085 = vld [vmem:[#allocation2] sm:$0xfc]
    %v2086 = vld [vmem:[#allocation2 + $0x8] sm:$0xfc]
    %v2087 = vld [vmem:[#allocation2 + $0x10] sm:$0x3]
    %v2088 = vld [vmem:[#allocation2 + $0x18] sm:$0x3]
    %v2089 = vld [vmem:[#allocation2 + $0x20] sm:$0xfc]
    %v2090 = vld [vmem:[#allocation2 + $0x28] sm:$0xfc]
    %v2091 = vld [vmem:[#allocation2 + $0x30] sm:$0x3]
    %v2092 = vld [vmem:[#allocation2 + $0x38] sm:$0x3]
    %vm2101 = vcmask 1045504
    %v2102 = vrot.slane %v2085, 2
    %v2103 = vrot.slane %v2087, 2
    %v2104 = vsel %vm2101, %v2102, %v2103
    %v2105 = vrot.slane %v2086, 2
    %v2106 = vrot.slane %v2088, 2
    %v2107 = vsel %vm2101, %v2105, %v2106
    %v2108 = vrot.slane %v2089, 2
    %v2109 = vrot.slane %v2091, 2
    %v2110 = vsel %vm2101, %v2108, %v2109
    %v2111 = vrot.slane %v2090, 2
    %v2112 = vrot.slane %v2092, 2
    %v2113 = vsel %vm2101, %v2111, %v2112
    %v2118 = vld [vmem:[%s49] sm:$0xfc]
    %v2119 = vld [vmem:[%s49 + $0x8] sm:$0xfc]
    %v2120 = vld [vmem:[%s49 + $0x10] sm:$0x3]
    %v2121 = vld [vmem:[%s49 + $0x18] sm:$0x3]
    %v2122 = vld [vmem:[%s49 + $0x20] sm:$0xfc]
    %v2123 = vld [vmem:[%s49 + $0x28] sm:$0xfc]
    %v2124 = vld [vmem:[%s49 + $0x30] sm:$0x3]
    %v2125 = vld [vmem:[%s49 + $0x38] sm:$0x3]
    %v2134 = vrot.slane %v2118, 2
    %v2135 = vrot.slane %v2120, 2
    %v2136 = vsel %vm2101, %v2134, %v2135
    %v2137 = vrot.slane %v2119, 2
    %v2138 = vrot.slane %v2121, 2
    %v2139 = vsel %vm2101, %v2137, %v2138
    %v2140 = vrot.slane %v2122, 2
    %v2141 = vrot.slane %v2124, 2
    %v2142 = vsel %vm2101, %v2140, %v2141
    %v2143 = vrot.slane %v2123, 2
    %v2144 = vrot.slane %v2125, 2
    %v2145 = vsel %vm2101, %v2143, %v2144
    %v2150 = vpack.c.bf16 %v2014, %v2012
    %v2151 = vpack.c.bf16 %v2015, %v2013
    %v2152 = vpack.c.bf16 %v2018, %v2016
    %v2153 = vpack.c.bf16 %v2019, %v2017
    %v2154 = vld [vmem:[%s3] sm:$0xff]
    %v2155 = vld [vmem:[%s3 + $0x8] sm:$0xff]
    %v2156 = vld [vmem:[%s3 + $0x10] sm:$0xff]
    %v2157 = vld [vmem:[%s3 + $0x18] sm:$0xff]
    %v2158 = vld [vmem:[%s3 + $0x20] sm:$0xff]
    %v2159 = vld [vmem:[%s3 + $0x28] sm:$0xff]
    %v2160 = vld [vmem:[%s3 + $0x30] sm:$0xff]
    %v2161 = vld [vmem:[%s3 + $0x38] sm:$0xff]
    %v2162 = vld [vmem:[%s3 + $0x40] sm:$0xff]
    %v2163 = vld [vmem:[%s3 + $0x48] sm:$0xff]
    %v2164 = vld [vmem:[%s3 + $0x50] sm:$0xff]
    %v2165 = vld [vmem:[%s3 + $0x58] sm:$0xff]
    %v2166 = vld [vmem:[%s3 + $0x60] sm:$0xff]
    %v2167 = vld [vmem:[%s3 + $0x68] sm:$0xff]
    %v2168 = vld [vmem:[%s3 + $0x70] sm:$0xff]
    %v2169 = vld [vmem:[%s3 + $0x78] sm:$0xff]
    %v2170 = vld [vmem:[%s3 + $0x80] sm:$0xff]
    %v2171 = vld [vmem:[%s3 + $0x88] sm:$0xff]
    %v2172 = vld [vmem:[%s3 + $0x90] sm:$0xff]
    %v2173 = vld [vmem:[%s3 + $0x98] sm:$0xff]
    %v2174 = vld [vmem:[%s3 + $0xa0] sm:$0xff]
    %v2175 = vld [vmem:[%s3 + $0xa8] sm:$0xff]
    %v2176 = vld [vmem:[%s3 + $0xb0] sm:$0xff]
    %v2177 = vld [vmem:[%s3 + $0xb8] sm:$0xff]
    %v2178 = vld [vmem:[%s3 + $0xc0] sm:$0xff]
    %v2179 = vld [vmem:[%s3 + $0xc8] sm:$0xff]
    %v2180 = vld [vmem:[%s3 + $0xd0] sm:$0xff]
    %v2181 = vld [vmem:[%s3 + $0xd8] sm:$0xff]
    %v2182 = vld [vmem:[%s3 + $0xe0] sm:$0xff]
    %v2183 = vld [vmem:[%s3 + $0xe8] sm:$0xff]
    %v2184 = vld [vmem:[%s3 + $0xf0] sm:$0xff]
    %v2185 = vld [vmem:[%s3 + $0xf8] sm:$0xff]
    %s2186 = scalar_lea.vmem %s3, 256
    %v2187 = vld [vmem:[%s2186] sm:$0xff]
    %v2188 = vld [vmem:[%s2186 + $0x8] sm:$0xff]
    %v2189 = vld [vmem:[%s2186 + $0x10] sm:$0xff]
    %v2190 = vld [vmem:[%s2186 + $0x18] sm:$0xff]
    %v2191 = vld [vmem:[%s2186 + $0x20] sm:$0xff]
    %v2192 = vld [vmem:[%s2186 + $0x28] sm:$0xff]
    %v2193 = vld [vmem:[%s2186 + $0x30] sm:$0xff]
    %v2194 = vld [vmem:[%s2186 + $0x38] sm:$0xff]
    %v2195 = vld [vmem:[%s2186 + $0x40] sm:$0xff]
    %v2196 = vld [vmem:[%s2186 + $0x48] sm:$0xff]
    %v2197 = vld [vmem:[%s2186 + $0x50] sm:$0xff]
    %v2198 = vld [vmem:[%s2186 + $0x58] sm:$0xff]
    %v2199 = vld [vmem:[%s2186 + $0x60] sm:$0xff]
    %v2200 = vld [vmem:[%s2186 + $0x68] sm:$0xff]
    %v2201 = vld [vmem:[%s2186 + $0x70] sm:$0xff]
    %v2202 = vld [vmem:[%s2186 + $0x78] sm:$0xff]
    %v2203 = vld [vmem:[%s2186 + $0x80] sm:$0xff]
    %v2204 = vld [vmem:[%s2186 + $0x88] sm:$0xff]
    %v2205 = vld [vmem:[%s2186 + $0x90] sm:$0xff]
    %v2206 = vld [vmem:[%s2186 + $0x98] sm:$0xff]
    %v2207 = vld [vmem:[%s2186 + $0xa0] sm:$0xff]
    %v2208 = vld [vmem:[%s2186 + $0xa8] sm:$0xff]
    %v2209 = vld [vmem:[%s2186 + $0xb0] sm:$0xff]
    %v2210 = vld [vmem:[%s2186 + $0xb8] sm:$0xff]
    %v2211 = vld [vmem:[%s2186 + $0xc0] sm:$0xff]
    %v2212 = vld [vmem:[%s2186 + $0xc8] sm:$0xff]
    %v2213 = vld [vmem:[%s2186 + $0xd0] sm:$0xff]
    %v2214 = vld [vmem:[%s2186 + $0xd8] sm:$0xff]
    %v2215 = vld [vmem:[%s2186 + $0xe0] sm:$0xff]
    %v2216 = vld [vmem:[%s2186 + $0xe8] sm:$0xff]
    %v2217 = vld [vmem:[%s2186 + $0xf0] sm:$0xff]
    %v2218 = vld [vmem:[%s2186 + $0xf8] sm:$0xff]
    %v2219 = vpack.c.bf16 %v2045, %v2039
    %v2220 = vpack.c.bf16 %v2048, %v2042
    %s2221 = scalar_lea.vmem %s3, 512
    %v2222 = vld [vmem:[%s2221] sm:$0xff]
    %v2223 = vld [vmem:[%s2221 + $0x8] sm:$0xff]
    %v2224 = vld [vmem:[%s2221 + $0x10] sm:$0xff]
    %v2225 = vld [vmem:[%s2221 + $0x18] sm:$0xff]
    %v2226 = vld [vmem:[%s2221 + $0x20] sm:$0xff]
    %v2227 = vld [vmem:[%s2221 + $0x28] sm:$0xff]
    %v2228 = vld [vmem:[%s2221 + $0x30] sm:$0xff]
    %v2229 = vld [vmem:[%s2221 + $0x38] sm:$0xff]
    %v2230 = vld [vmem:[%s2221 + $0x40] sm:$0xff]
    %v2231 = vld [vmem:[%s2221 + $0x48] sm:$0xff]
    %v2232 = vld [vmem:[%s2221 + $0x50] sm:$0xff]
    %v2233 = vld [vmem:[%s2221 + $0x58] sm:$0xff]
    %v2234 = vld [vmem:[%s2221 + $0x60] sm:$0xff]
    %v2235 = vld [vmem:[%s2221 + $0x68] sm:$0xff]
    %v2236 = vld [vmem:[%s2221 + $0x70] sm:$0xff]
    %v2237 = vld [vmem:[%s2221 + $0x78] sm:$0xff]
    %v2238 = vld [vmem:[%s2221 + $0x80] sm:$0xff]
    %v2239 = vld [vmem:[%s2221 + $0x88] sm:$0xff]
    %v2240 = vld [vmem:[%s2221 + $0x90] sm:$0xff]
    %v2241 = vld [vmem:[%s2221 + $0x98] sm:$0xff]
    %v2242 = vld [vmem:[%s2221 + $0xa0] sm:$0xff]
    %v2243 = vld [vmem:[%s2221 + $0xa8] sm:$0xff]
    %v2244 = vld [vmem:[%s2221 + $0xb0] sm:$0xff]
    %v2245 = vld [vmem:[%s2221 + $0xb8] sm:$0xff]
    %v2246 = vld [vmem:[%s2221 + $0xc0] sm:$0xff]
    %v2247 = vld [vmem:[%s2221 + $0xc8] sm:$0xff]
    %v2248 = vld [vmem:[%s2221 + $0xd0] sm:$0xff]
    %v2249 = vld [vmem:[%s2221 + $0xd8] sm:$0xff]
    %v2250 = vld [vmem:[%s2221 + $0xe0] sm:$0xff]
    %v2251 = vld [vmem:[%s2221 + $0xe8] sm:$0xff]
    %v2252 = vld [vmem:[%s2221 + $0xf0] sm:$0xff]
    %v2253 = vld [vmem:[%s2221 + $0xf8] sm:$0xff]
    %v2286 = vunpack.c.l.b16 %v2222
    %v2287 = vunpack.c.h.b16 %v2222
    %v2288 = vunpack.c.l.b16 %v2223
    %v2289 = vunpack.c.h.b16 %v2223
    %v2290 = vunpack.c.l.b16 %v2224
    %v2291 = vunpack.c.h.b16 %v2224
    %v2292 = vunpack.c.l.b16 %v2225
    %v2293 = vunpack.c.h.b16 %v2225
    %v2294 = vunpack.c.l.b16 %v2226
    %v2295 = vunpack.c.h.b16 %v2226
    %v2296 = vunpack.c.l.b16 %v2227
    %v2297 = vunpack.c.h.b16 %v2227
    %v2298 = vunpack.c.l.b16 %v2228
    %v2299 = vunpack.c.h.b16 %v2228
    %v2300 = vunpack.c.l.b16 %v2229
    %v2301 = vunpack.c.h.b16 %v2229
    %v2302 = vunpack.c.l.b16 %v2230
    %v2303 = vunpack.c.h.b16 %v2230
    %v2304 = vunpack.c.l.b16 %v2231
    %v2305 = vunpack.c.h.b16 %v2231
    %v2306 = vunpack.c.l.b16 %v2232
    %v2307 = vunpack.c.h.b16 %v2232
    %v2308 = vunpack.c.l.b16 %v2233
    %v2309 = vunpack.c.h.b16 %v2233
    %v2310 = vunpack.c.l.b16 %v2234
    %v2311 = vunpack.c.h.b16 %v2234
    %v2312 = vunpack.c.l.b16 %v2235
    %v2313 = vunpack.c.h.b16 %v2235
    %v2314 = vunpack.c.l.b16 %v2236
    %v2315 = vunpack.c.h.b16 %v2236
    %v2316 = vunpack.c.l.b16 %v2237
    %v2317 = vunpack.c.h.b16 %v2237
    %v2318 = vunpack.c.l.b16 %v2238
    %v2319 = vunpack.c.h.b16 %v2238
    %v2320 = vunpack.c.l.b16 %v2239
    %v2321 = vunpack.c.h.b16 %v2239
    %v2322 = vunpack.c.l.b16 %v2240
    %v2323 = vunpack.c.h.b16 %v2240
    %v2324 = vunpack.c.l.b16 %v2241
    %v2325 = vunpack.c.h.b16 %v2241
    %v2326 = vunpack.c.l.b16 %v2242
    %v2327 = vunpack.c.h.b16 %v2242
    %v2328 = vunpack.c.l.b16 %v2243
    %v2329 = vunpack.c.h.b16 %v2243
    %v2330 = vunpack.c.l.b16 %v2244
    %v2331 = vunpack.c.h.b16 %v2244
    %v2332 = vunpack.c.l.b16 %v2245
    %v2333 = vunpack.c.h.b16 %v2245
    %v2334 = vunpack.c.l.b16 %v2246
    %v2335 = vunpack.c.h.b16 %v2246
    %v2336 = vunpack.c.l.b16 %v2247
    %v2337 = vunpack.c.h.b16 %v2247
    %v2338 = vunpack.c.l.b16 %v2248
    %v2339 = vunpack.c.h.b16 %v2248
    %v2340 = vunpack.c.l.b16 %v2249
    %v2341 = vunpack.c.h.b16 %v2249
    %v2342 = vunpack.c.l.b16 %v2250
    %v2343 = vunpack.c.h.b16 %v2250
    %v2344 = vunpack.c.l.b16 %v2251
    %v2345 = vunpack.c.h.b16 %v2251
    %v2346 = vunpack.c.l.b16 %v2252
    %v2347 = vunpack.c.h.b16 %v2252
    %v2348 = vunpack.c.l.b16 %v2253
    %v2349 = vunpack.c.h.b16 %v2253
    %v2350 = vpack.c.b16 %v2288, %v2286
    %v2351 = vpack.c.b16 %v2289, %v2287
    %v2352 = vpack.c.b16 %v2292, %v2290
    %v2353 = vpack.c.b16 %v2293, %v2291
    %v2354 = vpack.c.b16 %v2296, %v2294
    %v2355 = vpack.c.b16 %v2297, %v2295
    %v2356 = vpack.c.b16 %v2300, %v2298
    %v2357 = vpack.c.b16 %v2301, %v2299
    %v2358 = vpack.c.b16 %v2304, %v2302
    %v2359 = vpack.c.b16 %v2305, %v2303
    %v2360 = vpack.c.b16 %v2308, %v2306
    %v2361 = vpack.c.b16 %v2309, %v2307
    %v2362 = vpack.c.b16 %v2312, %v2310
    %v2363 = vpack.c.b16 %v2313, %v2311
    %v2364 = vpack.c.b16 %v2316, %v2314
    %v2365 = vpack.c.b16 %v2317, %v2315
    %v2366 = vpack.c.b16 %v2320, %v2318
    %v2367 = vpack.c.b16 %v2321, %v2319
    %v2368 = vpack.c.b16 %v2324, %v2322
    %v2369 = vpack.c.b16 %v2325, %v2323
    %v2370 = vpack.c.b16 %v2328, %v2326
    %v2371 = vpack.c.b16 %v2329, %v2327
    %v2372 = vpack.c.b16 %v2332, %v2330
    %v2373 = vpack.c.b16 %v2333, %v2331
    %v2374 = vpack.c.b16 %v2336, %v2334
    %v2375 = vpack.c.b16 %v2337, %v2335
    %v2376 = vpack.c.b16 %v2340, %v2338
    %v2377 = vpack.c.b16 %v2341, %v2339
    %v2378 = vpack.c.b16 %v2344, %v2342
    %v2379 = vpack.c.b16 %v2345, %v2343
    %v2380 = vpack.c.b16 %v2348, %v2346
    %v2381 = vpack.c.b16 %v2349, %v2347
    %2414 = vmatprep.subr.bf16.mxu0 %v2351
    %2415 = vmatpush1.bf16.msra.mxu0 %v2350
    %2416 = vmatprep.subr.bf16.mxu0 %v2353
    %2417 = vmatpush1.bf16.msra.mxu0 %v2352
    %2418 = vmatprep.subr.bf16.mxu0 %v2355
    %2419 = vmatpush1.bf16.msra.mxu0 %v2354
    %2420 = vmatprep.subr.bf16.mxu0 %v2357
    %2421 = vmatpush1.bf16.msra.mxu0 %v2356
    %2422 = vmatprep.subr.bf16.mxu0 %v2359
    %2423 = vmatpush1.bf16.msra.mxu0 %v2358
    %2424 = vmatprep.subr.bf16.mxu0 %v2361
    %2425 = vmatpush1.bf16.msra.mxu0 %v2360
    %2426 = vmatprep.subr.bf16.mxu0 %v2363
    %2427 = vmatpush1.bf16.msra.mxu0 %v2362
    %2428 = vmatprep.subr.bf16.mxu0 %v2365
    %2429 = vmatpush1.bf16.msra.mxu0 %v2364
    %2430 = vmatprep.subr.bf16.mxu0 %v2367
    %2431 = vmatpush1.bf16.msra.mxu0 %v2366
    %2432 = vmatprep.subr.bf16.mxu0 %v2369
    %2433 = vmatpush1.bf16.msra.mxu0 %v2368
    %2434 = vmatprep.subr.bf16.mxu0 %v2371
    %2435 = vmatpush1.bf16.msra.mxu0 %v2370
    %2436 = vmatprep.subr.bf16.mxu0 %v2373
    %2437 = vmatpush1.bf16.msra.mxu0 %v2372
    %2438 = vmatprep.subr.bf16.mxu0 %v2375
    %2439 = vmatpush1.bf16.msra.mxu0 %v2374
    %2440 = vmatprep.subr.bf16.mxu0 %v2377
    %2441 = vmatpush1.bf16.msra.mxu0 %v2376
    %2442 = vmatprep.subr.bf16.mxu0 %v2379
    %2443 = vmatpush1.bf16.msra.mxu0 %v2378
    %2444 = vmatprep.subr.bf16.mxu0 %v2381
    %2445 = vmatpush1.bf16.msra.mxu0 %v2380
    %2446 = vmatprep.mubr.bf16.mxu0 %v2153
    %2447 = vmatmul.mubr.bf16.gmra.mrb[0].mxu0 %v2152
    %v2448 = vpop.f32.mrb[0].mxu0
    %v2449 = vadd.f32 0.0, %v2448
    %v2450 = vpop.f32.mrb[0].mxu0
    %v2451 = vadd.f32 0.0, %v2450
    %v2452 = vpop.f32.mrb[0].mxu0
    %v2453 = vadd.f32 0.0, %v2452
    %v2454 = vpop.f32.mrb[0].mxu0
    %v2455 = vadd.f32 0.0, %v2454
    %2456 = vmatprep.mubr.bf16.mxu0 %v2220
    %2457 = vmatmul.mubr.bf16.gmra.mrb[0].mxu0 %v2219
    %v2458 = vpop.f32.mrb[0].mxu0
    %v2459 = vadd.f32 0.0, %v2458
    %v2460 = vpop.f32.mrb[0].mxu0
    %v2461 = vadd.f32 0.0, %v2460
    %v2462 = vpop.f32.mrb[0].mxu0
    %v2463 = vadd.f32 0.0, %v2462
    %v2464 = vpop.f32.mrb[0].mxu0
    %v2465 = vadd.f32 0.0, %v2464
    %2466 = vdwg.mxu0
    %v2499 = vunpack.c.l.b16 %v2154
    %v2500 = vunpack.c.h.b16 %v2154
    %v2501 = vunpack.c.l.b16 %v2155
    %v2502 = vunpack.c.h.b16 %v2155
    %v2503 = vunpack.c.l.b16 %v2156
    %v2504 = vunpack.c.h.b16 %v2156
    %v2505 = vunpack.c.l.b16 %v2157
    %v2506 = vunpack.c.h.b16 %v2157
    %v2507 = vunpack.c.l.b16 %v2158
    %v2508 = vunpack.c.h.b16 %v2158
    %v2509 = vunpack.c.l.b16 %v2159
    %v2510 = vunpack.c.h.b16 %v2159
    %v2511 = vunpack.c.l.b16 %v2160
    %v2512 = vunpack.c.h.b16 %v2160
    %v2513 = vunpack.c.l.b16 %v2161
    %v2514 = vunpack.c.h.b16 %v2161
    %v2515 = vunpack.c.l.b16 %v2162
    %v2516 = vunpack.c.h.b16 %v2162
    %v2517 = vunpack.c.l.b16 %v2163
    %v2518 = vunpack.c.h.b16 %v2163
    %v2519 = vunpack.c.l.b16 %v2164
    %v2520 = vunpack.c.h.b16 %v2164
    %v2521 = vunpack.c.l.b16 %v2165
    %v2522 = vunpack.c.h.b16 %v2165
    %v2523 = vunpack.c.l.b16 %v2166
    %v2524 = vunpack.c.h.b16 %v2166
    %v2525 = vunpack.c.l.b16 %v2167
    %v2526 = vunpack.c.h.b16 %v2167
    %v2527 = vunpack.c.l.b16 %v2168
    %v2528 = vunpack.c.h.b16 %v2168
    %v2529 = vunpack.c.l.b16 %v2169
    %v2530 = vunpack.c.h.b16 %v2169
    %v2531 = vunpack.c.l.b16 %v2170
    %v2532 = vunpack.c.h.b16 %v2170
    %v2533 = vunpack.c.l.b16 %v2171
    %v2534 = vunpack.c.h.b16 %v2171
    %v2535 = vunpack.c.l.b16 %v2172
    %v2536 = vunpack.c.h.b16 %v2172
    %v2537 = vunpack.c.l.b16 %v2173
    %v2538 = vunpack.c.h.b16 %v2173
    %v2539 = vunpack.c.l.b16 %v2174
    %v2540 = vunpack.c.h.b16 %v2174
    %v2541 = vunpack.c.l.b16 %v2175
    %v2542 = vunpack.c.h.b16 %v2175
    %v2543 = vunpack.c.l.b16 %v2176
    %v2544 = vunpack.c.h.b16 %v2176
    %v2545 = vunpack.c.l.b16 %v2177
    %v2546 = vunpack.c.h.b16 %v2177
    %v2547 = vunpack.c.l.b16 %v2178
    %v2548 = vunpack.c.h.b16 %v2178
    %v2549 = vunpack.c.l.b16 %v2179
    %v2550 = vunpack.c.h.b16 %v2179
    %v2551 = vunpack.c.l.b16 %v2180
    %v2552 = vunpack.c.h.b16 %v2180
    %v2553 = vunpack.c.l.b16 %v2181
    %v2554 = vunpack.c.h.b16 %v2181
    %v2555 = vunpack.c.l.b16 %v2182
    %v2556 = vunpack.c.h.b16 %v2182
    %v2557 = vunpack.c.l.b16 %v2183
    %v2558 = vunpack.c.h.b16 %v2183
    %v2559 = vunpack.c.l.b16 %v2184
    %v2560 = vunpack.c.h.b16 %v2184
    %v2561 = vunpack.c.l.b16 %v2185
    %v2562 = vunpack.c.h.b16 %v2185
    %v2563 = vpack.c.b16 %v2501, %v2499
    %v2564 = vpack.c.b16 %v2502, %v2500
    %v2565 = vpack.c.b16 %v2505, %v2503
    %v2566 = vpack.c.b16 %v2506, %v2504
    %v2567 = vpack.c.b16 %v2509, %v2507
    %v2568 = vpack.c.b16 %v2510, %v2508
    %v2569 = vpack.c.b16 %v2513, %v2511
    %v2570 = vpack.c.b16 %v2514, %v2512
    %v2571 = vpack.c.b16 %v2517, %v2515
    %v2572 = vpack.c.b16 %v2518, %v2516
    %v2573 = vpack.c.b16 %v2521, %v2519
    %v2574 = vpack.c.b16 %v2522, %v2520
    %v2575 = vpack.c.b16 %v2525, %v2523
    %v2576 = vpack.c.b16 %v2526, %v2524
    %v2577 = vpack.c.b16 %v2529, %v2527
    %v2578 = vpack.c.b16 %v2530, %v2528
    %v2579 = vpack.c.b16 %v2533, %v2531
    %v2580 = vpack.c.b16 %v2534, %v2532
    %v2581 = vpack.c.b16 %v2537, %v2535
    %v2582 = vpack.c.b16 %v2538, %v2536
    %v2583 = vpack.c.b16 %v2541, %v2539
    %v2584 = vpack.c.b16 %v2542, %v2540
    %v2585 = vpack.c.b16 %v2545, %v2543
    %v2586 = vpack.c.b16 %v2546, %v2544
    %v2587 = vpack.c.b16 %v2549, %v2547
    %v2588 = vpack.c.b16 %v2550, %v2548
    %v2589 = vpack.c.b16 %v2553, %v2551
    %v2590 = vpack.c.b16 %v2554, %v2552
    %v2591 = vpack.c.b16 %v2557, %v2555
    %v2592 = vpack.c.b16 %v2558, %v2556
    %v2593 = vpack.c.b16 %v2561, %v2559
    %v2594 = vpack.c.b16 %v2562, %v2560
    %2627 = vmatprep.subr.bf16.mxu0 %v2564
    %2628 = vmatpush1.bf16.msra.mxu0 %v2563
    %2629 = vmatprep.subr.bf16.mxu0 %v2566
    %2630 = vmatpush1.bf16.msra.mxu0 %v2565
    %2631 = vmatprep.subr.bf16.mxu0 %v2568
    %2632 = vmatpush1.bf16.msra.mxu0 %v2567
    %2633 = vmatprep.subr.bf16.mxu0 %v2570
    %2634 = vmatpush1.bf16.msra.mxu0 %v2569
    %2635 = vmatprep.subr.bf16.mxu0 %v2572
    %2636 = vmatpush1.bf16.msra.mxu0 %v2571
    %2637 = vmatprep.subr.bf16.mxu0 %v2574
    %2638 = vmatpush1.bf16.msra.mxu0 %v2573
    %2639 = vmatprep.subr.bf16.mxu0 %v2576
    %2640 = vmatpush1.bf16.msra.mxu0 %v2575
    %2641 = vmatprep.subr.bf16.mxu0 %v2578
    %2642 = vmatpush1.bf16.msra.mxu0 %v2577
    %2643 = vmatprep.subr.bf16.mxu0 %v2580
    %2644 = vmatpush1.bf16.msra.mxu0 %v2579
    %2645 = vmatprep.subr.bf16.mxu0 %v2582
    %2646 = vmatpush1.bf16.msra.mxu0 %v2581
    %2647 = vmatprep.subr.bf16.mxu0 %v2584
    %2648 = vmatpush1.bf16.msra.mxu0 %v2583
    %2649 = vmatprep.subr.bf16.mxu0 %v2586
    %2650 = vmatpush1.bf16.msra.mxu0 %v2585
    %2651 = vmatprep.subr.bf16.mxu0 %v2588
    %2652 = vmatpush1.bf16.msra.mxu0 %v2587
    %2653 = vmatprep.subr.bf16.mxu0 %v2590
    %2654 = vmatpush1.bf16.msra.mxu0 %v2589
    %2655 = vmatprep.subr.bf16.mxu0 %v2592
    %2656 = vmatpush1.bf16.msra.mxu0 %v2591
    %2657 = vmatprep.subr.bf16.mxu0 %v2594
    %2658 = vmatpush1.bf16.msra.mxu0 %v2593
    %2659 = vmatprep.mubr.bf16.mxu0 %v2151
    %2660 = vmatmul.mubr.bf16.gmra.mrb[0].mxu0 %v2150
    %v2661 = vpop.f32.mrb[0].mxu0
    %v2662 = vadd.f32 %v2449, %v2661
    %v2663 = vpop.f32.mrb[0].mxu0
    %v2664 = vadd.f32 %v2451, %v2663
    %v2665 = vpop.f32.mrb[0].mxu0
    %v2666 = vadd.f32 %v2453, %v2665
    %v2667 = vpop.f32.mrb[0].mxu0
    %v2668 = vadd.f32 %v2455, %v2667
    %2669 = vmatprep.mubr.bf16.mxu0 %v2153
    %2670 = vmatmul.mubr.bf16.gmra.mrb[0].mxu0 %v2152
    %v2671 = vpop.f32.mrb[0].mxu0
    %v2672 = vadd.f32 %v2459, %v2671
    %v2673 = vpop.f32.mrb[0].mxu0
    %v2674 = vadd.f32 %v2461, %v2673
    %v2675 = vpop.f32.mrb[0].mxu0
    %v2676 = vadd.f32 %v2463, %v2675
    %v2677 = vpop.f32.mrb[0].mxu0
    %v2678 = vadd.f32 %v2465, %v2677
    %2679 = vdwg.mxu0
    %s2680 = scalar_lea.vmem %s3, 768
    %v2681 = vld [vmem:[%s2680] sm:$0xff]
    %v2682 = vld [vmem:[%s2680 + $0x8] sm:$0xff]
    %v2683 = vld [vmem:[%s2680 + $0x10] sm:$0xff]
    %v2684 = vld [vmem:[%s2680 + $0x18] sm:$0xff]
    %v2685 = vld [vmem:[%s2680 + $0x20] sm:$0xff]
    %v2686 = vld [vmem:[%s2680 + $0x28] sm:$0xff]
    %v2687 = vld [vmem:[%s2680 + $0x30] sm:$0xff]
    %v2688 = vld [vmem:[%s2680 + $0x38] sm:$0xff]
    %v2689 = vld [vmem:[%s2680 + $0x40] sm:$0xff]
    %v2690 = vld [vmem:[%s2680 + $0x48] sm:$0xff]
    %v2691 = vld [vmem:[%s2680 + $0x50] sm:$0xff]
    %v2692 = vld [vmem:[%s2680 + $0x58] sm:$0xff]
    %v2693 = vld [vmem:[%s2680 + $0x60] sm:$0xff]
    %v2694 = vld [vmem:[%s2680 + $0x68] sm:$0xff]
    %v2695 = vld [vmem:[%s2680 + $0x70] sm:$0xff]
    %v2696 = vld [vmem:[%s2680 + $0x78] sm:$0xff]
    %v2697 = vld [vmem:[%s2680 + $0x80] sm:$0xff]
    %v2698 = vld [vmem:[%s2680 + $0x88] sm:$0xff]
    %v2699 = vld [vmem:[%s2680 + $0x90] sm:$0xff]
    %v2700 = vld [vmem:[%s2680 + $0x98] sm:$0xff]
    %v2701 = vld [vmem:[%s2680 + $0xa0] sm:$0xff]
    %v2702 = vld [vmem:[%s2680 + $0xa8] sm:$0xff]
    %v2703 = vld [vmem:[%s2680 + $0xb0] sm:$0xff]
    %v2704 = vld [vmem:[%s2680 + $0xb8] sm:$0xff]
    %v2705 = vld [vmem:[%s2680 + $0xc0] sm:$0xff]
    %v2706 = vld [vmem:[%s2680 + $0xc8] sm:$0xff]
    %v2707 = vld [vmem:[%s2680 + $0xd0] sm:$0xff]
    %v2708 = vld [vmem:[%s2680 + $0xd8] sm:$0xff]
    %v2709 = vld [vmem:[%s2680 + $0xe0] sm:$0xff]
    %v2710 = vld [vmem:[%s2680 + $0xe8] sm:$0xff]
    %v2711 = vld [vmem:[%s2680 + $0xf0] sm:$0xff]
    %v2712 = vld [vmem:[%s2680 + $0xf8] sm:$0xff]
    %v2745 = vunpack.c.l.b16 %v2681
    %v2746 = vunpack.c.h.b16 %v2681
    %v2747 = vunpack.c.l.b16 %v2682
    %v2748 = vunpack.c.h.b16 %v2682
    %v2749 = vunpack.c.l.b16 %v2683
    %v2750 = vunpack.c.h.b16 %v2683
    %v2751 = vunpack.c.l.b16 %v2684
    %v2752 = vunpack.c.h.b16 %v2684
    %v2753 = vunpack.c.l.b16 %v2685
    %v2754 = vunpack.c.h.b16 %v2685
    %v2755 = vunpack.c.l.b16 %v2686
    %v2756 = vunpack.c.h.b16 %v2686
    %v2757 = vunpack.c.l.b16 %v2687
    %v2758 = vunpack.c.h.b16 %v2687
    %v2759 = vunpack.c.l.b16 %v2688
    %v2760 = vunpack.c.h.b16 %v2688
    %v2761 = vunpack.c.l.b16 %v2689
    %v2762 = vunpack.c.h.b16 %v2689
    %v2763 = vunpack.c.l.b16 %v2690
    %v2764 = vunpack.c.h.b16 %v2690
    %v2765 = vunpack.c.l.b16 %v2691
    %v2766 = vunpack.c.h.b16 %v2691
    %v2767 = vunpack.c.l.b16 %v2692
    %v2768 = vunpack.c.h.b16 %v2692
    %v2769 = vunpack.c.l.b16 %v2693
    %v2770 = vunpack.c.h.b16 %v2693
    %v2771 = vunpack.c.l.b16 %v2694
    %v2772 = vunpack.c.h.b16 %v2694
    %v2773 = vunpack.c.l.b16 %v2695
    %v2774 = vunpack.c.h.b16 %v2695
    %v2775 = vunpack.c.l.b16 %v2696
    %v2776 = vunpack.c.h.b16 %v2696
    %v2777 = vunpack.c.l.b16 %v2697
    %v2778 = vunpack.c.h.b16 %v2697
    %v2779 = vunpack.c.l.b16 %v2698
    %v2780 = vunpack.c.h.b16 %v2698
    %v2781 = vunpack.c.l.b16 %v2699
    %v2782 = vunpack.c.h.b16 %v2699
    %v2783 = vunpack.c.l.b16 %v2700
    %v2784 = vunpack.c.h.b16 %v2700
    %v2785 = vunpack.c.l.b16 %v2701
    %v2786 = vunpack.c.h.b16 %v2701
    %v2787 = vunpack.c.l.b16 %v2702
    %v2788 = vunpack.c.h.b16 %v2702
    %v2789 = vunpack.c.l.b16 %v2703
    %v2790 = vunpack.c.h.b16 %v2703
    %v2791 = vunpack.c.l.b16 %v2704
    %v2792 = vunpack.c.h.b16 %v2704
    %v2793 = vunpack.c.l.b16 %v2705
    %v2794 = vunpack.c.h.b16 %v2705
    %v2795 = vunpack.c.l.b16 %v2706
    %v2796 = vunpack.c.h.b16 %v2706
    %v2797 = vunpack.c.l.b16 %v2707
    %v2798 = vunpack.c.h.b16 %v2707
    %v2799 = vunpack.c.l.b16 %v2708
    %v2800 = vunpack.c.h.b16 %v2708
    %v2801 = vunpack.c.l.b16 %v2709
    %v2802 = vunpack.c.h.b16 %v2709
    %v2803 = vunpack.c.l.b16 %v2710
    %v2804 = vunpack.c.h.b16 %v2710
    %v2805 = vunpack.c.l.b16 %v2711
    %v2806 = vunpack.c.h.b16 %v2711
    %v2807 = vunpack.c.l.b16 %v2712
    %v2808 = vunpack.c.h.b16 %v2712
    %v2809 = vpack.c.b16 %v2747, %v2745
    %v2810 = vpack.c.b16 %v2748, %v2746
    %v2811 = vpack.c.b16 %v2751, %v2749
    %v2812 = vpack.c.b16 %v2752, %v2750
    %v2813 = vpack.c.b16 %v2755, %v2753
    %v2814 = vpack.c.b16 %v2756, %v2754
    %v2815 = vpack.c.b16 %v2759, %v2757
    %v2816 = vpack.c.b16 %v2760, %v2758
    %v2817 = vpack.c.b16 %v2763, %v2761
    %v2818 = vpack.c.b16 %v2764, %v2762
    %v2819 = vpack.c.b16 %v2767, %v2765
    %v2820 = vpack.c.b16 %v2768, %v2766
    %v2821 = vpack.c.b16 %v2771, %v2769
    %v2822 = vpack.c.b16 %v2772, %v2770
    %v2823 = vpack.c.b16 %v2775, %v2773
    %v2824 = vpack.c.b16 %v2776, %v2774
    %v2825 = vpack.c.b16 %v2779, %v2777
    %v2826 = vpack.c.b16 %v2780, %v2778
    %v2827 = vpack.c.b16 %v2783, %v2781
    %v2828 = vpack.c.b16 %v2784, %v2782
    %v2829 = vpack.c.b16 %v2787, %v2785
    %v2830 = vpack.c.b16 %v2788, %v2786
    %v2831 = vpack.c.b16 %v2791, %v2789
    %v2832 = vpack.c.b16 %v2792, %v2790
    %v2833 = vpack.c.b16 %v2795, %v2793
    %v2834 = vpack.c.b16 %v2796, %v2794
    %v2835 = vpack.c.b16 %v2799, %v2797
    %v2836 = vpack.c.b16 %v2800, %v2798
    %v2837 = vpack.c.b16 %v2803, %v2801
    %v2838 = vpack.c.b16 %v2804, %v2802
    %v2839 = vpack.c.b16 %v2807, %v2805
    %v2840 = vpack.c.b16 %v2808, %v2806
    %2873 = vmatprep.subr.bf16.mxu0 %v2810
    %2874 = vmatpush1.bf16.msra.mxu0 %v2809
    %2875 = vmatprep.subr.bf16.mxu0 %v2812
    %2876 = vmatpush1.bf16.msra.mxu0 %v2811
    %2877 = vmatprep.subr.bf16.mxu0 %v2814
    %2878 = vmatpush1.bf16.msra.mxu0 %v2813
    %2879 = vmatprep.subr.bf16.mxu0 %v2816
    %2880 = vmatpush1.bf16.msra.mxu0 %v2815
    %2881 = vmatprep.subr.bf16.mxu0 %v2818
    %2882 = vmatpush1.bf16.msra.mxu0 %v2817
    %2883 = vmatprep.subr.bf16.mxu0 %v2820
    %2884 = vmatpush1.bf16.msra.mxu0 %v2819
    %2885 = vmatprep.subr.bf16.mxu0 %v2822
    %2886 = vmatpush1.bf16.msra.mxu0 %v2821
    %2887 = vmatprep.subr.bf16.mxu0 %v2824
    %2888 = vmatpush1.bf16.msra.mxu0 %v2823
    %2889 = vmatprep.subr.bf16.mxu0 %v2826
    %2890 = vmatpush1.bf16.msra.mxu0 %v2825
    %2891 = vmatprep.subr.bf16.mxu0 %v2828
    %2892 = vmatpush1.bf16.msra.mxu0 %v2827
    %2893 = vmatprep.subr.bf16.mxu0 %v2830
    %2894 = vmatpush1.bf16.msra.mxu0 %v2829
    %2895 = vmatprep.subr.bf16.mxu0 %v2832
    %2896 = vmatpush1.bf16.msra.mxu0 %v2831
    %2897 = vmatprep.subr.bf16.mxu0 %v2834
    %2898 = vmatpush1.bf16.msra.mxu0 %v2833
    %2899 = vmatprep.subr.bf16.mxu0 %v2836
    %2900 = vmatpush1.bf16.msra.mxu0 %v2835
    %2901 = vmatprep.subr.bf16.mxu0 %v2838
    %2902 = vmatpush1.bf16.msra.mxu0 %v2837
    %2903 = vmatprep.subr.bf16.mxu0 %v2840
    %2904 = vmatpush1.bf16.msra.mxu0 %v2839
    %2905 = vmatprep.mubr.bf16.mxu0 %v2153
    %2906 = vmatmul.mubr.bf16.gmra.mrb[0].mxu0 %v2152
    %v2907 = vpop.f32.mrb[0].mxu0
    %v2908 = vadd.f32 0.0, %v2907
    %v2909 = vpop.f32.mrb[0].mxu0
    %v2910 = vadd.f32 0.0, %v2909
    %v2911 = vpop.f32.mrb[0].mxu0
    %v2912 = vadd.f32 0.0, %v2911
    %v2913 = vpop.f32.mrb[0].mxu0
    %v2914 = vadd.f32 0.0, %v2913
    %2915 = vmatprep.mubr.bf16.mxu0 %v2220
    %2916 = vmatmul.mubr.bf16.gmra.mrb[0].mxu0 %v2219
    %v2917 = vpop.f32.mrb[0].mxu0
    %v2918 = vadd.f32 0.0, %v2917
    %v2919 = vpop.f32.mrb[0].mxu0
    %v2920 = vadd.f32 0.0, %v2919
    %v2921 = vpop.f32.mrb[0].mxu0
    %v2922 = vadd.f32 0.0, %v2921
    %v2923 = vpop.f32.mrb[0].mxu0
    %v2924 = vadd.f32 0.0, %v2923
    %2925 = vdwg.mxu0
    %v2958 = vunpack.c.l.b16 %v2187
    %v2959 = vunpack.c.h.b16 %v2187
    %v2960 = vunpack.c.l.b16 %v2188
    %v2961 = vunpack.c.h.b16 %v2188
    %v2962 = vunpack.c.l.b16 %v2189
    %v2963 = vunpack.c.h.b16 %v2189
    %v2964 = vunpack.c.l.b16 %v2190
    %v2965 = vunpack.c.h.b16 %v2190
    %v2966 = vunpack.c.l.b16 %v2191
    %v2967 = vunpack.c.h.b16 %v2191
    %v2968 = vunpack.c.l.b16 %v2192
    %v2969 = vunpack.c.h.b16 %v2192
    %v2970 = vunpack.c.l.b16 %v2193
    %v2971 = vunpack.c.h.b16 %v2193
    %v2972 = vunpack.c.l.b16 %v2194
    %v2973 = vunpack.c.h.b16 %v2194
    %v2974 = vunpack.c.l.b16 %v2195
    %v2975 = vunpack.c.h.b16 %v2195
    %v2976 = vunpack.c.l.b16 %v2196
    %v2977 = vunpack.c.h.b16 %v2196
    %v2978 = vunpack.c.l.b16 %v2197
    %v2979 = vunpack.c.h.b16 %v2197
    %v2980 = vunpack.c.l.b16 %v2198
    %v2981 = vunpack.c.h.b16 %v2198
    %v2982 = vunpack.c.l.b16 %v2199
    %v2983 = vunpack.c.h.b16 %v2199
    %v2984 = vunpack.c.l.b16 %v2200
    %v2985 = vunpack.c.h.b16 %v2200
    %v2986 = vunpack.c.l.b16 %v2201
    %v2987 = vunpack.c.h.b16 %v2201
    %v2988 = vunpack.c.l.b16 %v2202
    %v2989 = vunpack.c.h.b16 %v2202
    %v2990 = vunpack.c.l.b16 %v2203
    %v2991 = vunpack.c.h.b16 %v2203
    %v2992 = vunpack.c.l.b16 %v2204
    %v2993 = vunpack.c.h.b16 %v2204
    %v2994 = vunpack.c.l.b16 %v2205
    %v2995 = vunpack.c.h.b16 %v2205
    %v2996 = vunpack.c.l.b16 %v2206
    %v2997 = vunpack.c.h.b16 %v2206
    %v2998 = vunpack.c.l.b16 %v2207
    %v2999 = vunpack.c.h.b16 %v2207
    %v3000 = vunpack.c.l.b16 %v2208
    %v3001 = vunpack.c.h.b16 %v2208
    %v3002 = vunpack.c.l.b16 %v2209
    %v3003 = vunpack.c.h.b16 %v2209
    %v3004 = vunpack.c.l.b16 %v2210
    %v3005 = vunpack.c.h.b16 %v2210
    %v3006 = vunpack.c.l.b16 %v2211
    %v3007 = vunpack.c.h.b16 %v2211
    %v3008 = vunpack.c.l.b16 %v2212
    %v3009 = vunpack.c.h.b16 %v2212
    %v3010 = vunpack.c.l.b16 %v2213
    %v3011 = vunpack.c.h.b16 %v2213
    %v3012 = vunpack.c.l.b16 %v2214
    %v3013 = vunpack.c.h.b16 %v2214
    %v3014 = vunpack.c.l.b16 %v2215
    %v3015 = vunpack.c.h.b16 %v2215
    %v3016 = vunpack.c.l.b16 %v2216
    %v3017 = vunpack.c.h.b16 %v2216
    %v3018 = vunpack.c.l.b16 %v2217
    %v3019 = vunpack.c.h.b16 %v2217
    %v3020 = vunpack.c.l.b16 %v2218
    %v3021 = vunpack.c.h.b16 %v2218
    %v3022 = vpack.c.b16 %v2960, %v2958
    %v3023 = vpack.c.b16 %v2961, %v2959
    %v3024 = vpack.c.b16 %v2964, %v2962
    %v3025 = vpack.c.b16 %v2965, %v2963
    %v3026 = vpack.c.b16 %v2968, %v2966
    %v3027 = vpack.c.b16 %v2969, %v2967
    %v3028 = vpack.c.b16 %v2972, %v2970
    %v3029 = vpack.c.b16 %v2973, %v2971
    %v3030 = vpack.c.b16 %v2976, %v2974
    %v3031 = vpack.c.b16 %v2977, %v2975
    %v3032 = vpack.c.b16 %v2980, %v2978
    %v3033 = vpack.c.b16 %v2981, %v2979
    %v3034 = vpack.c.b16 %v2984, %v2982
    %v3035 = vpack.c.b16 %v2985, %v2983
    %v3036 = vpack.c.b16 %v2988, %v2986
    %v3037 = vpack.c.b16 %v2989, %v2987
    %v3038 = vpack.c.b16 %v2992, %v2990
    %v3039 = vpack.c.b16 %v2993, %v2991
    %v3040 = vpack.c.b16 %v2996, %v2994
    %v3041 = vpack.c.b16 %v2997, %v2995
    %v3042 = vpack.c.b16 %v3000, %v2998
    %v3043 = vpack.c.b16 %v3001, %v2999
    %v3044 = vpack.c.b16 %v3004, %v3002
    %v3045 = vpack.c.b16 %v3005, %v3003
    %v3046 = vpack.c.b16 %v3008, %v3006
    %v3047 = vpack.c.b16 %v3009, %v3007
    %v3048 = vpack.c.b16 %v3012, %v3010
    %v3049 = vpack.c.b16 %v3013, %v3011
    %v3050 = vpack.c.b16 %v3016, %v3014
    %v3051 = vpack.c.b16 %v3017, %v3015
    %v3052 = vpack.c.b16 %v3020, %v3018
    %v3053 = vpack.c.b16 %v3021, %v3019
    %3086 = vmatprep.subr.bf16.mxu0 %v3023
    %3087 = vmatpush1.bf16.msra.mxu0 %v3022
    %3088 = vmatprep.subr.bf16.mxu0 %v3025
    %3089 = vmatpush1.bf16.msra.mxu0 %v3024
    %3090 = vmatprep.subr.bf16.mxu0 %v3027
    %3091 = vmatpush1.bf16.msra.mxu0 %v3026
    %3092 = vmatprep.subr.bf16.mxu0 %v3029
    %3093 = vmatpush1.bf16.msra.mxu0 %v3028
    %3094 = vmatprep.subr.bf16.mxu0 %v3031
    %3095 = vmatpush1.bf16.msra.mxu0 %v3030
    %3096 = vmatprep.subr.bf16.mxu0 %v3033
    %3097 = vmatpush1.bf16.msra.mxu0 %v3032
    %3098 = vmatprep.subr.bf16.mxu0 %v3035
    %3099 = vmatpush1.bf16.msra.mxu0 %v3034
    %3100 = vmatprep.subr.bf16.mxu0 %v3037
    %3101 = vmatpush1.bf16.msra.mxu0 %v3036
    %3102 = vmatprep.subr.bf16.mxu0 %v3039
    %3103 = vmatpush1.bf16.msra.mxu0 %v3038
    %3104 = vmatprep.subr.bf16.mxu0 %v3041
    %3105 = vmatpush1.bf16.msra.mxu0 %v3040
    %3106 = vmatprep.subr.bf16.mxu0 %v3043
    %3107 = vmatpush1.bf16.msra.mxu0 %v3042
    %3108 = vmatprep.subr.bf16.mxu0 %v3045
    %3109 = vmatpush1.bf16.msra.mxu0 %v3044
    %3110 = vmatprep.subr.bf16.mxu0 %v3047
    %3111 = vmatpush1.bf16.msra.mxu0 %v3046
    %3112 = vmatprep.subr.bf16.mxu0 %v3049
    %3113 = vmatpush1.bf16.msra.mxu0 %v3048
    %3114 = vmatprep.subr.bf16.mxu0 %v3051
    %3115 = vmatpush1.bf16.msra.mxu0 %v3050
    %3116 = vmatprep.subr.bf16.mxu0 %v3053
    %3117 = vmatpush1.bf16.msra.mxu0 %v3052
    %3118 = vmatprep.mubr.bf16.mxu0 %v2151
    %3119 = vmatmul.mubr.bf16.gmra.mrb[0].mxu0 %v2150
    %v3120 = vpop.f32.mrb[0].mxu0
    %v3121 = vadd.f32 %v2908, %v3120
    %v3122 = vpop.f32.mrb[0].mxu0
    %v3123 = vadd.f32 %v2910, %v3122
    %v3124 = vpop.f32.mrb[0].mxu0
    %v3125 = vadd.f32 %v2912, %v3124
    %v3126 = vpop.f32.mrb[0].mxu0
    %v3127 = vadd.f32 %v2914, %v3126
    %3128 = vmatprep.mubr.bf16.mxu0 %v2153
    %3129 = vmatmul.mubr.bf16.gmra.mrb[0].mxu0 %v2152
    %v3130 = vpop.f32.mrb[0].mxu0
    %v3131 = vadd.f32 %v2918, %v3130
    %v3132 = vpop.f32.mrb[0].mxu0
    %v3133 = vadd.f32 %v2920, %v3132
    %v3134 = vpop.f32.mrb[0].mxu0
    %v3135 = vadd.f32 %v2922, %v3134
    %v3136 = vpop.f32.mrb[0].mxu0
    %v3137 = vadd.f32 %v2924, %v3136
    %3138 = vdwg.mxu0
    %v3139 = vpack.c.bf16 %v2077, %v2071
    %v3140 = vpack.c.bf16 %v2080, %v2074
    %s3141 = scalar_lea.vmem %s3, 1024
    %v3142 = vld [vmem:[%s3141] sm:$0xff]
    %v3143 = vld [vmem:[%s3141 + $0x8] sm:$0xff]
    %v3144 = vld [vmem:[%s3141 + $0x10] sm:$0xff]
    %v3145 = vld [vmem:[%s3141 + $0x18] sm:$0xff]
    %v3146 = vld [vmem:[%s3141 + $0x20] sm:$0xff]
    %v3147 = vld [vmem:[%s3141 + $0x28] sm:$0xff]
    %v3148 = vld [vmem:[%s3141 + $0x30] sm:$0xff]
    %v3149 = vld [vmem:[%s3141 + $0x38] sm:$0xff]
    %v3150 = vld [vmem:[%s3141 + $0x40] sm:$0xff]
    %v3151 = vld [vmem:[%s3141 + $0x48] sm:$0xff]
    %v3152 = vld [vmem:[%s3141 + $0x50] sm:$0xff]
    %v3153 = vld [vmem:[%s3141 + $0x58] sm:$0xff]
    %v3154 = vld [vmem:[%s3141 + $0x60] sm:$0xff]
    %v3155 = vld [vmem:[%s3141 + $0x68] sm:$0xff]
    %v3156 = vld [vmem:[%s3141 + $0x70] sm:$0xff]
    %v3157 = vld [vmem:[%s3141 + $0x78] sm:$0xff]
    %v3158 = vld [vmem:[%s3141 + $0x80] sm:$0xff]
    %v3159 = vld [vmem:[%s3141 + $0x88] sm:$0xff]
    %v3160 = vld [vmem:[%s3141 + $0x90] sm:$0xff]
    %v3161 = vld [vmem:[%s3141 + $0x98] sm:$0xff]
    %v3162 = vld [vmem:[%s3141 + $0xa0] sm:$0xff]
    %v3163 = vld [vmem:[%s3141 + $0xa8] sm:$0xff]
    %v3164 = vld [vmem:[%s3141 + $0xb0] sm:$0xff]
    %v3165 = vld [vmem:[%s3141 + $0xb8] sm:$0xff]
    %v3166 = vld [vmem:[%s3141 + $0xc0] sm:$0xff]
    %v3167 = vld [vmem:[%s3141 + $0xc8] sm:$0xff]
    %v3168 = vld [vmem:[%s3141 + $0xd0] sm:$0xff]
    %v3169 = vld [vmem:[%s3141 + $0xd8] sm:$0xff]
    %v3170 = vld [vmem:[%s3141 + $0xe0] sm:$0xff]
    %v3171 = vld [vmem:[%s3141 + $0xe8] sm:$0xff]
    %v3172 = vld [vmem:[%s3141 + $0xf0] sm:$0xff]
    %v3173 = vld [vmem:[%s3141 + $0xf8] sm:$0xff]
    %v3206 = vunpack.c.l.b16 %v3142
    %v3207 = vunpack.c.h.b16 %v3142
    %v3208 = vunpack.c.l.b16 %v3143
    %v3209 = vunpack.c.h.b16 %v3143
    %v3210 = vunpack.c.l.b16 %v3144
    %v3211 = vunpack.c.h.b16 %v3144
    %v3212 = vunpack.c.l.b16 %v3145
    %v3213 = vunpack.c.h.b16 %v3145
    %v3214 = vunpack.c.l.b16 %v3146
    %v3215 = vunpack.c.h.b16 %v3146
    %v3216 = vunpack.c.l.b16 %v3147
    %v3217 = vunpack.c.h.b16 %v3147
    %v3218 = vunpack.c.l.b16 %v3148
    %v3219 = vunpack.c.h.b16 %v3148
    %v3220 = vunpack.c.l.b16 %v3149
    %v3221 = vunpack.c.h.b16 %v3149
    %v3222 = vunpack.c.l.b16 %v3150
    %v3223 = vunpack.c.h.b16 %v3150
    %v3224 = vunpack.c.l.b16 %v3151
    %v3225 = vunpack.c.h.b16 %v3151
    %v3226 = vunpack.c.l.b16 %v3152
    %v3227 = vunpack.c.h.b16 %v3152
    %v3228 = vunpack.c.l.b16 %v3153
    %v3229 = vunpack.c.h.b16 %v3153
    %v3230 = vunpack.c.l.b16 %v3154
    %v3231 = vunpack.c.h.b16 %v3154
    %v3232 = vunpack.c.l.b16 %v3155
    %v3233 = vunpack.c.h.b16 %v3155
    %v3234 = vunpack.c.l.b16 %v3156
    %v3235 = vunpack.c.h.b16 %v3156
    %v3236 = vunpack.c.l.b16 %v3157
    %v3237 = vunpack.c.h.b16 %v3157
    %v3238 = vunpack.c.l.b16 %v3158
    %v3239 = vunpack.c.h.b16 %v3158
    %v3240 = vunpack.c.l.b16 %v3159
    %v3241 = vunpack.c.h.b16 %v3159
    %v3242 = vunpack.c.l.b16 %v3160
    %v3243 = vunpack.c.h.b16 %v3160
    %v3244 = vunpack.c.l.b16 %v3161
    %v3245 = vunpack.c.h.b16 %v3161
    %v3246 = vunpack.c.l.b16 %v3162
    %v3247 = vunpack.c.h.b16 %v3162
    %v3248 = vunpack.c.l.b16 %v3163
    %v3249 = vunpack.c.h.b16 %v3163
    %v3250 = vunpack.c.l.b16 %v3164
    %v3251 = vunpack.c.h.b16 %v3164
    %v3252 = vunpack.c.l.b16 %v3165
    %v3253 = vunpack.c.h.b16 %v3165
    %v3254 = vunpack.c.l.b16 %v3166
    %v3255 = vunpack.c.h.b16 %v3166
    %v3256 = vunpack.c.l.b16 %v3167
    %v3257 = vunpack.c.h.b16 %v3167
    %v3258 = vunpack.c.l.b16 %v3168
    %v3259 = vunpack.c.h.b16 %v3168
    %v3260 = vunpack.c.l.b16 %v3169
    %v3261 = vunpack.c.h.b16 %v3169
    %v3262 = vunpack.c.l.b16 %v3170
    %v3263 = vunpack.c.h.b16 %v3170
    %v3264 = vunpack.c.l.b16 %v3171
    %v3265 = vunpack.c.h.b16 %v3171
    %v3266 = vunpack.c.l.b16 %v3172
    %v3267 = vunpack.c.h.b16 %v3172
    %v3268 = vunpack.c.l.b16 %v3173
    %v3269 = vunpack.c.h.b16 %v3173
    %v3270 = vpack.c.b16 %v3208, %v3206
    %v3271 = vpack.c.b16 %v3209, %v3207
    %v3272 = vpack.c.b16 %v3212, %v3210
    %v3273 = vpack.c.b16 %v3213, %v3211
    %v3274 = vpack.c.b16 %v3216, %v3214
    %v3275 = vpack.c.b16 %v3217, %v3215
    %v3276 = vpack.c.b16 %v3220, %v3218
    %v3277 = vpack.c.b16 %v3221, %v3219
    %v3278 = vpack.c.b16 %v3224, %v3222
    %v3279 = vpack.c.b16 %v3225, %v3223
    %v3280 = vpack.c.b16 %v3228, %v3226
    %v3281 = vpack.c.b16 %v3229, %v3227
    %v3282 = vpack.c.b16 %v3232, %v3230
    %v3283 = vpack.c.b16 %v3233, %v3231
    %v3284 = vpack.c.b16 %v3236, %v3234
    %v3285 = vpack.c.b16 %v3237, %v3235
    %v3286 = vpack.c.b16 %v3240, %v3238
    %v3287 = vpack.c.b16 %v3241, %v3239
    %v3288 = vpack.c.b16 %v3244, %v3242
    %v3289 = vpack.c.b16 %v3245, %v3243
    %v3290 = vpack.c.b16 %v3248, %v3246
    %v3291 = vpack.c.b16 %v3249, %v3247
    %v3292 = vpack.c.b16 %v3252, %v3250
    %v3293 = vpack.c.b16 %v3253, %v3251
    %v3294 = vpack.c.b16 %v3256, %v3254
    %v3295 = vpack.c.b16 %v3257, %v3255
    %v3296 = vpack.c.b16 %v3260, %v3258
    %v3297 = vpack.c.b16 %v3261, %v3259
    %v3298 = vpack.c.b16 %v3264, %v3262
    %v3299 = vpack.c.b16 %v3265, %v3263
    %v3300 = vpack.c.b16 %v3268, %v3266
    %v3301 = vpack.c.b16 %v3269, %v3267
    %3334 = vmatprep.subr.bf16.mxu0 %v3271
    %3335 = vmatpush1.bf16.msra.mxu0 %v3270
    %3336 = vmatprep.subr.bf16.mxu0 %v3273
    %3337 = vmatpush1.bf16.msra.mxu0 %v3272
    %3338 = vmatprep.subr.bf16.mxu0 %v3275
    %3339 = vmatpush1.bf16.msra.mxu0 %v3274
    %3340 = vmatprep.subr.bf16.mxu0 %v3277
    %3341 = vmatpush1.bf16.msra.mxu0 %v3276
    %3342 = vmatprep.subr.bf16.mxu0 %v3279
    %3343 = vmatpush1.bf16.msra.mxu0 %v3278
    %3344 = vmatprep.subr.bf16.mxu0 %v3281
    %3345 = vmatpush1.bf16.msra.mxu0 %v3280
    %3346 = vmatprep.subr.bf16.mxu0 %v3283
    %3347 = vmatpush1.bf16.msra.mxu0 %v3282
    %3348 = vmatprep.subr.bf16.mxu0 %v3285
    %3349 = vmatpush1.bf16.msra.mxu0 %v3284
    %3350 = vmatprep.subr.bf16.mxu0 %v3287
    %3351 = vmatpush1.bf16.msra.mxu0 %v3286
    %3352 = vmatprep.subr.bf16.mxu0 %v3289
    %3353 = vmatpush1.bf16.msra.mxu0 %v3288
    %3354 = vmatprep.subr.bf16.mxu0 %v3291
    %3355 = vmatpush1.bf16.msra.mxu0 %v3290
    %3356 = vmatprep.subr.bf16.mxu0 %v3293
    %3357 = vmatpush1.bf16.msra.mxu0 %v3292
    %3358 = vmatprep.subr.bf16.mxu0 %v3295
    %3359 = vmatpush1.bf16.msra.mxu0 %v3294
    %3360 = vmatprep.subr.bf16.mxu0 %v3297
    %3361 = vmatpush1.bf16.msra.mxu0 %v3296
    %3362 = vmatprep.subr.bf16.mxu0 %v3299
    %3363 = vmatpush1.bf16.msra.mxu0 %v3298
    %3364 = vmatprep.subr.bf16.mxu0 %v3301
    %3365 = vmatpush1.bf16.msra.mxu0 %v3300
    %3366 = vmatprep.mubr.bf16.mxu0 %v2220
    %3367 = vmatmul.mubr.bf16.gmra.mrb[0].mxu0 %v2219
    %v3368 = vpop.f32.mrb[0].mxu0
    %v3369 = vadd.f32 0.0, %v3368
    %v3370 = vpop.f32.mrb[0].mxu0
    %v3371 = vadd.f32 0.0, %v3370
    %v3372 = vpop.f32.mrb[0].mxu0
    %v3373 = vadd.f32 0.0, %v3372
    %v3374 = vpop.f32.mrb[0].mxu0
    %v3375 = vadd.f32 0.0, %v3374
    %3376 = vmatprep.mubr.bf16.mxu0 %v3140
    %3377 = vmatmul.mubr.bf16.gmra.mrb[0].mxu0 %v3139
    %v3378 = vpop.f32.mrb[0].mxu0
    %v3379 = vadd.f32 0.0, %v3378
    %v3380 = vpop.f32.mrb[0].mxu0
    %v3381 = vadd.f32 0.0, %v3380
    %v3382 = vpop.f32.mrb[0].mxu0
    %v3383 = vadd.f32 0.0, %v3382
    %v3384 = vpop.f32.mrb[0].mxu0
    %v3385 = vadd.f32 0.0, %v3384
    %3386 = vdwg.mxu0
    %v3387 = vadd.f32 %v2662, %v3369
    %v3388 = vadd.f32 %v2664, %v3371
    %v3389 = vadd.f32 %v2666, %v3373
    %v3390 = vadd.f32 %v2668, %v3375
    %v3391 = vadd.f32 %v2672, %v3379
    %v3392 = vadd.f32 %v2674, %v3381
    %v3393 = vadd.f32 %v2676, %v3383
    %v3394 = vadd.f32 %v2678, %v3385
    %s3395 = scalar_lea.vmem %s3, 1280
    %v3396 = vld [vmem:[%s3395] sm:$0xff]
    %v3397 = vld [vmem:[%s3395 + $0x8] sm:$0xff]
    %v3398 = vld [vmem:[%s3395 + $0x10] sm:$0xff]
    %v3399 = vld [vmem:[%s3395 + $0x18] sm:$0xff]
    %v3400 = vld [vmem:[%s3395 + $0x20] sm:$0xff]
    %v3401 = vld [vmem:[%s3395 + $0x28] sm:$0xff]
    %v3402 = vld [vmem:[%s3395 + $0x30] sm:$0xff]
    %v3403 = vld [vmem:[%s3395 + $0x38] sm:$0xff]
    %v3404 = vld [vmem:[%s3395 + $0x40] sm:$0xff]
    %v3405 = vld [vmem:[%s3395 + $0x48] sm:$0xff]
    %v3406 = vld [vmem:[%s3395 + $0x50] sm:$0xff]
    %v3407 = vld [vmem:[%s3395 + $0x58] sm:$0xff]
    %v3408 = vld [vmem:[%s3395 + $0x60] sm:$0xff]
    %v3409 = vld [vmem:[%s3395 + $0x68] sm:$0xff]
    %v3410 = vld [vmem:[%s3395 + $0x70] sm:$0xff]
    %v3411 = vld [vmem:[%s3395 + $0x78] sm:$0xff]
    %v3412 = vld [vmem:[%s3395 + $0x80] sm:$0xff]
    %v3413 = vld [vmem:[%s3395 + $0x88] sm:$0xff]
    %v3414 = vld [vmem:[%s3395 + $0x90] sm:$0xff]
    %v3415 = vld [vmem:[%s3395 + $0x98] sm:$0xff]
    %v3416 = vld [vmem:[%s3395 + $0xa0] sm:$0xff]
    %v3417 = vld [vmem:[%s3395 + $0xa8] sm:$0xff]
    %v3418 = vld [vmem:[%s3395 + $0xb0] sm:$0xff]
    %v3419 = vld [vmem:[%s3395 + $0xb8] sm:$0xff]
    %v3420 = vld [vmem:[%s3395 + $0xc0] sm:$0xff]
    %v3421 = vld [vmem:[%s3395 + $0xc8] sm:$0xff]
    %v3422 = vld [vmem:[%s3395 + $0xd0] sm:$0xff]
    %v3423 = vld [vmem:[%s3395 + $0xd8] sm:$0xff]
    %v3424 = vld [vmem:[%s3395 + $0xe0] sm:$0xff]
    %v3425 = vld [vmem:[%s3395 + $0xe8] sm:$0xff]
    %v3426 = vld [vmem:[%s3395 + $0xf0] sm:$0xff]
    %v3427 = vld [vmem:[%s3395 + $0xf8] sm:$0xff]
    %v3460 = vunpack.c.l.b16 %v3396
    %v3461 = vunpack.c.h.b16 %v3396
    %v3462 = vunpack.c.l.b16 %v3397
    %v3463 = vunpack.c.h.b16 %v3397
    %v3464 = vunpack.c.l.b16 %v3398
    %v3465 = vunpack.c.h.b16 %v3398
    %v3466 = vunpack.c.l.b16 %v3399
    %v3467 = vunpack.c.h.b16 %v3399
    %v3468 = vunpack.c.l.b16 %v3400
    %v3469 = vunpack.c.h.b16 %v3400
    %v3470 = vunpack.c.l.b16 %v3401
    %v3471 = vunpack.c.h.b16 %v3401
    %v3472 = vunpack.c.l.b16 %v3402
    %v3473 = vunpack.c.h.b16 %v3402
    %v3474 = vunpack.c.l.b16 %v3403
    %v3475 = vunpack.c.h.b16 %v3403
    %v3476 = vunpack.c.l.b16 %v3404
    %v3477 = vunpack.c.h.b16 %v3404
    %v3478 = vunpack.c.l.b16 %v3405
    %v3479 = vunpack.c.h.b16 %v3405
    %v3480 = vunpack.c.l.b16 %v3406
    %v3481 = vunpack.c.h.b16 %v3406
    %v3482 = vunpack.c.l.b16 %v3407
    %v3483 = vunpack.c.h.b16 %v3407
    %v3484 = vunpack.c.l.b16 %v3408
    %v3485 = vunpack.c.h.b16 %v3408
    %v3486 = vunpack.c.l.b16 %v3409
    %v3487 = vunpack.c.h.b16 %v3409
    %v3488 = vunpack.c.l.b16 %v3410
    %v3489 = vunpack.c.h.b16 %v3410
    %v3490 = vunpack.c.l.b16 %v3411
    %v3491 = vunpack.c.h.b16 %v3411
    %v3492 = vunpack.c.l.b16 %v3412
    %v3493 = vunpack.c.h.b16 %v3412
    %v3494 = vunpack.c.l.b16 %v3413
    %v3495 = vunpack.c.h.b16 %v3413
    %v3496 = vunpack.c.l.b16 %v3414
    %v3497 = vunpack.c.h.b16 %v3414
    %v3498 = vunpack.c.l.b16 %v3415
    %v3499 = vunpack.c.h.b16 %v3415
    %v3500 = vunpack.c.l.b16 %v3416
    %v3501 = vunpack.c.h.b16 %v3416
    %v3502 = vunpack.c.l.b16 %v3417
    %v3503 = vunpack.c.h.b16 %v3417
    %v3504 = vunpack.c.l.b16 %v3418
    %v3505 = vunpack.c.h.b16 %v3418
    %v3506 = vunpack.c.l.b16 %v3419
    %v3507 = vunpack.c.h.b16 %v3419
    %v3508 = vunpack.c.l.b16 %v3420
    %v3509 = vunpack.c.h.b16 %v3420
    %v3510 = vunpack.c.l.b16 %v3421
    %v3511 = vunpack.c.h.b16 %v3421
    %v3512 = vunpack.c.l.b16 %v3422
    %v3513 = vunpack.c.h.b16 %v3422
    %v3514 = vunpack.c.l.b16 %v3423
    %v3515 = vunpack.c.h.b16 %v3423
    %v3516 = vunpack.c.l.b16 %v3424
    %v3517 = vunpack.c.h.b16 %v3424
    %v3518 = vunpack.c.l.b16 %v3425
    %v3519 = vunpack.c.h.b16 %v3425
    %v3520 = vunpack.c.l.b16 %v3426
    %v3521 = vunpack.c.h.b16 %v3426
    %v3522 = vunpack.c.l.b16 %v3427
    %v3523 = vunpack.c.h.b16 %v3427
    %v3524 = vpack.c.b16 %v3462, %v3460
    %v3525 = vpack.c.b16 %v3463, %v3461
    %v3526 = vpack.c.b16 %v3466, %v3464
    %v3527 = vpack.c.b16 %v3467, %v3465
    %v3528 = vpack.c.b16 %v3470, %v3468
    %v3529 = vpack.c.b16 %v3471, %v3469
    %v3530 = vpack.c.b16 %v3474, %v3472
    %v3531 = vpack.c.b16 %v3475, %v3473
    %v3532 = vpack.c.b16 %v3478, %v3476
    %v3533 = vpack.c.b16 %v3479, %v3477
    %v3534 = vpack.c.b16 %v3482, %v3480
    %v3535 = vpack.c.b16 %v3483, %v3481
    %v3536 = vpack.c.b16 %v3486, %v3484
    %v3537 = vpack.c.b16 %v3487, %v3485
    %v3538 = vpack.c.b16 %v3490, %v3488
    %v3539 = vpack.c.b16 %v3491, %v3489
    %v3540 = vpack.c.b16 %v3494, %v3492
    %v3541 = vpack.c.b16 %v3495, %v3493
    %v3542 = vpack.c.b16 %v3498, %v3496
    %v3543 = vpack.c.b16 %v3499, %v3497
    %v3544 = vpack.c.b16 %v3502, %v3500
    %v3545 = vpack.c.b16 %v3503, %v3501
    %v3546 = vpack.c.b16 %v3506, %v3504
    %v3547 = vpack.c.b16 %v3507, %v3505
    %v3548 = vpack.c.b16 %v3510, %v3508
    %v3549 = vpack.c.b16 %v3511, %v3509
    %v3550 = vpack.c.b16 %v3514, %v3512
    %v3551 = vpack.c.b16 %v3515, %v3513
    %v3552 = vpack.c.b16 %v3518, %v3516
    %v3553 = vpack.c.b16 %v3519, %v3517
    %v3554 = vpack.c.b16 %v3522, %v3520
    %v3555 = vpack.c.b16 %v3523, %v3521
    %3588 = vmatprep.subr.bf16.mxu0 %v3525
    %3589 = vmatpush1.bf16.msra.mxu0 %v3524
    %3590 = vmatprep.subr.bf16.mxu0 %v3527
    %3591 = vmatpush1.bf16.msra.mxu0 %v3526
    %3592 = vmatprep.subr.bf16.mxu0 %v3529
    %3593 = vmatpush1.bf16.msra.mxu0 %v3528
    %3594 = vmatprep.subr.bf16.mxu0 %v3531
    %3595 = vmatpush1.bf16.msra.mxu0 %v3530
    %3596 = vmatprep.subr.bf16.mxu0 %v3533
    %3597 = vmatpush1.bf16.msra.mxu0 %v3532
    %3598 = vmatprep.subr.bf16.mxu0 %v3535
    %3599 = vmatpush1.bf16.msra.mxu0 %v3534
    %3600 = vmatprep.subr.bf16.mxu0 %v3537
    %3601 = vmatpush1.bf16.msra.mxu0 %v3536
    %3602 = vmatprep.subr.bf16.mxu0 %v3539
    %3603 = vmatpush1.bf16.msra.mxu0 %v3538
    %3604 = vmatprep.subr.bf16.mxu0 %v3541
    %3605 = vmatpush1.bf16.msra.mxu0 %v3540
    %3606 = vmatprep.subr.bf16.mxu0 %v3543
    %3607 = vmatpush1.bf16.msra.mxu0 %v3542
    %3608 = vmatprep.subr.bf16.mxu0 %v3545
    %3609 = vmatpush1.bf16.msra.mxu0 %v3544
    %3610 = vmatprep.subr.bf16.mxu0 %v3547
    %3611 = vmatpush1.bf16.msra.mxu0 %v3546
    %3612 = vmatprep.subr.bf16.mxu0 %v3549
    %3613 = vmatpush1.bf16.msra.mxu0 %v3548
    %3614 = vmatprep.subr.bf16.mxu0 %v3551
    %3615 = vmatpush1.bf16.msra.mxu0 %v3550
    %3616 = vmatprep.subr.bf16.mxu0 %v3553
    %3617 = vmatpush1.bf16.msra.mxu0 %v3552
    %3618 = vmatprep.subr.bf16.mxu0 %v3555
    %3619 = vmatpush1.bf16.msra.mxu0 %v3554
    %3620 = vmatprep.mubr.bf16.mxu0 %v2220
    %3621 = vmatmul.mubr.bf16.gmra.mrb[0].mxu0 %v2219
    %v3622 = vpop.f32.mrb[0].mxu0
    %v3623 = vadd.f32 0.0, %v3622
    %v3624 = vpop.f32.mrb[0].mxu0
    %v3625 = vadd.f32 0.0, %v3624
    %v3626 = vpop.f32.mrb[0].mxu0
    %v3627 = vadd.f32 0.0, %v3626
    %v3628 = vpop.f32.mrb[0].mxu0
    %v3629 = vadd.f32 0.0, %v3628
    %3630 = vmatprep.mubr.bf16.mxu0 %v3140
    %3631 = vmatmul.mubr.bf16.gmra.mrb[0].mxu0 %v3139
    %v3632 = vpop.f32.mrb[0].mxu0
    %v3633 = vadd.f32 0.0, %v3632
    %v3634 = vpop.f32.mrb[0].mxu0
    %v3635 = vadd.f32 0.0, %v3634
    %v3636 = vpop.f32.mrb[0].mxu0
    %v3637 = vadd.f32 0.0, %v3636
    %v3638 = vpop.f32.mrb[0].mxu0
    %v3639 = vadd.f32 0.0, %v3638
    %3640 = vdwg.mxu0
    %v3641 = vadd.f32 %v3121, %v3623
    %v3642 = vadd.f32 %v3123, %v3625
    %v3643 = vadd.f32 %v3125, %v3627
    %v3644 = vadd.f32 %v3127, %v3629
    %v3645 = vadd.f32 %v3131, %v3633
    %v3646 = vadd.f32 %v3133, %v3635
    %v3647 = vadd.f32 %v3135, %v3637
    %v3648 = vadd.f32 %v3137, %v3639
    %v3649 = vpack.c.bf16 %v2110, %v2104
    %v3650 = vpack.c.bf16 %v2113, %v2107
    %s3651 = scalar_lea.vmem %s3, 1536
    %v3652 = vld [vmem:[%s3651] sm:$0xff]
    %v3653 = vld [vmem:[%s3651 + $0x8] sm:$0xff]
    %v3654 = vld [vmem:[%s3651 + $0x10] sm:$0xff]
    %v3655 = vld [vmem:[%s3651 + $0x18] sm:$0xff]
    %v3656 = vld [vmem:[%s3651 + $0x20] sm:$0xff]
    %v3657 = vld [vmem:[%s3651 + $0x28] sm:$0xff]
    %v3658 = vld [vmem:[%s3651 + $0x30] sm:$0xff]
    %v3659 = vld [vmem:[%s3651 + $0x38] sm:$0xff]
    %v3660 = vld [vmem:[%s3651 + $0x40] sm:$0xff]
    %v3661 = vld [vmem:[%s3651 + $0x48] sm:$0xff]
    %v3662 = vld [vmem:[%s3651 + $0x50] sm:$0xff]
    %v3663 = vld [vmem:[%s3651 + $0x58] sm:$0xff]
    %v3664 = vld [vmem:[%s3651 + $0x60] sm:$0xff]
    %v3665 = vld [vmem:[%s3651 + $0x68] sm:$0xff]
    %v3666 = vld [vmem:[%s3651 + $0x70] sm:$0xff]
    %v3667 = vld [vmem:[%s3651 + $0x78] sm:$0xff]
    %v3668 = vld [vmem:[%s3651 + $0x80] sm:$0xff]
    %v3669 = vld [vmem:[%s3651 + $0x88] sm:$0xff]
    %v3670 = vld [vmem:[%s3651 + $0x90] sm:$0xff]
    %v3671 = vld [vmem:[%s3651 + $0x98] sm:$0xff]
    %v3672 = vld [vmem:[%s3651 + $0xa0] sm:$0xff]
    %v3673 = vld [vmem:[%s3651 + $0xa8] sm:$0xff]
    %v3674 = vld [vmem:[%s3651 + $0xb0] sm:$0xff]
    %v3675 = vld [vmem:[%s3651 + $0xb8] sm:$0xff]
    %v3676 = vld [vmem:[%s3651 + $0xc0] sm:$0xff]
    %v3677 = vld [vmem:[%s3651 + $0xc8] sm:$0xff]
    %v3678 = vld [vmem:[%s3651 + $0xd0] sm:$0xff]
    %v3679 = vld [vmem:[%s3651 + $0xd8] sm:$0xff]
    %v3680 = vld [vmem:[%s3651 + $0xe0] sm:$0xff]
    %v3681 = vld [vmem:[%s3651 + $0xe8] sm:$0xff]
    %v3682 = vld [vmem:[%s3651 + $0xf0] sm:$0xff]
    %v3683 = vld [vmem:[%s3651 + $0xf8] sm:$0xff]
    %v3716 = vunpack.c.l.b16 %v3652
    %v3717 = vunpack.c.h.b16 %v3652
    %v3718 = vunpack.c.l.b16 %v3653
    %v3719 = vunpack.c.h.b16 %v3653
    %v3720 = vunpack.c.l.b16 %v3654
    %v3721 = vunpack.c.h.b16 %v3654
    %v3722 = vunpack.c.l.b16 %v3655
    %v3723 = vunpack.c.h.b16 %v3655
    %v3724 = vunpack.c.l.b16 %v3656
    %v3725 = vunpack.c.h.b16 %v3656
    %v3726 = vunpack.c.l.b16 %v3657
    %v3727 = vunpack.c.h.b16 %v3657
    %v3728 = vunpack.c.l.b16 %v3658
    %v3729 = vunpack.c.h.b16 %v3658
    %v3730 = vunpack.c.l.b16 %v3659
    %v3731 = vunpack.c.h.b16 %v3659
    %v3732 = vunpack.c.l.b16 %v3660
    %v3733 = vunpack.c.h.b16 %v3660
    %v3734 = vunpack.c.l.b16 %v3661
    %v3735 = vunpack.c.h.b16 %v3661
    %v3736 = vunpack.c.l.b16 %v3662
    %v3737 = vunpack.c.h.b16 %v3662
    %v3738 = vunpack.c.l.b16 %v3663
    %v3739 = vunpack.c.h.b16 %v3663
    %v3740 = vunpack.c.l.b16 %v3664
    %v3741 = vunpack.c.h.b16 %v3664
    %v3742 = vunpack.c.l.b16 %v3665
    %v3743 = vunpack.c.h.b16 %v3665
    %v3744 = vunpack.c.l.b16 %v3666
    %v3745 = vunpack.c.h.b16 %v3666
    %v3746 = vunpack.c.l.b16 %v3667
    %v3747 = vunpack.c.h.b16 %v3667
    %v3748 = vunpack.c.l.b16 %v3668
    %v3749 = vunpack.c.h.b16 %v3668
    %v3750 = vunpack.c.l.b16 %v3669
    %v3751 = vunpack.c.h.b16 %v3669
    %v3752 = vunpack.c.l.b16 %v3670
    %v3753 = vunpack.c.h.b16 %v3670
    %v3754 = vunpack.c.l.b16 %v3671
    %v3755 = vunpack.c.h.b16 %v3671
    %v3756 = vunpack.c.l.b16 %v3672
    %v3757 = vunpack.c.h.b16 %v3672
    %v3758 = vunpack.c.l.b16 %v3673
    %v3759 = vunpack.c.h.b16 %v3673
    %v3760 = vunpack.c.l.b16 %v3674
    %v3761 = vunpack.c.h.b16 %v3674
    %v3762 = vunpack.c.l.b16 %v3675
    %v3763 = vunpack.c.h.b16 %v3675
    %v3764 = vunpack.c.l.b16 %v3676
    %v3765 = vunpack.c.h.b16 %v3676
    %v3766 = vunpack.c.l.b16 %v3677
    %v3767 = vunpack.c.h.b16 %v3677
    %v3768 = vunpack.c.l.b16 %v3678
    %v3769 = vunpack.c.h.b16 %v3678
    %v3770 = vunpack.c.l.b16 %v3679
    %v3771 = vunpack.c.h.b16 %v3679
    %v3772 = vunpack.c.l.b16 %v3680
    %v3773 = vunpack.c.h.b16 %v3680
    %v3774 = vunpack.c.l.b16 %v3681
    %v3775 = vunpack.c.h.b16 %v3681
    %v3776 = vunpack.c.l.b16 %v3682
    %v3777 = vunpack.c.h.b16 %v3682
    %v3778 = vunpack.c.l.b16 %v3683
    %v3779 = vunpack.c.h.b16 %v3683
    %v3780 = vpack.c.b16 %v3718, %v3716
    %v3781 = vpack.c.b16 %v3719, %v3717
    %v3782 = vpack.c.b16 %v3722, %v3720
    %v3783 = vpack.c.b16 %v3723, %v3721
    %v3784 = vpack.c.b16 %v3726, %v3724
    %v3785 = vpack.c.b16 %v3727, %v3725
    %v3786 = vpack.c.b16 %v3730, %v3728
    %v3787 = vpack.c.b16 %v3731, %v3729
    %v3788 = vpack.c.b16 %v3734, %v3732
    %v3789 = vpack.c.b16 %v3735, %v3733
    %v3790 = vpack.c.b16 %v3738, %v3736
    %v3791 = vpack.c.b16 %v3739, %v3737
    %v3792 = vpack.c.b16 %v3742, %v3740
    %v3793 = vpack.c.b16 %v3743, %v3741
    %v3794 = vpack.c.b16 %v3746, %v3744
    %v3795 = vpack.c.b16 %v3747, %v3745
    %v3796 = vpack.c.b16 %v3750, %v3748
    %v3797 = vpack.c.b16 %v3751, %v3749
    %v3798 = vpack.c.b16 %v3754, %v3752
    %v3799 = vpack.c.b16 %v3755, %v3753
    %v3800 = vpack.c.b16 %v3758, %v3756
    %v3801 = vpack.c.b16 %v3759, %v3757
    %v3802 = vpack.c.b16 %v3762, %v3760
    %v3803 = vpack.c.b16 %v3763, %v3761
    %v3804 = vpack.c.b16 %v3766, %v3764
    %v3805 = vpack.c.b16 %v3767, %v3765
    %v3806 = vpack.c.b16 %v3770, %v3768
    %v3807 = vpack.c.b16 %v3771, %v3769
    %v3808 = vpack.c.b16 %v3774, %v3772
    %v3809 = vpack.c.b16 %v3775, %v3773
    %v3810 = vpack.c.b16 %v3778, %v3776
    %v3811 = vpack.c.b16 %v3779, %v3777
    %3844 = vmatprep.subr.bf16.mxu0 %v3781
    %3845 = vmatpush1.bf16.msra.mxu0 %v3780
    %3846 = vmatprep.subr.bf16.mxu0 %v3783
    %3847 = vmatpush1.bf16.msra.mxu0 %v3782
    %3848 = vmatprep.subr.bf16.mxu0 %v3785
    %3849 = vmatpush1.bf16.msra.mxu0 %v3784
    %3850 = vmatprep.subr.bf16.mxu0 %v3787
    %3851 = vmatpush1.bf16.msra.mxu0 %v3786
    %3852 = vmatprep.subr.bf16.mxu0 %v3789
    %3853 = vmatpush1.bf16.msra.mxu0 %v3788
    %3854 = vmatprep.subr.bf16.mxu0 %v3791
    %3855 = vmatpush1.bf16.msra.mxu0 %v3790
    %3856 = vmatprep.subr.bf16.mxu0 %v3793
    %3857 = vmatpush1.bf16.msra.mxu0 %v3792
    %3858 = vmatprep.subr.bf16.mxu0 %v3795
    %3859 = vmatpush1.bf16.msra.mxu0 %v3794
    %3860 = vmatprep.subr.bf16.mxu0 %v3797
    %3861 = vmatpush1.bf16.msra.mxu0 %v3796
    %3862 = vmatprep.subr.bf16.mxu0 %v3799
    %3863 = vmatpush1.bf16.msra.mxu0 %v3798
    %3864 = vmatprep.subr.bf16.mxu0 %v3801
    %3865 = vmatpush1.bf16.msra.mxu0 %v3800
    %3866 = vmatprep.subr.bf16.mxu0 %v3803
    %3867 = vmatpush1.bf16.msra.mxu0 %v3802
    %3868 = vmatprep.subr.bf16.mxu0 %v3805
    %3869 = vmatpush1.bf16.msra.mxu0 %v3804
    %3870 = vmatprep.subr.bf16.mxu0 %v3807
    %3871 = vmatpush1.bf16.msra.mxu0 %v3806
    %3872 = vmatprep.subr.bf16.mxu0 %v3809
    %3873 = vmatpush1.bf16.msra.mxu0 %v3808
    %3874 = vmatprep.subr.bf16.mxu0 %v3811
    %3875 = vmatpush1.bf16.msra.mxu0 %v3810
    %3876 = vmatprep.mubr.bf16.mxu0 %v3140
    %3877 = vmatmul.mubr.bf16.gmra.mrb[0].mxu0 %v3139
    %v3878 = vpop.f32.mrb[0].mxu0
    %v3879 = vadd.f32 0.0, %v3878
    %v3880 = vpop.f32.mrb[0].mxu0
    %v3881 = vadd.f32 0.0, %v3880
    %v3882 = vpop.f32.mrb[0].mxu0
    %v3883 = vadd.f32 0.0, %v3882
    %v3884 = vpop.f32.mrb[0].mxu0
    %v3885 = vadd.f32 0.0, %v3884
    %3886 = vmatprep.mubr.bf16.mxu0 %v3650
    %3887 = vmatmul.mubr.bf16.gmra.mrb[0].mxu0 %v3649
    %v3888 = vpop.f32.mrb[0].mxu0
    %v3889 = vadd.f32 0.0, %v3888
    %v3890 = vpop.f32.mrb[0].mxu0
    %v3891 = vadd.f32 0.0, %v3890
    %v3892 = vpop.f32.mrb[0].mxu0
    %v3893 = vadd.f32 0.0, %v3892
    %v3894 = vpop.f32.mrb[0].mxu0
    %v3895 = vadd.f32 0.0, %v3894
    %3896 = vdwg.mxu0
    %v3897 = vadd.f32 %v3387, %v3879
    %v3898 = vadd.f32 %v3388, %v3881
    %v3899 = vadd.f32 %v3389, %v3883
    %v3900 = vadd.f32 %v3390, %v3885
    %v3901 = vadd.f32 %v3391, %v3889
    %v3902 = vadd.f32 %v3392, %v3891
    %v3903 = vadd.f32 %v3393, %v3893
    %v3904 = vadd.f32 %v3394, %v3895
    %s3905 = scalar_lea.vmem %s3, 1792
    %v3906 = vld [vmem:[%s3905] sm:$0xff]
    %v3907 = vld [vmem:[%s3905 + $0x8] sm:$0xff]
    %v3908 = vld [vmem:[%s3905 + $0x10] sm:$0xff]
    %v3909 = vld [vmem:[%s3905 + $0x18] sm:$0xff]
    %v3910 = vld [vmem:[%s3905 + $0x20] sm:$0xff]
    %v3911 = vld [vmem:[%s3905 + $0x28] sm:$0xff]
    %v3912 = vld [vmem:[%s3905 + $0x30] sm:$0xff]
    %v3913 = vld [vmem:[%s3905 + $0x38] sm:$0xff]
    %v3914 = vld [vmem:[%s3905 + $0x40] sm:$0xff]
    %v3915 = vld [vmem:[%s3905 + $0x48] sm:$0xff]
    %v3916 = vld [vmem:[%s3905 + $0x50] sm:$0xff]
    %v3917 = vld [vmem:[%s3905 + $0x58] sm:$0xff]
    %v3918 = vld [vmem:[%s3905 + $0x60] sm:$0xff]
    %v3919 = vld [vmem:[%s3905 + $0x68] sm:$0xff]
    %v3920 = vld [vmem:[%s3905 + $0x70] sm:$0xff]
    %v3921 = vld [vmem:[%s3905 + $0x78] sm:$0xff]
    %v3922 = vld [vmem:[%s3905 + $0x80] sm:$0xff]
    %v3923 = vld [vmem:[%s3905 + $0x88] sm:$0xff]
    %v3924 = vld [vmem:[%s3905 + $0x90] sm:$0xff]
    %v3925 = vld [vmem:[%s3905 + $0x98] sm:$0xff]
    %v3926 = vld [vmem:[%s3905 + $0xa0] sm:$0xff]
    %v3927 = vld [vmem:[%s3905 + $0xa8] sm:$0xff]
    %v3928 = vld [vmem:[%s3905 + $0xb0] sm:$0xff]
    %v3929 = vld [vmem:[%s3905 + $0xb8] sm:$0xff]
    %v3930 = vld [vmem:[%s3905 + $0xc0] sm:$0xff]
    %v3931 = vld [vmem:[%s3905 + $0xc8] sm:$0xff]
    %v3932 = vld [vmem:[%s3905 + $0xd0] sm:$0xff]
    %v3933 = vld [vmem:[%s3905 + $0xd8] sm:$0xff]
    %v3934 = vld [vmem:[%s3905 + $0xe0] sm:$0xff]
    %v3935 = vld [vmem:[%s3905 + $0xe8] sm:$0xff]
    %v3936 = vld [vmem:[%s3905 + $0xf0] sm:$0xff]
    %v3937 = vld [vmem:[%s3905 + $0xf8] sm:$0xff]
    %v3970 = vunpack.c.l.b16 %v3906
    %v3971 = vunpack.c.h.b16 %v3906
    %v3972 = vunpack.c.l.b16 %v3907
    %v3973 = vunpack.c.h.b16 %v3907
    %v3974 = vunpack.c.l.b16 %v3908
    %v3975 = vunpack.c.h.b16 %v3908
    %v3976 = vunpack.c.l.b16 %v3909
    %v3977 = vunpack.c.h.b16 %v3909
    %v3978 = vunpack.c.l.b16 %v3910
    %v3979 = vunpack.c.h.b16 %v3910
    %v3980 = vunpack.c.l.b16 %v3911
    %v3981 = vunpack.c.h.b16 %v3911
    %v3982 = vunpack.c.l.b16 %v3912
    %v3983 = vunpack.c.h.b16 %v3912
    %v3984 = vunpack.c.l.b16 %v3913
    %v3985 = vunpack.c.h.b16 %v3913
    %v3986 = vunpack.c.l.b16 %v3914
    %v3987 = vunpack.c.h.b16 %v3914
    %v3988 = vunpack.c.l.b16 %v3915
    %v3989 = vunpack.c.h.b16 %v3915
    %v3990 = vunpack.c.l.b16 %v3916
    %v3991 = vunpack.c.h.b16 %v3916
    %v3992 = vunpack.c.l.b16 %v3917
    %v3993 = vunpack.c.h.b16 %v3917
    %v3994 = vunpack.c.l.b16 %v3918
    %v3995 = vunpack.c.h.b16 %v3918
    %v3996 = vunpack.c.l.b16 %v3919
    %v3997 = vunpack.c.h.b16 %v3919
    %v3998 = vunpack.c.l.b16 %v3920
    %v3999 = vunpack.c.h.b16 %v3920
    %v4000 = vunpack.c.l.b16 %v3921
    %v4001 = vunpack.c.h.b16 %v3921
    %v4002 = vunpack.c.l.b16 %v3922
    %v4003 = vunpack.c.h.b16 %v3922
    %v4004 = vunpack.c.l.b16 %v3923
    %v4005 = vunpack.c.h.b16 %v3923
    %v4006 = vunpack.c.l.b16 %v3924
    %v4007 = vunpack.c.h.b16 %v3924
    %v4008 = vunpack.c.l.b16 %v3925
    %v4009 = vunpack.c.h.b16 %v3925
    %v4010 = vunpack.c.l.b16 %v3926
    %v4011 = vunpack.c.h.b16 %v3926
    %v4012 = vunpack.c.l.b16 %v3927
    %v4013 = vunpack.c.h.b16 %v3927
    %v4014 = vunpack.c.l.b16 %v3928
    %v4015 = vunpack.c.h.b16 %v3928
    %v4016 = vunpack.c.l.b16 %v3929
    %v4017 = vunpack.c.h.b16 %v3929
    %v4018 = vunpack.c.l.b16 %v3930
    %v4019 = vunpack.c.h.b16 %v3930
    %v4020 = vunpack.c.l.b16 %v3931
    %v4021 = vunpack.c.h.b16 %v3931
    %v4022 = vunpack.c.l.b16 %v3932
    %v4023 = vunpack.c.h.b16 %v3932
    %v4024 = vunpack.c.l.b16 %v3933
    %v4025 = vunpack.c.h.b16 %v3933
    %v4026 = vunpack.c.l.b16 %v3934
    %v4027 = vunpack.c.h.b16 %v3934
    %v4028 = vunpack.c.l.b16 %v3935
    %v4029 = vunpack.c.h.b16 %v3935
    %v4030 = vunpack.c.l.b16 %v3936
    %v4031 = vunpack.c.h.b16 %v3936
    %v4032 = vunpack.c.l.b16 %v3937
    %v4033 = vunpack.c.h.b16 %v3937
    %v4034 = vpack.c.b16 %v3972, %v3970
    %v4035 = vpack.c.b16 %v3973, %v3971
    %v4036 = vpack.c.b16 %v3976, %v3974
    %v4037 = vpack.c.b16 %v3977, %v3975
    %v4038 = vpack.c.b16 %v3980, %v3978
    %v4039 = vpack.c.b16 %v3981, %v3979
    %v4040 = vpack.c.b16 %v3984, %v3982
    %v4041 = vpack.c.b16 %v3985, %v3983
    %v4042 = vpack.c.b16 %v3988, %v3986
    %v4043 = vpack.c.b16 %v3989, %v3987
    %v4044 = vpack.c.b16 %v3992, %v3990
    %v4045 = vpack.c.b16 %v3993, %v3991
    %v4046 = vpack.c.b16 %v3996, %v3994
    %v4047 = vpack.c.b16 %v3997, %v3995
    %v4048 = vpack.c.b16 %v4000, %v3998
    %v4049 = vpack.c.b16 %v4001, %v3999
    %v4050 = vpack.c.b16 %v4004, %v4002
    %v4051 = vpack.c.b16 %v4005, %v4003
    %v4052 = vpack.c.b16 %v4008, %v4006
    %v4053 = vpack.c.b16 %v4009, %v4007
    %v4054 = vpack.c.b16 %v4012, %v4010
    %v4055 = vpack.c.b16 %v4013, %v4011
    %v4056 = vpack.c.b16 %v4016, %v4014
    %v4057 = vpack.c.b16 %v4017, %v4015
    %v4058 = vpack.c.b16 %v4020, %v4018
    %v4059 = vpack.c.b16 %v4021, %v4019
    %v4060 = vpack.c.b16 %v4024, %v4022
    %v4061 = vpack.c.b16 %v4025, %v4023
    %v4062 = vpack.c.b16 %v4028, %v4026
    %v4063 = vpack.c.b16 %v4029, %v4027
    %v4064 = vpack.c.b16 %v4032, %v4030
    %v4065 = vpack.c.b16 %v4033, %v4031
    %4098 = vmatprep.subr.bf16.mxu0 %v4035
    %4099 = vmatpush1.bf16.msra.mxu0 %v4034
    %4100 = vmatprep.subr.bf16.mxu0 %v4037
    %4101 = vmatpush1.bf16.msra.mxu0 %v4036
    %4102 = vmatprep.subr.bf16.mxu0 %v4039
    %4103 = vmatpush1.bf16.msra.mxu0 %v4038
    %4104 = vmatprep.subr.bf16.mxu0 %v4041
    %4105 = vmatpush1.bf16.msra.mxu0 %v4040
    %4106 = vmatprep.subr.bf16.mxu0 %v4043
    %4107 = vmatpush1.bf16.msra.mxu0 %v4042
    %4108 = vmatprep.subr.bf16.mxu0 %v4045
    %4109 = vmatpush1.bf16.msra.mxu0 %v4044
    %4110 = vmatprep.subr.bf16.mxu0 %v4047
    %4111 = vmatpush1.bf16.msra.mxu0 %v4046
    %4112 = vmatprep.subr.bf16.mxu0 %v4049
    %4113 = vmatpush1.bf16.msra.mxu0 %v4048
    %4114 = vmatprep.subr.bf16.mxu0 %v4051
    %4115 = vmatpush1.bf16.msra.mxu0 %v4050
    %4116 = vmatprep.subr.bf16.mxu0 %v4053
    %4117 = vmatpush1.bf16.msra.mxu0 %v4052
    %4118 = vmatprep.subr.bf16.mxu0 %v4055
    %4119 = vmatpush1.bf16.msra.mxu0 %v4054
    %4120 = vmatprep.subr.bf16.mxu0 %v4057
    %4121 = vmatpush1.bf16.msra.mxu0 %v4056
    %4122 = vmatprep.subr.bf16.mxu0 %v4059
    %4123 = vmatpush1.bf16.msra.mxu0 %v4058
    %4124 = vmatprep.subr.bf16.mxu0 %v4061
    %4125 = vmatpush1.bf16.msra.mxu0 %v4060
    %4126 = vmatprep.subr.bf16.mxu0 %v4063
    %4127 = vmatpush1.bf16.msra.mxu0 %v4062
    %4128 = vmatprep.subr.bf16.mxu0 %v4065
    %4129 = vmatpush1.bf16.msra.mxu0 %v4064
    %4130 = vmatprep.mubr.bf16.mxu0 %v3140
    %4131 = vmatmul.mubr.bf16.gmra.mrb[0].mxu0 %v3139
    %v4132 = vpop.f32.mrb[0].mxu0
    %v4133 = vadd.f32 0.0, %v4132
    %v4134 = vpop.f32.mrb[0].mxu0
    %v4135 = vadd.f32 0.0, %v4134
    %v4136 = vpop.f32.mrb[0].mxu0
    %v4137 = vadd.f32 0.0, %v4136
    %v4138 = vpop.f32.mrb[0].mxu0
    %v4139 = vadd.f32 0.0, %v4138
    %4140 = vmatprep.mubr.bf16.mxu0 %v3650
    %4141 = vmatmul.mubr.bf16.gmra.mrb[0].mxu0 %v3649
    %v4142 = vpop.f32.mrb[0].mxu0
    %v4143 = vadd.f32 0.0, %v4142
    %v4144 = vpop.f32.mrb[0].mxu0
    %v4145 = vadd.f32 0.0, %v4144
    %v4146 = vpop.f32.mrb[0].mxu0
    %v4147 = vadd.f32 0.0, %v4146
    %v4148 = vpop.f32.mrb[0].mxu0
    %v4149 = vadd.f32 0.0, %v4148
    %4150 = vdwg.mxu0
    %v4151 = vadd.f32 %v3641, %v4133
    %v4152 = vadd.f32 %v3642, %v4135
    %v4153 = vadd.f32 %v3643, %v4137
    %v4154 = vadd.f32 %v3644, %v4139
    %v4155 = vadd.f32 %v3645, %v4143
    %v4156 = vadd.f32 %v3646, %v4145
    %v4157 = vadd.f32 %v3647, %v4147
    %v4158 = vadd.f32 %v3648, %v4149
    %v4159 = vpack.c.bf16 %v2142, %v2136
    %v4160 = vpack.c.bf16 %v2145, %v2139
    %s4161 = scalar_lea.vmem %s3, 2048
    %v4162 = vld [vmem:[%s4161] sm:$0xff]
    %v4163 = vld [vmem:[%s4161 + $0x8] sm:$0xff]
    %v4164 = vld [vmem:[%s4161 + $0x10] sm:$0xff]
    %v4165 = vld [vmem:[%s4161 + $0x18] sm:$0xff]
    %v4166 = vld [vmem:[%s4161 + $0x20] sm:$0xff]
    %v4167 = vld [vmem:[%s4161 + $0x28] sm:$0xff]
    %v4168 = vld [vmem:[%s4161 + $0x30] sm:$0xff]
    %v4169 = vld [vmem:[%s4161 + $0x38] sm:$0xff]
    %v4170 = vld [vmem:[%s4161 + $0x40] sm:$0xff]
    %v4171 = vld [vmem:[%s4161 + $0x48] sm:$0xff]
    %v4172 = vld [vmem:[%s4161 + $0x50] sm:$0xff]
    %v4173 = vld [vmem:[%s4161 + $0x58] sm:$0xff]
    %v4174 = vld [vmem:[%s4161 + $0x60] sm:$0xff]
    %v4175 = vld [vmem:[%s4161 + $0x68] sm:$0xff]
    %v4176 = vld [vmem:[%s4161 + $0x70] sm:$0xff]
    %v4177 = vld [vmem:[%s4161 + $0x78] sm:$0xff]
    %v4178 = vld [vmem:[%s4161 + $0x80] sm:$0xff]
    %v4179 = vld [vmem:[%s4161 + $0x88] sm:$0xff]
    %v4180 = vld [vmem:[%s4161 + $0x90] sm:$0xff]
    %v4181 = vld [vmem:[%s4161 + $0x98] sm:$0xff]
    %v4182 = vld [vmem:[%s4161 + $0xa0] sm:$0xff]
    %v4183 = vld [vmem:[%s4161 + $0xa8] sm:$0xff]
    %v4184 = vld [vmem:[%s4161 + $0xb0] sm:$0xff]
    %v4185 = vld [vmem:[%s4161 + $0xb8] sm:$0xff]
    %v4186 = vld [vmem:[%s4161 + $0xc0] sm:$0xff]
    %v4187 = vld [vmem:[%s4161 + $0xc8] sm:$0xff]
    %v4188 = vld [vmem:[%s4161 + $0xd0] sm:$0xff]
    %v4189 = vld [vmem:[%s4161 + $0xd8] sm:$0xff]
    %v4190 = vld [vmem:[%s4161 + $0xe0] sm:$0xff]
    %v4191 = vld [vmem:[%s4161 + $0xe8] sm:$0xff]
    %v4192 = vld [vmem:[%s4161 + $0xf0] sm:$0xff]
    %v4193 = vld [vmem:[%s4161 + $0xf8] sm:$0xff]
    %v4226 = vunpack.c.l.b16 %v4162
    %v4227 = vunpack.c.h.b16 %v4162
    %v4228 = vunpack.c.l.b16 %v4163
    %v4229 = vunpack.c.h.b16 %v4163
    %v4230 = vunpack.c.l.b16 %v4164
    %v4231 = vunpack.c.h.b16 %v4164
    %v4232 = vunpack.c.l.b16 %v4165
    %v4233 = vunpack.c.h.b16 %v4165
    %v4234 = vunpack.c.l.b16 %v4166
    %v4235 = vunpack.c.h.b16 %v4166
    %v4236 = vunpack.c.l.b16 %v4167
    %v4237 = vunpack.c.h.b16 %v4167
    %v4238 = vunpack.c.l.b16 %v4168
    %v4239 = vunpack.c.h.b16 %v4168
    %v4240 = vunpack.c.l.b16 %v4169
    %v4241 = vunpack.c.h.b16 %v4169
    %v4242 = vunpack.c.l.b16 %v4170
    %v4243 = vunpack.c.h.b16 %v4170
    %v4244 = vunpack.c.l.b16 %v4171
    %v4245 = vunpack.c.h.b16 %v4171
    %v4246 = vunpack.c.l.b16 %v4172
    %v4247 = vunpack.c.h.b16 %v4172
    %v4248 = vunpack.c.l.b16 %v4173
    %v4249 = vunpack.c.h.b16 %v4173
    %v4250 = vunpack.c.l.b16 %v4174
    %v4251 = vunpack.c.h.b16 %v4174
    %v4252 = vunpack.c.l.b16 %v4175
    %v4253 = vunpack.c.h.b16 %v4175
    %v4254 = vunpack.c.l.b16 %v4176
    %v4255 = vunpack.c.h.b16 %v4176
    %v4256 = vunpack.c.l.b16 %v4177
    %v4257 = vunpack.c.h.b16 %v4177
    %v4258 = vunpack.c.l.b16 %v4178
    %v4259 = vunpack.c.h.b16 %v4178
    %v4260 = vunpack.c.l.b16 %v4179
    %v4261 = vunpack.c.h.b16 %v4179
    %v4262 = vunpack.c.l.b16 %v4180
    %v4263 = vunpack.c.h.b16 %v4180
    %v4264 = vunpack.c.l.b16 %v4181
    %v4265 = vunpack.c.h.b16 %v4181
    %v4266 = vunpack.c.l.b16 %v4182
    %v4267 = vunpack.c.h.b16 %v4182
    %v4268 = vunpack.c.l.b16 %v4183
    %v4269 = vunpack.c.h.b16 %v4183
    %v4270 = vunpack.c.l.b16 %v4184
    %v4271 = vunpack.c.h.b16 %v4184
    %v4272 = vunpack.c.l.b16 %v4185
    %v4273 = vunpack.c.h.b16 %v4185
    %v4274 = vunpack.c.l.b16 %v4186
    %v4275 = vunpack.c.h.b16 %v4186
    %v4276 = vunpack.c.l.b16 %v4187
    %v4277 = vunpack.c.h.b16 %v4187
    %v4278 = vunpack.c.l.b16 %v4188
    %v4279 = vunpack.c.h.b16 %v4188
    %v4280 = vunpack.c.l.b16 %v4189
    %v4281 = vunpack.c.h.b16 %v4189
    %v4282 = vunpack.c.l.b16 %v4190
    %v4283 = vunpack.c.h.b16 %v4190
    %v4284 = vunpack.c.l.b16 %v4191
    %v4285 = vunpack.c.h.b16 %v4191
    %v4286 = vunpack.c.l.b16 %v4192
    %v4287 = vunpack.c.h.b16 %v4192
    %v4288 = vunpack.c.l.b16 %v4193
    %v4289 = vunpack.c.h.b16 %v4193
    %v4290 = vpack.c.b16 %v4228, %v4226
    %v4291 = vpack.c.b16 %v4229, %v4227
    %v4292 = vpack.c.b16 %v4232, %v4230
    %v4293 = vpack.c.b16 %v4233, %v4231
    %v4294 = vpack.c.b16 %v4236, %v4234
    %v4295 = vpack.c.b16 %v4237, %v4235
    %v4296 = vpack.c.b16 %v4240, %v4238
    %v4297 = vpack.c.b16 %v4241, %v4239
    %v4298 = vpack.c.b16 %v4244, %v4242
    %v4299 = vpack.c.b16 %v4245, %v4243
    %v4300 = vpack.c.b16 %v4248, %v4246
    %v4301 = vpack.c.b16 %v4249, %v4247
    %v4302 = vpack.c.b16 %v4252, %v4250
    %v4303 = vpack.c.b16 %v4253, %v4251
    %v4304 = vpack.c.b16 %v4256, %v4254
    %v4305 = vpack.c.b16 %v4257, %v4255
    %v4306 = vpack.c.b16 %v4260, %v4258
    %v4307 = vpack.c.b16 %v4261, %v4259
    %v4308 = vpack.c.b16 %v4264, %v4262
    %v4309 = vpack.c.b16 %v4265, %v4263
    %v4310 = vpack.c.b16 %v4268, %v4266
    %v4311 = vpack.c.b16 %v4269, %v4267
    %v4312 = vpack.c.b16 %v4272, %v4270
    %v4313 = vpack.c.b16 %v4273, %v4271
    %v4314 = vpack.c.b16 %v4276, %v4274
    %v4315 = vpack.c.b16 %v4277, %v4275
    %v4316 = vpack.c.b16 %v4280, %v4278
    %v4317 = vpack.c.b16 %v4281, %v4279
    %v4318 = vpack.c.b16 %v4284, %v4282
    %v4319 = vpack.c.b16 %v4285, %v4283
    %v4320 = vpack.c.b16 %v4288, %v4286
    %v4321 = vpack.c.b16 %v4289, %v4287
    %4354 = vmatprep.subr.bf16.mxu0 %v4291
    %4355 = vmatpush1.bf16.msra.mxu0 %v4290
    %4356 = vmatprep.subr.bf16.mxu0 %v4293
    %4357 = vmatpush1.bf16.msra.mxu0 %v4292
    %4358 = vmatprep.subr.bf16.mxu0 %v4295
    %4359 = vmatpush1.bf16.msra.mxu0 %v4294
    %4360 = vmatprep.subr.bf16.mxu0 %v4297
    %4361 = vmatpush1.bf16.msra.mxu0 %v4296
    %4362 = vmatprep.subr.bf16.mxu0 %v4299
    %4363 = vmatpush1.bf16.msra.mxu0 %v4298
    %4364 = vmatprep.subr.bf16.mxu0 %v4301
    %4365 = vmatpush1.bf16.msra.mxu0 %v4300
    %4366 = vmatprep.subr.bf16.mxu0 %v4303
    %4367 = vmatpush1.bf16.msra.mxu0 %v4302
    %4368 = vmatprep.subr.bf16.mxu0 %v4305
    %4369 = vmatpush1.bf16.msra.mxu0 %v4304
    %4370 = vmatprep.subr.bf16.mxu0 %v4307
    %4371 = vmatpush1.bf16.msra.mxu0 %v4306
    %4372 = vmatprep.subr.bf16.mxu0 %v4309
    %4373 = vmatpush1.bf16.msra.mxu0 %v4308
    %4374 = vmatprep.subr.bf16.mxu0 %v4311
    %4375 = vmatpush1.bf16.msra.mxu0 %v4310
    %4376 = vmatprep.subr.bf16.mxu0 %v4313
    %4377 = vmatpush1.bf16.msra.mxu0 %v4312
    %4378 = vmatprep.subr.bf16.mxu0 %v4315
    %4379 = vmatpush1.bf16.msra.mxu0 %v4314
    %4380 = vmatprep.subr.bf16.mxu0 %v4317
    %4381 = vmatpush1.bf16.msra.mxu0 %v4316
    %4382 = vmatprep.subr.bf16.mxu0 %v4319
    %4383 = vmatpush1.bf16.msra.mxu0 %v4318
    %4384 = vmatprep.subr.bf16.mxu0 %v4321
    %4385 = vmatpush1.bf16.msra.mxu0 %v4320
    %4386 = vmatprep.mubr.bf16.mxu0 %v3650
    %4387 = vmatmul.mubr.bf16.gmra.mrb[0].mxu0 %v3649
    %v4388 = vpop.f32.mrb[0].mxu0
    %v4389 = vadd.f32 0.0, %v4388
    %v4390 = vpop.f32.mrb[0].mxu0
    %v4391 = vadd.f32 0.0, %v4390
    %v4392 = vpop.f32.mrb[0].mxu0
    %v4393 = vadd.f32 0.0, %v4392
    %v4394 = vpop.f32.mrb[0].mxu0
    %v4395 = vadd.f32 0.0, %v4394
    %4396 = vmatprep.mubr.bf16.mxu0 %v4160
    %4397 = vmatmul.mubr.bf16.gmra.mrb[0].mxu0 %v4159
    %v4398 = vpop.f32.mrb[0].mxu0
    %v4399 = vadd.f32 0.0, %v4398
    %v4400 = vpop.f32.mrb[0].mxu0
    %v4401 = vadd.f32 0.0, %v4400
    %v4402 = vpop.f32.mrb[0].mxu0
    %v4403 = vadd.f32 0.0, %v4402
    %v4404 = vpop.f32.mrb[0].mxu0
    %v4405 = vadd.f32 0.0, %v4404
    %4406 = vdwg.mxu0
    %v4407 = vadd.f32 %v3897, %v4389
    %v4408 = vadd.f32 %v3898, %v4391
    %v4409 = vadd.f32 %v3899, %v4393
    %v4410 = vadd.f32 %v3900, %v4395
    %v4411 = vadd.f32 %v3901, %v4399
    %v4412 = vadd.f32 %v3902, %v4401
    %v4413 = vadd.f32 %v3903, %v4403
    %v4414 = vadd.f32 %v3904, %v4405
    %s4415 = scalar_lea.vmem %s3, 2304
    %v4416 = vld [vmem:[%s4415] sm:$0xff]
    %v4417 = vld [vmem:[%s4415 + $0x8] sm:$0xff]
    %v4418 = vld [vmem:[%s4415 + $0x10] sm:$0xff]
    %v4419 = vld [vmem:[%s4415 + $0x18] sm:$0xff]
    %v4420 = vld [vmem:[%s4415 + $0x20] sm:$0xff]
    %v4421 = vld [vmem:[%s4415 + $0x28] sm:$0xff]
    %v4422 = vld [vmem:[%s4415 + $0x30] sm:$0xff]
    %v4423 = vld [vmem:[%s4415 + $0x38] sm:$0xff]
    %v4424 = vld [vmem:[%s4415 + $0x40] sm:$0xff]
    %v4425 = vld [vmem:[%s4415 + $0x48] sm:$0xff]
    %v4426 = vld [vmem:[%s4415 + $0x50] sm:$0xff]
    %v4427 = vld [vmem:[%s4415 + $0x58] sm:$0xff]
    %v4428 = vld [vmem:[%s4415 + $0x60] sm:$0xff]
    %v4429 = vld [vmem:[%s4415 + $0x68] sm:$0xff]
    %v4430 = vld [vmem:[%s4415 + $0x70] sm:$0xff]
    %v4431 = vld [vmem:[%s4415 + $0x78] sm:$0xff]
    %v4432 = vld [vmem:[%s4415 + $0x80] sm:$0xff]
    %v4433 = vld [vmem:[%s4415 + $0x88] sm:$0xff]
    %v4434 = vld [vmem:[%s4415 + $0x90] sm:$0xff]
    %v4435 = vld [vmem:[%s4415 + $0x98] sm:$0xff]
    %v4436 = vld [vmem:[%s4415 + $0xa0] sm:$0xff]
    %v4437 = vld [vmem:[%s4415 + $0xa8] sm:$0xff]
    %v4438 = vld [vmem:[%s4415 + $0xb0] sm:$0xff]
    %v4439 = vld [vmem:[%s4415 + $0xb8] sm:$0xff]
    %v4440 = vld [vmem:[%s4415 + $0xc0] sm:$0xff]
    %v4441 = vld [vmem:[%s4415 + $0xc8] sm:$0xff]
    %v4442 = vld [vmem:[%s4415 + $0xd0] sm:$0xff]
    %v4443 = vld [vmem:[%s4415 + $0xd8] sm:$0xff]
    %v4444 = vld [vmem:[%s4415 + $0xe0] sm:$0xff]
    %v4445 = vld [vmem:[%s4415 + $0xe8] sm:$0xff]
    %v4446 = vld [vmem:[%s4415 + $0xf0] sm:$0xff]
    %v4447 = vld [vmem:[%s4415 + $0xf8] sm:$0xff]
    %v4480 = vunpack.c.l.b16 %v4416
    %v4481 = vunpack.c.h.b16 %v4416
    %v4482 = vunpack.c.l.b16 %v4417
    %v4483 = vunpack.c.h.b16 %v4417
    %v4484 = vunpack.c.l.b16 %v4418
    %v4485 = vunpack.c.h.b16 %v4418
    %v4486 = vunpack.c.l.b16 %v4419
    %v4487 = vunpack.c.h.b16 %v4419
    %v4488 = vunpack.c.l.b16 %v4420
    %v4489 = vunpack.c.h.b16 %v4420
    %v4490 = vunpack.c.l.b16 %v4421
    %v4491 = vunpack.c.h.b16 %v4421
    %v4492 = vunpack.c.l.b16 %v4422
    %v4493 = vunpack.c.h.b16 %v4422
    %v4494 = vunpack.c.l.b16 %v4423
    %v4495 = vunpack.c.h.b16 %v4423
    %v4496 = vunpack.c.l.b16 %v4424
    %v4497 = vunpack.c.h.b16 %v4424
    %v4498 = vunpack.c.l.b16 %v4425
    %v4499 = vunpack.c.h.b16 %v4425
    %v4500 = vunpack.c.l.b16 %v4426
    %v4501 = vunpack.c.h.b16 %v4426
    %v4502 = vunpack.c.l.b16 %v4427
    %v4503 = vunpack.c.h.b16 %v4427
    %v4504 = vunpack.c.l.b16 %v4428
    %v4505 = vunpack.c.h.b16 %v4428
    %v4506 = vunpack.c.l.b16 %v4429
    %v4507 = vunpack.c.h.b16 %v4429
    %v4508 = vunpack.c.l.b16 %v4430
    %v4509 = vunpack.c.h.b16 %v4430
    %v4510 = vunpack.c.l.b16 %v4431
    %v4511 = vunpack.c.h.b16 %v4431
    %v4512 = vunpack.c.l.b16 %v4432
    %v4513 = vunpack.c.h.b16 %v4432
    %v4514 = vunpack.c.l.b16 %v4433
    %v4515 = vunpack.c.h.b16 %v4433
    %v4516 = vunpack.c.l.b16 %v4434
    %v4517 = vunpack.c.h.b16 %v4434
    %v4518 = vunpack.c.l.b16 %v4435
    %v4519 = vunpack.c.h.b16 %v4435
    %v4520 = vunpack.c.l.b16 %v4436
    %v4521 = vunpack.c.h.b16 %v4436
    %v4522 = vunpack.c.l.b16 %v4437
    %v4523 = vunpack.c.h.b16 %v4437
    %v4524 = vunpack.c.l.b16 %v4438
    %v4525 = vunpack.c.h.b16 %v4438
    %v4526 = vunpack.c.l.b16 %v4439
    %v4527 = vunpack.c.h.b16 %v4439
    %v4528 = vunpack.c.l.b16 %v4440
    %v4529 = vunpack.c.h.b16 %v4440
    %v4530 = vunpack.c.l.b16 %v4441
    %v4531 = vunpack.c.h.b16 %v4441
    %v4532 = vunpack.c.l.b16 %v4442
    %v4533 = vunpack.c.h.b16 %v4442
    %v4534 = vunpack.c.l.b16 %v4443
    %v4535 = vunpack.c.h.b16 %v4443
    %v4536 = vunpack.c.l.b16 %v4444
    %v4537 = vunpack.c.h.b16 %v4444
    %v4538 = vunpack.c.l.b16 %v4445
    %v4539 = vunpack.c.h.b16 %v4445
    %v4540 = vunpack.c.l.b16 %v4446
    %v4541 = vunpack.c.h.b16 %v4446
    %v4542 = vunpack.c.l.b16 %v4447
    %v4543 = vunpack.c.h.b16 %v4447
    %v4544 = vpack.c.b16 %v4482, %v4480
    %v4545 = vpack.c.b16 %v4483, %v4481
    %v4546 = vpack.c.b16 %v4486, %v4484
    %v4547 = vpack.c.b16 %v4487, %v4485
    %v4548 = vpack.c.b16 %v4490, %v4488
    %v4549 = vpack.c.b16 %v4491, %v4489
    %v4550 = vpack.c.b16 %v4494, %v4492
    %v4551 = vpack.c.b16 %v4495, %v4493
    %v4552 = vpack.c.b16 %v4498, %v4496
    %v4553 = vpack.c.b16 %v4499, %v4497
    %v4554 = vpack.c.b16 %v4502, %v4500
    %v4555 = vpack.c.b16 %v4503, %v4501
    %v4556 = vpack.c.b16 %v4506, %v4504
    %v4557 = vpack.c.b16 %v4507, %v4505
    %v4558 = vpack.c.b16 %v4510, %v4508
    %v4559 = vpack.c.b16 %v4511, %v4509
    %v4560 = vpack.c.b16 %v4514, %v4512
    %v4561 = vpack.c.b16 %v4515, %v4513
    %v4562 = vpack.c.b16 %v4518, %v4516
    %v4563 = vpack.c.b16 %v4519, %v4517
    %v4564 = vpack.c.b16 %v4522, %v4520
    %v4565 = vpack.c.b16 %v4523, %v4521
    %v4566 = vpack.c.b16 %v4526, %v4524
    %v4567 = vpack.c.b16 %v4527, %v4525
    %v4568 = vpack.c.b16 %v4530, %v4528
    %v4569 = vpack.c.b16 %v4531, %v4529
    %v4570 = vpack.c.b16 %v4534, %v4532
    %v4571 = vpack.c.b16 %v4535, %v4533
    %v4572 = vpack.c.b16 %v4538, %v4536
    %v4573 = vpack.c.b16 %v4539, %v4537
    %v4574 = vpack.c.b16 %v4542, %v4540
    %v4575 = vpack.c.b16 %v4543, %v4541
    %4608 = vmatprep.subr.bf16.mxu0 %v4545
    %4609 = vmatpush1.bf16.msra.mxu0 %v4544
    %4610 = vmatprep.subr.bf16.mxu0 %v4547
    %4611 = vmatpush1.bf16.msra.mxu0 %v4546
    %4612 = vmatprep.subr.bf16.mxu0 %v4549
    %4613 = vmatpush1.bf16.msra.mxu0 %v4548
    %4614 = vmatprep.subr.bf16.mxu0 %v4551
    %4615 = vmatpush1.bf16.msra.mxu0 %v4550
    %4616 = vmatprep.subr.bf16.mxu0 %v4553
    %4617 = vmatpush1.bf16.msra.mxu0 %v4552
    %4618 = vmatprep.subr.bf16.mxu0 %v4555
    %4619 = vmatpush1.bf16.msra.mxu0 %v4554
    %4620 = vmatprep.subr.bf16.mxu0 %v4557
    %4621 = vmatpush1.bf16.msra.mxu0 %v4556
    %4622 = vmatprep.subr.bf16.mxu0 %v4559
    %4623 = vmatpush1.bf16.msra.mxu0 %v4558
    %4624 = vmatprep.subr.bf16.mxu0 %v4561
    %4625 = vmatpush1.bf16.msra.mxu0 %v4560
    %4626 = vmatprep.subr.bf16.mxu0 %v4563
    %4627 = vmatpush1.bf16.msra.mxu0 %v4562
    %4628 = vmatprep.subr.bf16.mxu0 %v4565
    %4629 = vmatpush1.bf16.msra.mxu0 %v4564
    %4630 = vmatprep.subr.bf16.mxu0 %v4567
    %4631 = vmatpush1.bf16.msra.mxu0 %v4566
    %4632 = vmatprep.subr.bf16.mxu0 %v4569
    %4633 = vmatpush1.bf16.msra.mxu0 %v4568
    %4634 = vmatprep.subr.bf16.mxu0 %v4571
    %4635 = vmatpush1.bf16.msra.mxu0 %v4570
    %4636 = vmatprep.subr.bf16.mxu0 %v4573
    %4637 = vmatpush1.bf16.msra.mxu0 %v4572
    %4638 = vmatprep.subr.bf16.mxu0 %v4575
    %4639 = vmatpush1.bf16.msra.mxu0 %v4574
    %4640 = vmatprep.mubr.bf16.mxu0 %v3650
    %4641 = vmatmul.mubr.bf16.gmra.mrb[0].mxu0 %v3649
    %v4642 = vpop.f32.mrb[0].mxu0
    %v4643 = vadd.f32 0.0, %v4642
    %v4644 = vpop.f32.mrb[0].mxu0
    %v4645 = vadd.f32 0.0, %v4644
    %v4646 = vpop.f32.mrb[0].mxu0
    %v4647 = vadd.f32 0.0, %v4646
    %v4648 = vpop.f32.mrb[0].mxu0
    %v4649 = vadd.f32 0.0, %v4648
    %4650 = vmatprep.mubr.bf16.mxu0 %v4160
    %4651 = vmatmul.mubr.bf16.gmra.mrb[0].mxu0 %v4159
    %v4652 = vpop.f32.mrb[0].mxu0
    %v4653 = vadd.f32 0.0, %v4652
    %v4654 = vpop.f32.mrb[0].mxu0
    %v4655 = vadd.f32 0.0, %v4654
    %v4656 = vpop.f32.mrb[0].mxu0
    %v4657 = vadd.f32 0.0, %v4656
    %v4658 = vpop.f32.mrb[0].mxu0
    %v4659 = vadd.f32 0.0, %v4658
    %4660 = vdwg.mxu0
    %v4661 = vadd.f32 %v4151, %v4643
    %v4662 = vadd.f32 %v4152, %v4645
    %v4663 = vadd.f32 %v4153, %v4647
    %v4664 = vadd.f32 %v4154, %v4649
    %v4665 = vadd.f32 %v4155, %v4653
    %v4666 = vadd.f32 %v4156, %v4655
    %v4667 = vadd.f32 %v4157, %v4657
    %v4668 = vadd.f32 %v4158, %v4659
    %v4669 = vmax.f32 %v4407, %v4411
    %v4670 = vmax.f32 %v4408, %v4412
    %v4671 = vmax.f32 %v4409, %v4413
    %v4672 = vmax.f32 %v4410, %v4414
    %v4673 = vmax.f32 %v4661, %v4665
    %v4674 = vmax.f32 %v4662, %v4666
    %v4675 = vmax.f32 %v4663, %v4667
    %v4676 = vmax.f32 %v4664, %v4668
    %v4677 = vmax.f32 %v4669, %v4673
    %v4678 = vmax.f32 %v4670, %v4674
    %v4679 = vmax.f32 %v4671, %v4675
    %v4680 = vmax.f32 %v4672, %v4676
    %v4681 = vld [vmem:[%s4] sm:$0x3]
    %v4683 = vlaneseq
    %v4684 = vshrl.u32 %v4683, 7
    %v4685 = vsub.s32 0, %v4684
    %v4686 = vrot.slane %v4681, %v4685
    %v4687 = vlaneseq
    %v4688 = vshrl.u32 %v4687, 7
    %v4689 = vsub.s32 1, %v4688
    %v4690 = vrot.slane %v4681, %v4689
    %v4693 = vadd.f32 %v4677, %v4686
    %v4694 = vadd.f32 %v4678, %v4690
    %v4695 = vadd.f32 %v4679, %v4686
    %v4696 = vadd.f32 %v4680, %v4690
    %v4697 = vmax.f32 %v4693, 0.0
    %v4698 = vmax.f32 %v4694, 0.0
    %v4699 = vmax.f32 %v4695, 0.0
    %v4700 = vmax.f32 %v4696, 0.0
    %v4705 = vcombine.low %v4697, %v4698
    %v4707 = vunpack.c.l.s4 1983009808
    %v4708 = vunpack.c.0.s8 %v4707
    %v4709 = vlaneseq
    %v4710 = vshrl.u32 %v4709, 7
    %v4711 = vsub.s32 %v4708, %v4710
    %v4712 = vrot.slane %v4705, %v4711
    %v4713 = vcombine.low %v4699, %v4700
    %v4715 = vunpack.c.l.s4 1983009808
    %v4716 = vunpack.c.0.s8 %v4715
    %v4717 = vlaneseq
    %v4718 = vshrl.u32 %v4717, 7
    %v4719 = vsub.s32 %v4716, %v4718
    %v4720 = vrot.slane %v4713, %v4719
    %vm4721 = vcmask 1044484
    %v4722 = vsel %vm4721, %v4712, %v4712
    %vm4723 = vcmask 1046534
    %v4724 = vsel %vm4723, %v4712, %v4722
    %v4725 = vrot.slane %v4720, 7
    %vm4726 = vcmask 1041409
    %v4727 = vsel %vm4726, %v4725, %v4724
    %vm4728 = vcmask 1043459
    %v4729 = vsel %vm4728, %v4725, %v4727
    %vm4730 = vcmask 1045509
    %v4731 = vsel %vm4730, %v4725, %v4729
    %vm4732 = vcmask 1047559
    %v4733 = vsel %vm4732, %v4725, %v4731
    %4735 = vst [vmem:[#allocation3] sm:$0xf] %v4733
    %v4736 = vrot.slane %v4712, 1
    %v4737 = vsel %vm4721, %v4736, %v4736
    %v4738 = vsel %vm4723, %v4736, %v4737
    %v4739 = vsel %vm4726, %v4720, %v4738
    %v4740 = vsel %vm4728, %v4720, %v4739
    %v4741 = vsel %vm4730, %v4720, %v4740
    %v4742 = vsel %vm4732, %v4720, %v4741
    %4744 = vst [vmem:[#allocation3 + $0x4] sm:$0xf] %v4742
    %v4745 = vcombine.high %v4712, %v4712
    %v4746 = vcombine.high %v4720, %v4720
    %v4747 = vsel %vm4721, %v4745, %v4745
    %v4748 = vsel %vm4723, %v4745, %v4747
    %v4749 = vrot.slane %v4746, 7
    %v4750 = vsel %vm4726, %v4749, %v4748
    %v4751 = vsel %vm4728, %v4749, %v4750
    %v4752 = vsel %vm4730, %v4749, %v4751
    %v4753 = vsel %vm4732, %v4749, %v4752
    %4755 = vst [vmem:[#allocation3 + $0x8] sm:$0xf] %v4753
    %v4756 = vrot.slane %v4745, 1
    %v4757 = vsel %vm4721, %v4756, %v4756
    %v4758 = vsel %vm4723, %v4756, %v4757
    %v4759 = vsel %vm4726, %v4746, %v4758
    %v4760 = vsel %vm4728, %v4746, %v4759
    %v4761 = vsel %vm4730, %v4746, %v4760
    %v4762 = vsel %vm4732, %v4746, %v4761
    %4764 = vst [vmem:[#allocation3 + $0xc] sm:$0xf] %v4762
    %v4765 = vcombine.high %v4697, %v4698
    %v4767 = vunpack.c.l.s4 1983009808
    %v4768 = vunpack.c.0.s8 %v4767
    %v4769 = vlaneseq
    %v4770 = vshrl.u32 %v4769, 7
    %v4771 = vsub.s32 %v4768, %v4770
    %v4772 = vrot.slane %v4765, %v4771
    %v4773 = vcombine.high %v4699, %v4700
    %v4775 = vunpack.c.l.s4 1983009808
    %v4776 = vunpack.c.0.s8 %v4775
    %v4777 = vlaneseq
    %v4778 = vshrl.u32 %v4777, 7
    %v4779 = vsub.s32 %v4776, %v4778
    %v4780 = vrot.slane %v4773, %v4779
    %v4781 = vsel %vm4721, %v4772, %v4772
    %v4782 = vsel %vm4723, %v4772, %v4781
    %v4783 = vrot.slane %v4780, 7
    %v4784 = vsel %vm4726, %v4783, %v4782
    %v4785 = vsel %vm4728, %v4783, %v4784
    %v4786 = vsel %vm4730, %v4783, %v4785
    %v4787 = vsel %vm4732, %v4783, %v4786
    %4789 = vst [vmem:[#allocation3 + $0x10] sm:$0xf] %v4787
    %v4790 = vrot.slane %v4772, 1
    %v4791 = vsel %vm4721, %v4790, %v4790
    %v4792 = vsel %vm4723, %v4790, %v4791
    %v4793 = vsel %vm4726, %v4780, %v4792
    %v4794 = vsel %vm4728, %v4780, %v4793
    %v4795 = vsel %vm4730, %v4780, %v4794
    %v4796 = vsel %vm4732, %v4780, %v4795
    %4798 = vst [vmem:[#allocation3 + $0x14] sm:$0xf] %v4796
    %v4799 = vcombine.high %v4772, %v4772
    %v4800 = vcombine.high %v4780, %v4780
    %v4801 = vsel %vm4721, %v4799, %v4799
    %v4802 = vsel %vm4723, %v4799, %v4801
    %v4803 = vrot.slane %v4800, 7
    %v4804 = vsel %vm4726, %v4803, %v4802
    %v4805 = vsel %vm4728, %v4803, %v4804
    %v4806 = vsel %vm4730, %v4803, %v4805
    %v4807 = vsel %vm4732, %v4803, %v4806
    %4809 = vst [vmem:[#allocation3 + $0x18] sm:$0xf] %v4807
    %v4810 = vrot.slane %v4799, 1
    %v4811 = vsel %vm4721, %v4810, %v4810
    %v4812 = vsel %vm4723, %v4810, %v4811
    %v4813 = vsel %vm4726, %v4800, %v4812
    %v4814 = vsel %vm4728, %v4800, %v4813
    %v4815 = vsel %vm4730, %v4800, %v4814
    %v4816 = vsel %vm4732, %v4800, %v4815
    %4818 = vst [vmem:[#allocation3 + $0x1c] sm:$0xf] %v4816
    %v4819 = vld [vmem:[#allocation3] sm:$0xff]
    %v4820 = vld [vmem:[#allocation3 + $0x8] sm:$0xff]
    %v4821 = vld [vmem:[#allocation3 + $0x10] sm:$0xff]
    %v4822 = vld [vmem:[#allocation3 + $0x18] sm:$0xff]
    %v4827 = vcombine.high %v4819, %v4819
    %v4829 = vunpack.c.l.s4 1983009808
    %v4830 = vunpack.c.0.s8 %v4829
    %v4831 = vlaneseq
    %v4832 = vshrl.u32 %v4831, 7
    %v4833 = vsub.s32 %v4830, %v4832
    %v4834 = vrot.slane %v4819, %v4833
    %v4836 = vunpack.c.l.s4 1983009808
    %v4837 = vunpack.c.0.s8 %v4836
    %v4838 = vlaneseq
    %v4839 = vshrl.u32 %v4838, 7
    %v4840 = vsub.s32 %v4837, %v4839
    %v4841 = vrot.slane %v4827, %v4840
    %v4842 = vcombine.high %v4834, %v4834
    %v4843 = vcombine.high %v4841, %v4841
    %v4844 = vcombine.high %v4820, %v4820
    %v4846 = vunpack.c.l.s4 1983009808
    %v4847 = vunpack.c.0.s8 %v4846
    %v4848 = vlaneseq
    %v4849 = vshrl.u32 %v4848, 7
    %v4850 = vsub.s32 %v4847, %v4849
    %v4851 = vrot.slane %v4820, %v4850
    %v4853 = vunpack.c.l.s4 1983009808
    %v4854 = vunpack.c.0.s8 %v4853
    %v4855 = vlaneseq
    %v4856 = vshrl.u32 %v4855, 7
    %v4857 = vsub.s32 %v4854, %v4856
    %v4858 = vrot.slane %v4844, %v4857
    %v4859 = vcombine.high %v4851, %v4851
    %v4860 = vcombine.high %v4858, %v4858
    %v4861 = vcombine.high %v4821, %v4821
    %v4863 = vunpack.c.l.s4 1983009808
    %v4864 = vunpack.c.0.s8 %v4863
    %v4865 = vlaneseq
    %v4866 = vshrl.u32 %v4865, 7
    %v4867 = vsub.s32 %v4864, %v4866
    %v4868 = vrot.slane %v4821, %v4867
    %v4870 = vunpack.c.l.s4 1983009808
    %v4871 = vunpack.c.0.s8 %v4870
    %v4872 = vlaneseq
    %v4873 = vshrl.u32 %v4872, 7
    %v4874 = vsub.s32 %v4871, %v4873
    %v4875 = vrot.slane %v4861, %v4874
    %v4876 = vcombine.high %v4868, %v4868
    %v4877 = vcombine.high %v4875, %v4875
    %v4878 = vcombine.high %v4822, %v4822
    %v4880 = vunpack.c.l.s4 1983009808
    %v4881 = vunpack.c.0.s8 %v4880
    %v4882 = vlaneseq
    %v4883 = vshrl.u32 %v4882, 7
    %v4884 = vsub.s32 %v4881, %v4883
    %v4885 = vrot.slane %v4822, %v4884
    %v4887 = vunpack.c.l.s4 1983009808
    %v4888 = vunpack.c.0.s8 %v4887
    %v4889 = vlaneseq
    %v4890 = vshrl.u32 %v4889, 7
    %v4891 = vsub.s32 %v4888, %v4890
    %v4892 = vrot.slane %v4878, %v4891
    %v4893 = vcombine.high %v4885, %v4885
    %v4894 = vcombine.high %v4892, %v4892
    %v4911 = vpack.c.bf16 %v4834, %v4834
    %v4912 = vpack.c.bf16 %v4842, %v4842
    %v4913 = vpack.c.bf16 %v4841, %v4841
    %v4914 = vpack.c.bf16 %v4843, %v4843
    %v4915 = vpack.c.bf16 %v4851, %v4851
    %v4916 = vpack.c.bf16 %v4859, %v4859
    %v4917 = vpack.c.bf16 %v4858, %v4858
    %v4918 = vpack.c.bf16 %v4860, %v4860
    %v4919 = vpack.c.bf16 %v4868, %v4868
    %v4920 = vpack.c.bf16 %v4876, %v4876
    %v4921 = vpack.c.bf16 %v4875, %v4875
    %v4922 = vpack.c.bf16 %v4877, %v4877
    %v4923 = vpack.c.bf16 %v4885, %v4885
    %v4924 = vpack.c.bf16 %v4893, %v4893
    %v4925 = vpack.c.bf16 %v4892, %v4892
    %v4926 = vpack.c.bf16 %v4894, %v4894
    %v4927 = vld [vmem:[%s5] sm:$0xf]
    %v4928 = vld [vmem:[%s5 + $0x4] sm:$0xf]
    %v4929 = vld [vmem:[%s5 + $0x8] sm:$0xf]
    %v4930 = vld [vmem:[%s5 + $0xc] sm:$0xf]
    %v4931 = vld [vmem:[%s5 + $0x10] sm:$0xf]
    %v4932 = vld [vmem:[%s5 + $0x14] sm:$0xf]
    %v4933 = vld [vmem:[%s5 + $0x18] sm:$0xf]
    %v4934 = vld [vmem:[%s5 + $0x1c] sm:$0xf]
    %v4935 = vld [vmem:[%s5 + $0x20] sm:$0xf]
    %v4936 = vld [vmem:[%s5 + $0x24] sm:$0xf]
    %v4937 = vld [vmem:[%s5 + $0x28] sm:$0xf]
    %v4938 = vld [vmem:[%s5 + $0x2c] sm:$0xf]
    %v4939 = vld [vmem:[%s5 + $0x30] sm:$0xf]
    %v4940 = vld [vmem:[%s5 + $0x34] sm:$0xf]
    %v4941 = vld [vmem:[%s5 + $0x38] sm:$0xf]
    %v4942 = vld [vmem:[%s5 + $0x3c] sm:$0xf]
    %v4943 = vld [vmem:[%s5 + $0x40] sm:$0xf]
    %v4944 = vld [vmem:[%s5 + $0x44] sm:$0xf]
    %v4945 = vld [vmem:[%s5 + $0x48] sm:$0xf]
    %v4946 = vld [vmem:[%s5 + $0x4c] sm:$0xf]
    %v4947 = vld [vmem:[%s5 + $0x50] sm:$0xf]
    %v4948 = vld [vmem:[%s5 + $0x54] sm:$0xf]
    %v4949 = vld [vmem:[%s5 + $0x58] sm:$0xf]
    %v4950 = vld [vmem:[%s5 + $0x5c] sm:$0xf]
    %v4951 = vld [vmem:[%s5 + $0x60] sm:$0xf]
    %v4952 = vld [vmem:[%s5 + $0x64] sm:$0xf]
    %v4953 = vld [vmem:[%s5 + $0x68] sm:$0xf]
    %v4954 = vld [vmem:[%s5 + $0x6c] sm:$0xf]
    %v4955 = vld [vmem:[%s5 + $0x70] sm:$0xf]
    %v4956 = vld [vmem:[%s5 + $0x74] sm:$0xf]
    %v4957 = vld [vmem:[%s5 + $0x78] sm:$0xf]
    %v4958 = vld [vmem:[%s5 + $0x7c] sm:$0xf]
    %v4959 = vld [vmem:[%s5 + $0x80] sm:$0xf]
    %v4960 = vld [vmem:[%s5 + $0x84] sm:$0xf]
    %v4961 = vld [vmem:[%s5 + $0x88] sm:$0xf]
    %v4962 = vld [vmem:[%s5 + $0x8c] sm:$0xf]
    %v4963 = vld [vmem:[%s5 + $0x90] sm:$0xf]
    %v4964 = vld [vmem:[%s5 + $0x94] sm:$0xf]
    %v4965 = vld [vmem:[%s5 + $0x98] sm:$0xf]
    %v4966 = vld [vmem:[%s5 + $0x9c] sm:$0xf]
    %v4967 = vld [vmem:[%s5 + $0xa0] sm:$0xf]
    %v4968 = vld [vmem:[%s5 + $0xa4] sm:$0xf]
    %v4969 = vld [vmem:[%s5 + $0xa8] sm:$0xf]
    %v4970 = vld [vmem:[%s5 + $0xac] sm:$0xf]
    %v4971 = vld [vmem:[%s5 + $0xb0] sm:$0xf]
    %v4972 = vld [vmem:[%s5 + $0xb4] sm:$0xf]
    %v4973 = vld [vmem:[%s5 + $0xb8] sm:$0xf]
    %v4974 = vld [vmem:[%s5 + $0xbc] sm:$0xf]
    %v4975 = vld [vmem:[%s5 + $0xc0] sm:$0xf]
    %v4976 = vld [vmem:[%s5 + $0xc4] sm:$0xf]
    %v4977 = vld [vmem:[%s5 + $0xc8] sm:$0xf]
    %v4978 = vld [vmem:[%s5 + $0xcc] sm:$0xf]
    %v4979 = vld [vmem:[%s5 + $0xd0] sm:$0xf]
    %v4980 = vld [vmem:[%s5 + $0xd4] sm:$0xf]
    %v4981 = vld [vmem:[%s5 + $0xd8] sm:$0xf]
    %v4982 = vld [vmem:[%s5 + $0xdc] sm:$0xf]
    %v4983 = vld [vmem:[%s5 + $0xe0] sm:$0xf]
    %v4984 = vld [vmem:[%s5 + $0xe4] sm:$0xf]
    %v4985 = vld [vmem:[%s5 + $0xe8] sm:$0xf]
    %v4986 = vld [vmem:[%s5 + $0xec] sm:$0xf]
    %v4987 = vld [vmem:[%s5 + $0xf0] sm:$0xf]
    %v4988 = vld [vmem:[%s5 + $0xf4] sm:$0xf]
    %v4989 = vld [vmem:[%s5 + $0xf8] sm:$0xf]
    %v4990 = vld [vmem:[%s5 + $0xfc] sm:$0xf]
    %v4991 = vld [vmem:[%s5 + $0x100] sm:$0xf]
    %v4992 = vld [vmem:[%s5 + $0x104] sm:$0xf]
    %v4993 = vld [vmem:[%s5 + $0x108] sm:$0xf]
    %v4994 = vld [vmem:[%s5 + $0x10c] sm:$0xf]
    %v4995 = vld [vmem:[%s5 + $0x110] sm:$0xf]
    %v4996 = vld [vmem:[%s5 + $0x114] sm:$0xf]
    %v4997 = vld [vmem:[%s5 + $0x118] sm:$0xf]
    %v4998 = vld [vmem:[%s5 + $0x11c] sm:$0xf]
    %v4999 = vld [vmem:[%s5 + $0x120] sm:$0xf]
    %v5000 = vld [vmem:[%s5 + $0x124] sm:$0xf]
    %v5001 = vld [vmem:[%s5 + $0x128] sm:$0xf]
    %v5002 = vld [vmem:[%s5 + $0x12c] sm:$0xf]
    %v5003 = vld [vmem:[%s5 + $0x130] sm:$0xf]
    %v5004 = vld [vmem:[%s5 + $0x134] sm:$0xf]
    %v5005 = vld [vmem:[%s5 + $0x138] sm:$0xf]
    %v5006 = vld [vmem:[%s5 + $0x13c] sm:$0xf]
    %v5007 = vld [vmem:[%s5 + $0x140] sm:$0xf]
    %v5008 = vld [vmem:[%s5 + $0x144] sm:$0xf]
    %v5009 = vld [vmem:[%s5 + $0x148] sm:$0xf]
    %v5010 = vld [vmem:[%s5 + $0x14c] sm:$0xf]
    %v5011 = vld [vmem:[%s5 + $0x150] sm:$0xf]
    %v5012 = vld [vmem:[%s5 + $0x154] sm:$0xf]
    %v5013 = vld [vmem:[%s5 + $0x158] sm:$0xf]
    %v5014 = vld [vmem:[%s5 + $0x15c] sm:$0xf]
    %v5015 = vld [vmem:[%s5 + $0x160] sm:$0xf]
    %v5016 = vld [vmem:[%s5 + $0x164] sm:$0xf]
    %v5017 = vld [vmem:[%s5 + $0x168] sm:$0xf]
    %v5018 = vld [vmem:[%s5 + $0x16c] sm:$0xf]
    %v5019 = vld [vmem:[%s5 + $0x170] sm:$0xf]
    %v5020 = vld [vmem:[%s5 + $0x174] sm:$0xf]
    %v5021 = vld [vmem:[%s5 + $0x178] sm:$0xf]
    %v5022 = vld [vmem:[%s5 + $0x17c] sm:$0xf]
    %v5023 = vld [vmem:[%s5 + $0x180] sm:$0xf]
    %v5024 = vld [vmem:[%s5 + $0x184] sm:$0xf]
    %v5025 = vld [vmem:[%s5 + $0x188] sm:$0xf]
    %v5026 = vld [vmem:[%s5 + $0x18c] sm:$0xf]
    %v5027 = vld [vmem:[%s5 + $0x190] sm:$0xf]
    %v5028 = vld [vmem:[%s5 + $0x194] sm:$0xf]
    %v5029 = vld [vmem:[%s5 + $0x198] sm:$0xf]
    %v5030 = vld [vmem:[%s5 + $0x19c] sm:$0xf]
    %v5031 = vld [vmem:[%s5 + $0x1a0] sm:$0xf]
    %v5032 = vld [vmem:[%s5 + $0x1a4] sm:$0xf]
    %v5033 = vld [vmem:[%s5 + $0x1a8] sm:$0xf]
    %v5034 = vld [vmem:[%s5 + $0x1ac] sm:$0xf]
    %v5035 = vld [vmem:[%s5 + $0x1b0] sm:$0xf]
    %v5036 = vld [vmem:[%s5 + $0x1b4] sm:$0xf]
    %v5037 = vld [vmem:[%s5 + $0x1b8] sm:$0xf]
    %v5038 = vld [vmem:[%s5 + $0x1bc] sm:$0xf]
    %v5039 = vld [vmem:[%s5 + $0x1c0] sm:$0xf]
    %v5040 = vld [vmem:[%s5 + $0x1c4] sm:$0xf]
    %v5041 = vld [vmem:[%s5 + $0x1c8] sm:$0xf]
    %v5042 = vld [vmem:[%s5 + $0x1cc] sm:$0xf]
    %v5043 = vld [vmem:[%s5 + $0x1d0] sm:$0xf]
    %v5044 = vld [vmem:[%s5 + $0x1d4] sm:$0xf]
    %v5045 = vld [vmem:[%s5 + $0x1d8] sm:$0xf]
    %v5046 = vld [vmem:[%s5 + $0x1dc] sm:$0xf]
    %v5047 = vld [vmem:[%s5 + $0x1e0] sm:$0xf]
    %v5048 = vld [vmem:[%s5 + $0x1e4] sm:$0xf]
    %v5049 = vld [vmem:[%s5 + $0x1e8] sm:$0xf]
    %v5050 = vld [vmem:[%s5 + $0x1ec] sm:$0xf]
    %v5051 = vld [vmem:[%s5 + $0x1f0] sm:$0xf]
    %v5052 = vld [vmem:[%s5 + $0x1f4] sm:$0xf]
    %v5053 = vld [vmem:[%s5 + $0x1f8] sm:$0xf]
    %v5054 = vld [vmem:[%s5 + $0x1fc] sm:$0xf]
    %v5055 = vld [vmem:[%s5 + $0x200] sm:$0xf]
    %v5056 = vld [vmem:[%s5 + $0x204] sm:$0xf]
    %v5057 = vld [vmem:[%s5 + $0x208] sm:$0xf]
    %v5058 = vld [vmem:[%s5 + $0x20c] sm:$0xf]
    %v5059 = vld [vmem:[%s5 + $0x210] sm:$0xf]
    %v5060 = vld [vmem:[%s5 + $0x214] sm:$0xf]
    %v5061 = vld [vmem:[%s5 + $0x218] sm:$0xf]
    %v5062 = vld [vmem:[%s5 + $0x21c] sm:$0xf]
    %v5063 = vld [vmem:[%s5 + $0x220] sm:$0xf]
    %v5064 = vld [vmem:[%s5 + $0x224] sm:$0xf]
    %v5065 = vld [vmem:[%s5 + $0x228] sm:$0xf]
    %v5066 = vld [vmem:[%s5 + $0x22c] sm:$0xf]
    %v5067 = vld [vmem:[%s5 + $0x230] sm:$0xf]
    %v5068 = vld [vmem:[%s5 + $0x234] sm:$0xf]
    %v5069 = vld [vmem:[%s5 + $0x238] sm:$0xf]
    %v5070 = vld [vmem:[%s5 + $0x23c] sm:$0xf]
    %v5071 = vld [vmem:[%s5 + $0x240] sm:$0xf]
    %v5072 = vld [vmem:[%s5 + $0x244] sm:$0xf]
    %v5073 = vld [vmem:[%s5 + $0x248] sm:$0xf]
    %v5074 = vld [vmem:[%s5 + $0x24c] sm:$0xf]
    %v5075 = vld [vmem:[%s5 + $0x250] sm:$0xf]
    %v5076 = vld [vmem:[%s5 + $0x254] sm:$0xf]
    %v5077 = vld [vmem:[%s5 + $0x258] sm:$0xf]
    %v5078 = vld [vmem:[%s5 + $0x25c] sm:$0xf]
    %v5079 = vld [vmem:[%s5 + $0x260] sm:$0xf]
    %v5080 = vld [vmem:[%s5 + $0x264] sm:$0xf]
    %v5081 = vld [vmem:[%s5 + $0x268] sm:$0xf]
    %v5082 = vld [vmem:[%s5 + $0x26c] sm:$0xf]
    %v5083 = vld [vmem:[%s5 + $0x270] sm:$0xf]
    %v5084 = vld [vmem:[%s5 + $0x274] sm:$0xf]
    %v5085 = vld [vmem:[%s5 + $0x278] sm:$0xf]
    %v5086 = vld [vmem:[%s5 + $0x27c] sm:$0xf]
    %v5087 = vld [vmem:[%s5 + $0x280] sm:$0xf]
    %v5088 = vld [vmem:[%s5 + $0x284] sm:$0xf]
    %v5089 = vld [vmem:[%s5 + $0x288] sm:$0xf]
    %v5090 = vld [vmem:[%s5 + $0x28c] sm:$0xf]
    %v5091 = vld [vmem:[%s5 + $0x290] sm:$0xf]
    %v5092 = vld [vmem:[%s5 + $0x294] sm:$0xf]
    %v5093 = vld [vmem:[%s5 + $0x298] sm:$0xf]
    %v5094 = vld [vmem:[%s5 + $0x29c] sm:$0xf]
    %v5095 = vld [vmem:[%s5 + $0x2a0] sm:$0xf]
    %v5096 = vld [vmem:[%s5 + $0x2a4] sm:$0xf]
    %v5097 = vld [vmem:[%s5 + $0x2a8] sm:$0xf]
    %v5098 = vld [vmem:[%s5 + $0x2ac] sm:$0xf]
    %v5099 = vld [vmem:[%s5 + $0x2b0] sm:$0xf]
    %v5100 = vld [vmem:[%s5 + $0x2b4] sm:$0xf]
    %v5101 = vld [vmem:[%s5 + $0x2b8] sm:$0xf]
    %v5102 = vld [vmem:[%s5 + $0x2bc] sm:$0xf]
    %v5103 = vld [vmem:[%s5 + $0x2c0] sm:$0xf]
    %v5104 = vld [vmem:[%s5 + $0x2c4] sm:$0xf]
    %v5105 = vld [vmem:[%s5 + $0x2c8] sm:$0xf]
    %v5106 = vld [vmem:[%s5 + $0x2cc] sm:$0xf]
    %v5107 = vld [vmem:[%s5 + $0x2d0] sm:$0xf]
    %v5108 = vld [vmem:[%s5 + $0x2d4] sm:$0xf]
    %v5109 = vld [vmem:[%s5 + $0x2d8] sm:$0xf]
    %v5110 = vld [vmem:[%s5 + $0x2dc] sm:$0xf]
    %v5111 = vld [vmem:[%s5 + $0x2e0] sm:$0xf]
    %v5112 = vld [vmem:[%s5 + $0x2e4] sm:$0xf]
    %v5113 = vld [vmem:[%s5 + $0x2e8] sm:$0xf]
    %v5114 = vld [vmem:[%s5 + $0x2ec] sm:$0xf]
    %v5115 = vld [vmem:[%s5 + $0x2f0] sm:$0xf]
    %v5116 = vld [vmem:[%s5 + $0x2f4] sm:$0xf]
    %v5117 = vld [vmem:[%s5 + $0x2f8] sm:$0xf]
    %v5118 = vld [vmem:[%s5 + $0x2fc] sm:$0xf]
    %v5119 = vld [vmem:[%s5 + $0x300] sm:$0xf]
    %v5120 = vld [vmem:[%s5 + $0x304] sm:$0xf]
    %v5121 = vld [vmem:[%s5 + $0x308] sm:$0xf]
    %v5122 = vld [vmem:[%s5 + $0x30c] sm:$0xf]
    %v5123 = vld [vmem:[%s5 + $0x310] sm:$0xf]
    %v5124 = vld [vmem:[%s5 + $0x314] sm:$0xf]
    %v5125 = vld [vmem:[%s5 + $0x318] sm:$0xf]
    %v5126 = vld [vmem:[%s5 + $0x31c] sm:$0xf]
    %v5127 = vld [vmem:[%s5 + $0x320] sm:$0xf]
    %v5128 = vld [vmem:[%s5 + $0x324] sm:$0xf]
    %v5129 = vld [vmem:[%s5 + $0x328] sm:$0xf]
    %v5130 = vld [vmem:[%s5 + $0x32c] sm:$0xf]
    %v5131 = vld [vmem:[%s5 + $0x330] sm:$0xf]
    %v5132 = vld [vmem:[%s5 + $0x334] sm:$0xf]
    %v5133 = vld [vmem:[%s5 + $0x338] sm:$0xf]
    %v5134 = vld [vmem:[%s5 + $0x33c] sm:$0xf]
    %v5135 = vld [vmem:[%s5 + $0x340] sm:$0xf]
    %v5136 = vld [vmem:[%s5 + $0x344] sm:$0xf]
    %v5137 = vld [vmem:[%s5 + $0x348] sm:$0xf]
    %v5138 = vld [vmem:[%s5 + $0x34c] sm:$0xf]
    %v5139 = vld [vmem:[%s5 + $0x350] sm:$0xf]
    %v5140 = vld [vmem:[%s5 + $0x354] sm:$0xf]
    %v5141 = vld [vmem:[%s5 + $0x358] sm:$0xf]
    %v5142 = vld [vmem:[%s5 + $0x35c] sm:$0xf]
    %v5143 = vld [vmem:[%s5 + $0x360] sm:$0xf]
    %v5144 = vld [vmem:[%s5 + $0x364] sm:$0xf]
    %v5145 = vld [vmem:[%s5 + $0x368] sm:$0xf]
    %v5146 = vld [vmem:[%s5 + $0x36c] sm:$0xf]
    %v5147 = vld [vmem:[%s5 + $0x370] sm:$0xf]
    %v5148 = vld [vmem:[%s5 + $0x374] sm:$0xf]
    %v5149 = vld [vmem:[%s5 + $0x378] sm:$0xf]
    %v5150 = vld [vmem:[%s5 + $0x37c] sm:$0xf]
    %v5151 = vld [vmem:[%s5 + $0x380] sm:$0xf]
    %v5152 = vld [vmem:[%s5 + $0x384] sm:$0xf]
    %v5153 = vld [vmem:[%s5 + $0x388] sm:$0xf]
    %v5154 = vld [vmem:[%s5 + $0x38c] sm:$0xf]
    %v5155 = vld [vmem:[%s5 + $0x390] sm:$0xf]
    %v5156 = vld [vmem:[%s5 + $0x394] sm:$0xf]
    %v5157 = vld [vmem:[%s5 + $0x398] sm:$0xf]
    %v5158 = vld [vmem:[%s5 + $0x39c] sm:$0xf]
    %v5159 = vld [vmem:[%s5 + $0x3a0] sm:$0xf]
    %v5160 = vld [vmem:[%s5 + $0x3a4] sm:$0xf]
    %v5161 = vld [vmem:[%s5 + $0x3a8] sm:$0xf]
    %v5162 = vld [vmem:[%s5 + $0x3ac] sm:$0xf]
    %v5163 = vld [vmem:[%s5 + $0x3b0] sm:$0xf]
    %v5164 = vld [vmem:[%s5 + $0x3b4] sm:$0xf]
    %v5165 = vld [vmem:[%s5 + $0x3b8] sm:$0xf]
    %v5166 = vld [vmem:[%s5 + $0x3bc] sm:$0xf]
    %v5167 = vld [vmem:[%s5 + $0x3c0] sm:$0xf]
    %v5168 = vld [vmem:[%s5 + $0x3c4] sm:$0xf]
    %v5169 = vld [vmem:[%s5 + $0x3c8] sm:$0xf]
    %v5170 = vld [vmem:[%s5 + $0x3cc] sm:$0xf]
    %v5171 = vld [vmem:[%s5 + $0x3d0] sm:$0xf]
    %v5172 = vld [vmem:[%s5 + $0x3d4] sm:$0xf]
    %v5173 = vld [vmem:[%s5 + $0x3d8] sm:$0xf]
    %v5174 = vld [vmem:[%s5 + $0x3dc] sm:$0xf]
    %v5175 = vld [vmem:[%s5 + $0x3e0] sm:$0xf]
    %v5176 = vld [vmem:[%s5 + $0x3e4] sm:$0xf]
    %v5177 = vld [vmem:[%s5 + $0x3e8] sm:$0xf]
    %v5178 = vld [vmem:[%s5 + $0x3ec] sm:$0xf]
    %v5179 = vld [vmem:[%s5 + $0x3f0] sm:$0xf]
    %v5180 = vld [vmem:[%s5 + $0x3f4] sm:$0xf]
    %v5181 = vld [vmem:[%s5 + $0x3f8] sm:$0xf]
    %v5182 = vld [vmem:[%s5 + $0x3fc] sm:$0xf]
    %v5183 = vld [vmem:[%s6] sm:$0x1]
    %v5185 = vlaneseq
    %v5186 = vshrl.u32 %v5185, 7
    %v5187 = vsub.s32 0, %v5186
    %v5188 = vrot.slane %v5183, %v5187
    %v5446 = vunpack.c.l.b16 %v4927
    %v5447 = vunpack.c.l.b16 %v4928
    %v5448 = vunpack.c.l.b16 %v4929
    %v5449 = vunpack.c.l.b16 %v4930
    %v5450 = vunpack.c.l.b16 %v4931
    %v5451 = vunpack.c.l.b16 %v4932
    %v5452 = vunpack.c.l.b16 %v4933
    %v5453 = vunpack.c.l.b16 %v4934
    %v5454 = vunpack.c.l.b16 %v4935
    %v5455 = vunpack.c.l.b16 %v4936
    %v5456 = vunpack.c.l.b16 %v4937
    %v5457 = vunpack.c.l.b16 %v4938
    %v5458 = vunpack.c.l.b16 %v4939
    %v5459 = vunpack.c.l.b16 %v4940
    %v5460 = vunpack.c.l.b16 %v4941
    %v5461 = vunpack.c.l.b16 %v4942
    %v5462 = vunpack.c.l.b16 %v4943
    %v5463 = vunpack.c.l.b16 %v4944
    %v5464 = vunpack.c.l.b16 %v4945
    %v5465 = vunpack.c.l.b16 %v4946
    %v5466 = vunpack.c.l.b16 %v4947
    %v5467 = vunpack.c.l.b16 %v4948
    %v5468 = vunpack.c.l.b16 %v4949
    %v5469 = vunpack.c.l.b16 %v4950
    %v5470 = vunpack.c.l.b16 %v4951
    %v5471 = vunpack.c.l.b16 %v4952
    %v5472 = vunpack.c.l.b16 %v4953
    %v5473 = vunpack.c.l.b16 %v4954
    %v5474 = vunpack.c.l.b16 %v4955
    %v5475 = vunpack.c.l.b16 %v4956
    %v5476 = vunpack.c.l.b16 %v4957
    %v5477 = vunpack.c.l.b16 %v4958
    %v5478 = vunpack.c.l.b16 %v4959
    %v5479 = vunpack.c.l.b16 %v4960
    %v5480 = vunpack.c.l.b16 %v4961
    %v5481 = vunpack.c.l.b16 %v4962
    %v5482 = vunpack.c.l.b16 %v4963
    %v5483 = vunpack.c.l.b16 %v4964
    %v5484 = vunpack.c.l.b16 %v4965
    %v5485 = vunpack.c.l.b16 %v4966
    %v5486 = vunpack.c.l.b16 %v4967
    %v5487 = vunpack.c.l.b16 %v4968
    %v5488 = vunpack.c.l.b16 %v4969
    %v5489 = vunpack.c.l.b16 %v4970
    %v5490 = vunpack.c.l.b16 %v4971
    %v5491 = vunpack.c.l.b16 %v4972
    %v5492 = vunpack.c.l.b16 %v4973
    %v5493 = vunpack.c.l.b16 %v4974
    %v5494 = vunpack.c.l.b16 %v4975
    %v5495 = vunpack.c.l.b16 %v4976
    %v5496 = vunpack.c.l.b16 %v4977
    %v5497 = vunpack.c.l.b16 %v4978
    %v5498 = vunpack.c.l.b16 %v4979
    %v5499 = vunpack.c.l.b16 %v4980
    %v5500 = vunpack.c.l.b16 %v4981
    %v5501 = vunpack.c.l.b16 %v4982
    %v5502 = vunpack.c.l.b16 %v4983
    %v5503 = vunpack.c.l.b16 %v4984
    %v5504 = vunpack.c.l.b16 %v4985
    %v5505 = vunpack.c.l.b16 %v4986
    %v5506 = vunpack.c.l.b16 %v4987
    %v5507 = vunpack.c.l.b16 %v4988
    %v5508 = vunpack.c.l.b16 %v4989
    %v5509 = vunpack.c.l.b16 %v4990
    %v5510 = vunpack.c.l.b16 %v4991
    %v5511 = vunpack.c.l.b16 %v4992
    %v5512 = vunpack.c.l.b16 %v4993
    %v5513 = vunpack.c.l.b16 %v4994
    %v5514 = vunpack.c.l.b16 %v4995
    %v5515 = vunpack.c.l.b16 %v4996
    %v5516 = vunpack.c.l.b16 %v4997
    %v5517 = vunpack.c.l.b16 %v4998
    %v5518 = vunpack.c.l.b16 %v4999
    %v5519 = vunpack.c.l.b16 %v5000
    %v5520 = vunpack.c.l.b16 %v5001
    %v5521 = vunpack.c.l.b16 %v5002
    %v5522 = vunpack.c.l.b16 %v5003
    %v5523 = vunpack.c.l.b16 %v5004
    %v5524 = vunpack.c.l.b16 %v5005
    %v5525 = vunpack.c.l.b16 %v5006
    %v5526 = vunpack.c.l.b16 %v5007
    %v5527 = vunpack.c.l.b16 %v5008
    %v5528 = vunpack.c.l.b16 %v5009
    %v5529 = vunpack.c.l.b16 %v5010
    %v5530 = vunpack.c.l.b16 %v5011
    %v5531 = vunpack.c.l.b16 %v5012
    %v5532 = vunpack.c.l.b16 %v5013
    %v5533 = vunpack.c.l.b16 %v5014
    %v5534 = vunpack.c.l.b16 %v5015
    %v5535 = vunpack.c.l.b16 %v5016
    %v5536 = vunpack.c.l.b16 %v5017
    %v5537 = vunpack.c.l.b16 %v5018
    %v5538 = vunpack.c.l.b16 %v5019
    %v5539 = vunpack.c.l.b16 %v5020
    %v5540 = vunpack.c.l.b16 %v5021
    %v5541 = vunpack.c.l.b16 %v5022
    %v5542 = vunpack.c.l.b16 %v5023
    %v5543 = vunpack.c.l.b16 %v5024
    %v5544 = vunpack.c.l.b16 %v5025
    %v5545 = vunpack.c.l.b16 %v5026
    %v5546 = vunpack.c.l.b16 %v5027
    %v5547 = vunpack.c.l.b16 %v5028
    %v5548 = vunpack.c.l.b16 %v5029
    %v5549 = vunpack.c.l.b16 %v5030
    %v5550 = vunpack.c.l.b16 %v5031
    %v5551 = vunpack.c.l.b16 %v5032
    %v5552 = vunpack.c.l.b16 %v5033
    %v5553 = vunpack.c.l.b16 %v5034
    %v5554 = vunpack.c.l.b16 %v5035
    %v5555 = vunpack.c.l.b16 %v5036
    %v5556 = vunpack.c.l.b16 %v5037
    %v5557 = vunpack.c.l.b16 %v5038
    %v5558 = vunpack.c.l.b16 %v5039
    %v5559 = vunpack.c.l.b16 %v5040
    %v5560 = vunpack.c.l.b16 %v5041
    %v5561 = vunpack.c.l.b16 %v5042
    %v5562 = vunpack.c.l.b16 %v5043
    %v5563 = vunpack.c.l.b16 %v5044
    %v5564 = vunpack.c.l.b16 %v5045
    %v5565 = vunpack.c.l.b16 %v5046
    %v5566 = vunpack.c.l.b16 %v5047
    %v5567 = vunpack.c.l.b16 %v5048
    %v5568 = vunpack.c.l.b16 %v5049
    %v5569 = vunpack.c.l.b16 %v5050
    %v5570 = vunpack.c.l.b16 %v5051
    %v5571 = vunpack.c.l.b16 %v5052
    %v5572 = vunpack.c.l.b16 %v5053
    %v5573 = vunpack.c.l.b16 %v5054
    %v5574 = vunpack.c.l.b16 %v5055
    %v5575 = vunpack.c.l.b16 %v5056
    %v5576 = vunpack.c.l.b16 %v5057
    %v5577 = vunpack.c.l.b16 %v5058
    %v5578 = vunpack.c.l.b16 %v5059
    %v5579 = vunpack.c.l.b16 %v5060
    %v5580 = vunpack.c.l.b16 %v5061
    %v5581 = vunpack.c.l.b16 %v5062
    %v5582 = vunpack.c.l.b16 %v5063
    %v5583 = vunpack.c.l.b16 %v5064
    %v5584 = vunpack.c.l.b16 %v5065
    %v5585 = vunpack.c.l.b16 %v5066
    %v5586 = vunpack.c.l.b16 %v5067
    %v5587 = vunpack.c.l.b16 %v5068
    %v5588 = vunpack.c.l.b16 %v5069
    %v5589 = vunpack.c.l.b16 %v5070
    %v5590 = vunpack.c.l.b16 %v5071
    %v5591 = vunpack.c.l.b16 %v5072
    %v5592 = vunpack.c.l.b16 %v5073
    %v5593 = vunpack.c.l.b16 %v5074
    %v5594 = vunpack.c.l.b16 %v5075
    %v5595 = vunpack.c.l.b16 %v5076
    %v5596 = vunpack.c.l.b16 %v5077
    %v5597 = vunpack.c.l.b16 %v5078
    %v5598 = vunpack.c.l.b16 %v5079
    %v5599 = vunpack.c.l.b16 %v5080
    %v5600 = vunpack.c.l.b16 %v5081
    %v5601 = vunpack.c.l.b16 %v5082
    %v5602 = vunpack.c.l.b16 %v5083
    %v5603 = vunpack.c.l.b16 %v5084
    %v5604 = vunpack.c.l.b16 %v5085
    %v5605 = vunpack.c.l.b16 %v5086
    %v5606 = vunpack.c.l.b16 %v5087
    %v5607 = vunpack.c.l.b16 %v5088
    %v5608 = vunpack.c.l.b16 %v5089
    %v5609 = vunpack.c.l.b16 %v5090
    %v5610 = vunpack.c.l.b16 %v5091
    %v5611 = vunpack.c.l.b16 %v5092
    %v5612 = vunpack.c.l.b16 %v5093
    %v5613 = vunpack.c.l.b16 %v5094
    %v5614 = vunpack.c.l.b16 %v5095
    %v5615 = vunpack.c.l.b16 %v5096
    %v5616 = vunpack.c.l.b16 %v5097
    %v5617 = vunpack.c.l.b16 %v5098
    %v5618 = vunpack.c.l.b16 %v5099
    %v5619 = vunpack.c.l.b16 %v5100
    %v5620 = vunpack.c.l.b16 %v5101
    %v5621 = vunpack.c.l.b16 %v5102
    %v5622 = vunpack.c.l.b16 %v5103
    %v5623 = vunpack.c.l.b16 %v5104
    %v5624 = vunpack.c.l.b16 %v5105
    %v5625 = vunpack.c.l.b16 %v5106
    %v5626 = vunpack.c.l.b16 %v5107
    %v5627 = vunpack.c.l.b16 %v5108
    %v5628 = vunpack.c.l.b16 %v5109
    %v5629 = vunpack.c.l.b16 %v5110
    %v5630 = vunpack.c.l.b16 %v5111
    %v5631 = vunpack.c.l.b16 %v5112
    %v5632 = vunpack.c.l.b16 %v5113
    %v5633 = vunpack.c.l.b16 %v5114
    %v5634 = vunpack.c.l.b16 %v5115
    %v5635 = vunpack.c.l.b16 %v5116
    %v5636 = vunpack.c.l.b16 %v5117
    %v5637 = vunpack.c.l.b16 %v5118
    %v5638 = vunpack.c.l.b16 %v5119
    %v5639 = vunpack.c.l.b16 %v5120
    %v5640 = vunpack.c.l.b16 %v5121
    %v5641 = vunpack.c.l.b16 %v5122
    %v5642 = vunpack.c.l.b16 %v5123
    %v5643 = vunpack.c.l.b16 %v5124
    %v5644 = vunpack.c.l.b16 %v5125
    %v5645 = vunpack.c.l.b16 %v5126
    %v5646 = vunpack.c.l.b16 %v5127
    %v5647 = vunpack.c.l.b16 %v5128
    %v5648 = vunpack.c.l.b16 %v5129
    %v5649 = vunpack.c.l.b16 %v5130
    %v5650 = vunpack.c.l.b16 %v5131
    %v5651 = vunpack.c.l.b16 %v5132
    %v5652 = vunpack.c.l.b16 %v5133
    %v5653 = vunpack.c.l.b16 %v5134
    %v5654 = vunpack.c.l.b16 %v5135
    %v5655 = vunpack.c.l.b16 %v5136
    %v5656 = vunpack.c.l.b16 %v5137
    %v5657 = vunpack.c.l.b16 %v5138
    %v5658 = vunpack.c.l.b16 %v5139
    %v5659 = vunpack.c.l.b16 %v5140
    %v5660 = vunpack.c.l.b16 %v5141
    %v5661 = vunpack.c.l.b16 %v5142
    %v5662 = vunpack.c.l.b16 %v5143
    %v5663 = vunpack.c.l.b16 %v5144
    %v5664 = vunpack.c.l.b16 %v5145
    %v5665 = vunpack.c.l.b16 %v5146
    %v5666 = vunpack.c.l.b16 %v5147
    %v5667 = vunpack.c.l.b16 %v5148
    %v5668 = vunpack.c.l.b16 %v5149
    %v5669 = vunpack.c.l.b16 %v5150
    %v5670 = vunpack.c.l.b16 %v5151
    %v5671 = vunpack.c.l.b16 %v5152
    %v5672 = vunpack.c.l.b16 %v5153
    %v5673 = vunpack.c.l.b16 %v5154
    %v5674 = vunpack.c.l.b16 %v5155
    %v5675 = vunpack.c.l.b16 %v5156
    %v5676 = vunpack.c.l.b16 %v5157
    %v5677 = vunpack.c.l.b16 %v5158
    %v5678 = vunpack.c.l.b16 %v5159
    %v5679 = vunpack.c.l.b16 %v5160
    %v5680 = vunpack.c.l.b16 %v5161
    %v5681 = vunpack.c.l.b16 %v5162
    %v5682 = vunpack.c.l.b16 %v5163
    %v5683 = vunpack.c.l.b16 %v5164
    %v5684 = vunpack.c.l.b16 %v5165
    %v5685 = vunpack.c.l.b16 %v5166
    %v5686 = vunpack.c.l.b16 %v5167
    %v5687 = vunpack.c.l.b16 %v5168
    %v5688 = vunpack.c.l.b16 %v5169
    %v5689 = vunpack.c.l.b16 %v5170
    %v5690 = vunpack.c.l.b16 %v5171
    %v5691 = vunpack.c.l.b16 %v5172
    %v5692 = vunpack.c.l.b16 %v5173
    %v5693 = vunpack.c.l.b16 %v5174
    %v5694 = vunpack.c.l.b16 %v5175
    %v5695 = vunpack.c.l.b16 %v5176
    %v5696 = vunpack.c.l.b16 %v5177
    %v5697 = vunpack.c.l.b16 %v5178
    %v5698 = vunpack.c.l.b16 %v5179
    %v5699 = vunpack.c.l.b16 %v5180
    %v5700 = vunpack.c.l.b16 %v5181
    %v5701 = vunpack.c.l.b16 %v5182
    %v5702 = vpack.c.b16 %v5447, %v5446
    %v5703 = vpack.c.b16 %v5449, %v5448
    %v5704 = vpack.c.b16 %v5451, %v5450
    %v5705 = vpack.c.b16 %v5453, %v5452
    %v5706 = vpack.c.b16 %v5455, %v5454
    %v5707 = vpack.c.b16 %v5457, %v5456
    %v5708 = vpack.c.b16 %v5459, %v5458
    %v5709 = vpack.c.b16 %v5461, %v5460
    %v5710 = vpack.c.b16 %v5463, %v5462
    %v5711 = vpack.c.b16 %v5465, %v5464
    %v5712 = vpack.c.b16 %v5467, %v5466
    %v5713 = vpack.c.b16 %v5469, %v5468
    %v5714 = vpack.c.b16 %v5471, %v5470
    %v5715 = vpack.c.b16 %v5473, %v5472
    %v5716 = vpack.c.b16 %v5475, %v5474
    %v5717 = vpack.c.b16 %v5477, %v5476
    %v5718 = vpack.c.b16 %v5479, %v5478
    %v5719 = vpack.c.b16 %v5481, %v5480
    %v5720 = vpack.c.b16 %v5483, %v5482
    %v5721 = vpack.c.b16 %v5485, %v5484
    %v5722 = vpack.c.b16 %v5487, %v5486
    %v5723 = vpack.c.b16 %v5489, %v5488
    %v5724 = vpack.c.b16 %v5491, %v5490
    %v5725 = vpack.c.b16 %v5493, %v5492
    %v5726 = vpack.c.b16 %v5495, %v5494
    %v5727 = vpack.c.b16 %v5497, %v5496
    %v5728 = vpack.c.b16 %v5499, %v5498
    %v5729 = vpack.c.b16 %v5501, %v5500
    %v5730 = vpack.c.b16 %v5503, %v5502
    %v5731 = vpack.c.b16 %v5505, %v5504
    %v5732 = vpack.c.b16 %v5507, %v5506
    %v5733 = vpack.c.b16 %v5509, %v5508
    %v5734 = vpack.c.b16 %v5511, %v5510
    %v5735 = vpack.c.b16 %v5513, %v5512
    %v5736 = vpack.c.b16 %v5515, %v5514
    %v5737 = vpack.c.b16 %v5517, %v5516
    %v5738 = vpack.c.b16 %v5519, %v5518
    %v5739 = vpack.c.b16 %v5521, %v5520
    %v5740 = vpack.c.b16 %v5523, %v5522
    %v5741 = vpack.c.b16 %v5525, %v5524
    %v5742 = vpack.c.b16 %v5527, %v5526
    %v5743 = vpack.c.b16 %v5529, %v5528
    %v5744 = vpack.c.b16 %v5531, %v5530
    %v5745 = vpack.c.b16 %v5533, %v5532
    %v5746 = vpack.c.b16 %v5535, %v5534
    %v5747 = vpack.c.b16 %v5537, %v5536
    %v5748 = vpack.c.b16 %v5539, %v5538
    %v5749 = vpack.c.b16 %v5541, %v5540
    %v5750 = vpack.c.b16 %v5543, %v5542
    %v5751 = vpack.c.b16 %v5545, %v5544
    %v5752 = vpack.c.b16 %v5547, %v5546
    %v5753 = vpack.c.b16 %v5549, %v5548
    %v5754 = vpack.c.b16 %v5551, %v5550
    %v5755 = vpack.c.b16 %v5553, %v5552
    %v5756 = vpack.c.b16 %v5555, %v5554
    %v5757 = vpack.c.b16 %v5557, %v5556
    %v5758 = vpack.c.b16 %v5559, %v5558
    %v5759 = vpack.c.b16 %v5561, %v5560
    %v5760 = vpack.c.b16 %v5563, %v5562
    %v5761 = vpack.c.b16 %v5565, %v5564
    %v5762 = vpack.c.b16 %v5567, %v5566
    %v5763 = vpack.c.b16 %v5569, %v5568
    %v5764 = vpack.c.b16 %v5571, %v5570
    %v5765 = vpack.c.b16 %v5573, %v5572
    %v5766 = vpack.c.b16 %v5575, %v5574
    %v5767 = vpack.c.b16 %v5577, %v5576
    %v5768 = vpack.c.b16 %v5579, %v5578
    %v5769 = vpack.c.b16 %v5581, %v5580
    %v5770 = vpack.c.b16 %v5583, %v5582
    %v5771 = vpack.c.b16 %v5585, %v5584
    %v5772 = vpack.c.b16 %v5587, %v5586
    %v5773 = vpack.c.b16 %v5589, %v5588
    %v5774 = vpack.c.b16 %v5591, %v5590
    %v5775 = vpack.c.b16 %v5593, %v5592
    %v5776 = vpack.c.b16 %v5595, %v5594
    %v5777 = vpack.c.b16 %v5597, %v5596
    %v5778 = vpack.c.b16 %v5599, %v5598
    %v5779 = vpack.c.b16 %v5601, %v5600
    %v5780 = vpack.c.b16 %v5603, %v5602
    %v5781 = vpack.c.b16 %v5605, %v5604
    %v5782 = vpack.c.b16 %v5607, %v5606
    %v5783 = vpack.c.b16 %v5609, %v5608
    %v5784 = vpack.c.b16 %v5611, %v5610
    %v5785 = vpack.c.b16 %v5613, %v5612
    %v5786 = vpack.c.b16 %v5615, %v5614
    %v5787 = vpack.c.b16 %v5617, %v5616
    %v5788 = vpack.c.b16 %v5619, %v5618
    %v5789 = vpack.c.b16 %v5621, %v5620
    %v5790 = vpack.c.b16 %v5623, %v5622
    %v5791 = vpack.c.b16 %v5625, %v5624
    %v5792 = vpack.c.b16 %v5627, %v5626
    %v5793 = vpack.c.b16 %v5629, %v5628
    %v5794 = vpack.c.b16 %v5631, %v5630
    %v5795 = vpack.c.b16 %v5633, %v5632
    %v5796 = vpack.c.b16 %v5635, %v5634
    %v5797 = vpack.c.b16 %v5637, %v5636
    %v5798 = vpack.c.b16 %v5639, %v5638
    %v5799 = vpack.c.b16 %v5641, %v5640
    %v5800 = vpack.c.b16 %v5643, %v5642
    %v5801 = vpack.c.b16 %v5645, %v5644
    %v5802 = vpack.c.b16 %v5647, %v5646
    %v5803 = vpack.c.b16 %v5649, %v5648
    %v5804 = vpack.c.b16 %v5651, %v5650
    %v5805 = vpack.c.b16 %v5653, %v5652
    %v5806 = vpack.c.b16 %v5655, %v5654
    %v5807 = vpack.c.b16 %v5657, %v5656
    %v5808 = vpack.c.b16 %v5659, %v5658
    %v5809 = vpack.c.b16 %v5661, %v5660
    %v5810 = vpack.c.b16 %v5663, %v5662
    %v5811 = vpack.c.b16 %v5665, %v5664
    %v5812 = vpack.c.b16 %v5667, %v5666
    %v5813 = vpack.c.b16 %v5669, %v5668
    %v5814 = vpack.c.b16 %v5671, %v5670
    %v5815 = vpack.c.b16 %v5673, %v5672
    %v5816 = vpack.c.b16 %v5675, %v5674
    %v5817 = vpack.c.b16 %v5677, %v5676
    %v5818 = vpack.c.b16 %v5679, %v5678
    %v5819 = vpack.c.b16 %v5681, %v5680
    %v5820 = vpack.c.b16 %v5683, %v5682
    %v5821 = vpack.c.b16 %v5685, %v5684
    %v5822 = vpack.c.b16 %v5687, %v5686
    %v5823 = vpack.c.b16 %v5689, %v5688
    %v5824 = vpack.c.b16 %v5691, %v5690
    %v5825 = vpack.c.b16 %v5693, %v5692
    %v5826 = vpack.c.b16 %v5695, %v5694
    %v5827 = vpack.c.b16 %v5697, %v5696
    %v5828 = vpack.c.b16 %v5699, %v5698
    %v5829 = vpack.c.b16 %v5701, %v5700
    %5958 = vmatprep.subr.bf16.mxu0 0
    %5959 = vmatpush1.bf16.msra.mxu0 %v5702
    %5960 = vmatprep.subr.bf16.mxu0 0
    %5961 = vmatpush1.bf16.msra.mxu0 %v5703
    %5962 = vmatprep.subr.bf16.mxu0 0
    %5963 = vmatpush1.bf16.msra.mxu0 %v5704
    %5964 = vmatprep.subr.bf16.mxu0 0
    %5965 = vmatpush1.bf16.msra.mxu0 %v5705
    %5966 = vmatprep.subr.bf16.mxu0 0
    %5967 = vmatpush1.bf16.msra.mxu0 %v5706
    %5968 = vmatprep.subr.bf16.mxu0 0
    %5969 = vmatpush1.bf16.msra.mxu0 %v5707
    %5970 = vmatprep.subr.bf16.mxu0 0
    %5971 = vmatpush1.bf16.msra.mxu0 %v5708
    %5972 = vmatprep.subr.bf16.mxu0 0
    %5973 = vmatpush1.bf16.msra.mxu0 %v5709
    %5974 = vmatprep.subr.bf16.mxu0 0
    %5975 = vmatpush1.bf16.msra.mxu0 %v5710
    %5976 = vmatprep.subr.bf16.mxu0 0
    %5977 = vmatpush1.bf16.msra.mxu0 %v5711
    %5978 = vmatprep.subr.bf16.mxu0 0
    %5979 = vmatpush1.bf16.msra.mxu0 %v5712
    %5980 = vmatprep.subr.bf16.mxu0 0
    %5981 = vmatpush1.bf16.msra.mxu0 %v5713
    %5982 = vmatprep.subr.bf16.mxu0 0
    %5983 = vmatpush1.bf16.msra.mxu0 %v5714
    %5984 = vmatprep.subr.bf16.mxu0 0
    %5985 = vmatpush1.bf16.msra.mxu0 %v5715
    %5986 = vmatprep.subr.bf16.mxu0 0
    %5987 = vmatpush1.bf16.msra.mxu0 %v5716
    %5988 = vmatprep.subr.bf16.mxu0 0
    %5989 = vmatpush1.bf16.msra.mxu0 %v5717
    %5990 = vmatprep.mubr.bf16.mxu0 %v4912
    %5991 = vmatmul.mubr.bf16.gmra.mrb[0].mxu0 %v4911
    %v5992 = vpop.f32.mrb[0].mxu0
    %v5993 = vadd.f32 %v5188, %v5992
    %v5994 = vpop.f32.mrb[0].mxu0
    %v5995 = vpop.f32.mrb[0].mxu0
    %v5996 = vpop.f32.mrb[0].mxu0
    %5997 = vdwg.mxu0
    %5998 = vmatprep.subr.bf16.mxu0 0
    %5999 = vmatpush1.bf16.msra.mxu0 %v5718
    %6000 = vmatprep.subr.bf16.mxu0 0
    %6001 = vmatpush1.bf16.msra.mxu0 %v5719
    %6002 = vmatprep.subr.bf16.mxu0 0
    %6003 = vmatpush1.bf16.msra.mxu0 %v5720
    %6004 = vmatprep.subr.bf16.mxu0 0
    %6005 = vmatpush1.bf16.msra.mxu0 %v5721
    %6006 = vmatprep.subr.bf16.mxu0 0
    %6007 = vmatpush1.bf16.msra.mxu0 %v5722
    %6008 = vmatprep.subr.bf16.mxu0 0
    %6009 = vmatpush1.bf16.msra.mxu0 %v5723
    %6010 = vmatprep.subr.bf16.mxu0 0
    %6011 = vmatpush1.bf16.msra.mxu0 %v5724
    %6012 = vmatprep.subr.bf16.mxu0 0
    %6013 = vmatpush1.bf16.msra.mxu0 %v5725
    %6014 = vmatprep.subr.bf16.mxu0 0
    %6015 = vmatpush1.bf16.msra.mxu0 %v5726
    %6016 = vmatprep.subr.bf16.mxu0 0
    %6017 = vmatpush1.bf16.msra.mxu0 %v5727
    %6018 = vmatprep.subr.bf16.mxu0 0
    %6019 = vmatpush1.bf16.msra.mxu0 %v5728
    %6020 = vmatprep.subr.bf16.mxu0 0
    %6021 = vmatpush1.bf16.msra.mxu0 %v5729
    %6022 = vmatprep.subr.bf16.mxu0 0
    %6023 = vmatpush1.bf16.msra.mxu0 %v5730
    %6024 = vmatprep.subr.bf16.mxu0 0
    %6025 = vmatpush1.bf16.msra.mxu0 %v5731
    %6026 = vmatprep.subr.bf16.mxu0 0
    %6027 = vmatpush1.bf16.msra.mxu0 %v5732
    %6028 = vmatprep.subr.bf16.mxu0 0
    %6029 = vmatpush1.bf16.msra.mxu0 %v5733
    %6030 = vmatprep.mubr.bf16.mxu0 %v4914
    %6031 = vmatmul.mubr.bf16.gmra.mrb[0].mxu0 %v4913
    %v6032 = vpop.f32.mrb[0].mxu0
    %v6033 = vadd.f32 %v5993, %v6032
    %v6034 = vpop.f32.mrb[0].mxu0
    %v6035 = vpop.f32.mrb[0].mxu0
    %v6036 = vpop.f32.mrb[0].mxu0
    %6037 = vdwg.mxu0
    %6038 = vmatprep.subr.bf16.mxu0 0
    %6039 = vmatpush1.bf16.msra.mxu0 %v5734
    %6040 = vmatprep.subr.bf16.mxu0 0
    %6041 = vmatpush1.bf16.msra.mxu0 %v5735
    %6042 = vmatprep.subr.bf16.mxu0 0
    %6043 = vmatpush1.bf16.msra.mxu0 %v5736
    %6044 = vmatprep.subr.bf16.mxu0 0
    %6045 = vmatpush1.bf16.msra.mxu0 %v5737
    %6046 = vmatprep.subr.bf16.mxu0 0
    %6047 = vmatpush1.bf16.msra.mxu0 %v5738
    %6048 = vmatprep.subr.bf16.mxu0 0
    %6049 = vmatpush1.bf16.msra.mxu0 %v5739
    %6050 = vmatprep.subr.bf16.mxu0 0
    %6051 = vmatpush1.bf16.msra.mxu0 %v5740
    %6052 = vmatprep.subr.bf16.mxu0 0
    %6053 = vmatpush1.bf16.msra.mxu0 %v5741
    %6054 = vmatprep.subr.bf16.mxu0 0
    %6055 = vmatpush1.bf16.msra.mxu0 %v5742
    %6056 = vmatprep.subr.bf16.mxu0 0
    %6057 = vmatpush1.bf16.msra.mxu0 %v5743
    %6058 = vmatprep.subr.bf16.mxu0 0
    %6059 = vmatpush1.bf16.msra.mxu0 %v5744
    %6060 = vmatprep.subr.bf16.mxu0 0
    %6061 = vmatpush1.bf16.msra.mxu0 %v5745
    %6062 = vmatprep.subr.bf16.mxu0 0
    %6063 = vmatpush1.bf16.msra.mxu0 %v5746
    %6064 = vmatprep.subr.bf16.mxu0 0
    %6065 = vmatpush1.bf16.msra.mxu0 %v5747
    %6066 = vmatprep.subr.bf16.mxu0 0
    %6067 = vmatpush1.bf16.msra.mxu0 %v5748
    %6068 = vmatprep.subr.bf16.mxu0 0
    %6069 = vmatpush1.bf16.msra.mxu0 %v5749
    %6070 = vmatprep.mubr.bf16.mxu0 %v4916
    %6071 = vmatmul.mubr.bf16.gmra.mrb[0].mxu0 %v4915
    %v6072 = vpop.f32.mrb[0].mxu0
    %v6073 = vadd.f32 %v6033, %v6072
    %v6074 = vpop.f32.mrb[0].mxu0
    %v6075 = vpop.f32.mrb[0].mxu0
    %v6076 = vpop.f32.mrb[0].mxu0
    %6077 = vdwg.mxu0
    %6078 = vmatprep.subr.bf16.mxu0 0
    %6079 = vmatpush1.bf16.msra.mxu0 %v5750
    %6080 = vmatprep.subr.bf16.mxu0 0
    %6081 = vmatpush1.bf16.msra.mxu0 %v5751
    %6082 = vmatprep.subr.bf16.mxu0 0
    %6083 = vmatpush1.bf16.msra.mxu0 %v5752
    %6084 = vmatprep.subr.bf16.mxu0 0
    %6085 = vmatpush1.bf16.msra.mxu0 %v5753
    %6086 = vmatprep.subr.bf16.mxu0 0
    %6087 = vmatpush1.bf16.msra.mxu0 %v5754
    %6088 = vmatprep.subr.bf16.mxu0 0
    %6089 = vmatpush1.bf16.msra.mxu0 %v5755
    %6090 = vmatprep.subr.bf16.mxu0 0
    %6091 = vmatpush1.bf16.msra.mxu0 %v5756
    %6092 = vmatprep.subr.bf16.mxu0 0
    %6093 = vmatpush1.bf16.msra.mxu0 %v5757
    %6094 = vmatprep.subr.bf16.mxu0 0
    %6095 = vmatpush1.bf16.msra.mxu0 %v5758
    %6096 = vmatprep.subr.bf16.mxu0 0
    %6097 = vmatpush1.bf16.msra.mxu0 %v5759
    %6098 = vmatprep.subr.bf16.mxu0 0
    %6099 = vmatpush1.bf16.msra.mxu0 %v5760
    %6100 = vmatprep.subr.bf16.mxu0 0
    %6101 = vmatpush1.bf16.msra.mxu0 %v5761
    %6102 = vmatprep.subr.bf16.mxu0 0
    %6103 = vmatpush1.bf16.msra.mxu0 %v5762
    %6104 = vmatprep.subr.bf16.mxu0 0
    %6105 = vmatpush1.bf16.msra.mxu0 %v5763
    %6106 = vmatprep.subr.bf16.mxu0 0
    %6107 = vmatpush1.bf16.msra.mxu0 %v5764
    %6108 = vmatprep.subr.bf16.mxu0 0
    %6109 = vmatpush1.bf16.msra.mxu0 %v5765
    %6110 = vmatprep.mubr.bf16.mxu0 %v4918
    %6111 = vmatmul.mubr.bf16.gmra.mrb[0].mxu0 %v4917
    %v6112 = vpop.f32.mrb[0].mxu0
    %v6113 = vadd.f32 %v6073, %v6112
    %v6114 = vpop.f32.mrb[0].mxu0
    %v6115 = vpop.f32.mrb[0].mxu0
    %v6116 = vpop.f32.mrb[0].mxu0
    %6117 = vdwg.mxu0
    %6118 = vmatprep.subr.bf16.mxu0 0
    %6119 = vmatpush1.bf16.msra.mxu0 %v5766
    %6120 = vmatprep.subr.bf16.mxu0 0
    %6121 = vmatpush1.bf16.msra.mxu0 %v5767
    %6122 = vmatprep.subr.bf16.mxu0 0
    %6123 = vmatpush1.bf16.msra.mxu0 %v5768
    %6124 = vmatprep.subr.bf16.mxu0 0
    %6125 = vmatpush1.bf16.msra.mxu0 %v5769
    %6126 = vmatprep.subr.bf16.mxu0 0
    %6127 = vmatpush1.bf16.msra.mxu0 %v5770
    %6128 = vmatprep.subr.bf16.mxu0 0
    %6129 = vmatpush1.bf16.msra.mxu0 %v5771
    %6130 = vmatprep.subr.bf16.mxu0 0
    %6131 = vmatpush1.bf16.msra.mxu0 %v5772
    %6132 = vmatprep.subr.bf16.mxu0 0
    %6133 = vmatpush1.bf16.msra.mxu0 %v5773
    %6134 = vmatprep.subr.bf16.mxu0 0
    %6135 = vmatpush1.bf16.msra.mxu0 %v5774
    %6136 = vmatprep.subr.bf16.mxu0 0
    %6137 = vmatpush1.bf16.msra.mxu0 %v5775
    %6138 = vmatprep.subr.bf16.mxu0 0
    %6139 = vmatpush1.bf16.msra.mxu0 %v5776
    %6140 = vmatprep.subr.bf16.mxu0 0
    %6141 = vmatpush1.bf16.msra.mxu0 %v5777
    %6142 = vmatprep.subr.bf16.mxu0 0
    %6143 = vmatpush1.bf16.msra.mxu0 %v5778
    %6144 = vmatprep.subr.bf16.mxu0 0
    %6145 = vmatpush1.bf16.msra.mxu0 %v5779
    %6146 = vmatprep.subr.bf16.mxu0 0
    %6147 = vmatpush1.bf16.msra.mxu0 %v5780
    %6148 = vmatprep.subr.bf16.mxu0 0
    %6149 = vmatpush1.bf16.msra.mxu0 %v5781
    %6150 = vmatprep.mubr.bf16.mxu0 %v4920
    %6151 = vmatmul.mubr.bf16.gmra.mrb[0].mxu0 %v4919
    %v6152 = vpop.f32.mrb[0].mxu0
    %v6153 = vadd.f32 %v6113, %v6152
    %v6154 = vpop.f32.mrb[0].mxu0
    %v6155 = vpop.f32.mrb[0].mxu0
    %v6156 = vpop.f32.mrb[0].mxu0
    %6157 = vdwg.mxu0
    %6158 = vmatprep.subr.bf16.mxu0 0
    %6159 = vmatpush1.bf16.msra.mxu0 %v5782
    %6160 = vmatprep.subr.bf16.mxu0 0
    %6161 = vmatpush1.bf16.msra.mxu0 %v5783
    %6162 = vmatprep.subr.bf16.mxu0 0
    %6163 = vmatpush1.bf16.msra.mxu0 %v5784
    %6164 = vmatprep.subr.bf16.mxu0 0
    %6165 = vmatpush1.bf16.msra.mxu0 %v5785
    %6166 = vmatprep.subr.bf16.mxu0 0
    %6167 = vmatpush1.bf16.msra.mxu0 %v5786
    %6168 = vmatprep.subr.bf16.mxu0 0
    %6169 = vmatpush1.bf16.msra.mxu0 %v5787
    %6170 = vmatprep.subr.bf16.mxu0 0
    %6171 = vmatpush1.bf16.msra.mxu0 %v5788
    %6172 = vmatprep.subr.bf16.mxu0 0
    %6173 = vmatpush1.bf16.msra.mxu0 %v5789
    %6174 = vmatprep.subr.bf16.mxu0 0
    %6175 = vmatpush1.bf16.msra.mxu0 %v5790
    %6176 = vmatprep.subr.bf16.mxu0 0
    %6177 = vmatpush1.bf16.msra.mxu0 %v5791
    %6178 = vmatprep.subr.bf16.mxu0 0
    %6179 = vmatpush1.bf16.msra.mxu0 %v5792
    %6180 = vmatprep.subr.bf16.mxu0 0
    %6181 = vmatpush1.bf16.msra.mxu0 %v5793
    %6182 = vmatprep.subr.bf16.mxu0 0
    %6183 = vmatpush1.bf16.msra.mxu0 %v5794
    %6184 = vmatprep.subr.bf16.mxu0 0
    %6185 = vmatpush1.bf16.msra.mxu0 %v5795
    %6186 = vmatprep.subr.bf16.mxu0 0
    %6187 = vmatpush1.bf16.msra.mxu0 %v5796
    %6188 = vmatprep.subr.bf16.mxu0 0
    %6189 = vmatpush1.bf16.msra.mxu0 %v5797
    %6190 = vmatprep.mubr.bf16.mxu0 %v4922
    %6191 = vmatmul.mubr.bf16.gmra.mrb[0].mxu0 %v4921
    %v6192 = vpop.f32.mrb[0].mxu0
    %v6193 = vadd.f32 %v6153, %v6192
    %v6194 = vpop.f32.mrb[0].mxu0
    %v6195 = vpop.f32.mrb[0].mxu0
    %v6196 = vpop.f32.mrb[0].mxu0
    %6197 = vdwg.mxu0
    %6198 = vmatprep.subr.bf16.mxu0 0
    %6199 = vmatpush1.bf16.msra.mxu0 %v5798
    %6200 = vmatprep.subr.bf16.mxu0 0
    %6201 = vmatpush1.bf16.msra.mxu0 %v5799
    %6202 = vmatprep.subr.bf16.mxu0 0
    %6203 = vmatpush1.bf16.msra.mxu0 %v5800
    %6204 = vmatprep.subr.bf16.mxu0 0
    %6205 = vmatpush1.bf16.msra.mxu0 %v5801
    %6206 = vmatprep.subr.bf16.mxu0 0
    %6207 = vmatpush1.bf16.msra.mxu0 %v5802
    %6208 = vmatprep.subr.bf16.mxu0 0
    %6209 = vmatpush1.bf16.msra.mxu0 %v5803
    %6210 = vmatprep.subr.bf16.mxu0 0
    %6211 = vmatpush1.bf16.msra.mxu0 %v5804
    %6212 = vmatprep.subr.bf16.mxu0 0
    %6213 = vmatpush1.bf16.msra.mxu0 %v5805
    %6214 = vmatprep.subr.bf16.mxu0 0
    %6215 = vmatpush1.bf16.msra.mxu0 %v5806
    %6216 = vmatprep.subr.bf16.mxu0 0
    %6217 = vmatpush1.bf16.msra.mxu0 %v5807
    %6218 = vmatprep.subr.bf16.mxu0 0
    %6219 = vmatpush1.bf16.msra.mxu0 %v5808
    %6220 = vmatprep.subr.bf16.mxu0 0
    %6221 = vmatpush1.bf16.msra.mxu0 %v5809
    %6222 = vmatprep.subr.bf16.mxu0 0
    %6223 = vmatpush1.bf16.msra.mxu0 %v5810
    %6224 = vmatprep.subr.bf16.mxu0 0
    %6225 = vmatpush1.bf16.msra.mxu0 %v5811
    %6226 = vmatprep.subr.bf16.mxu0 0
    %6227 = vmatpush1.bf16.msra.mxu0 %v5812
    %6228 = vmatprep.subr.bf16.mxu0 0
    %6229 = vmatpush1.bf16.msra.mxu0 %v5813
    %6230 = vmatprep.mubr.bf16.mxu0 %v4924
    %6231 = vmatmul.mubr.bf16.gmra.mrb[0].mxu0 %v4923
    %v6232 = vpop.f32.mrb[0].mxu0
    %v6233 = vadd.f32 %v6193, %v6232
    %v6234 = vpop.f32.mrb[0].mxu0
    %v6235 = vpop.f32.mrb[0].mxu0
    %v6236 = vpop.f32.mrb[0].mxu0
    %6237 = vdwg.mxu0
    %6238 = vmatprep.subr.bf16.mxu0 0
    %6239 = vmatpush1.bf16.msra.mxu0 %v5814
    %6240 = vmatprep.subr.bf16.mxu0 0
    %6241 = vmatpush1.bf16.msra.mxu0 %v5815
    %6242 = vmatprep.subr.bf16.mxu0 0
    %6243 = vmatpush1.bf16.msra.mxu0 %v5816
    %6244 = vmatprep.subr.bf16.mxu0 0
    %6245 = vmatpush1.bf16.msra.mxu0 %v5817
    %6246 = vmatprep.subr.bf16.mxu0 0
    %6247 = vmatpush1.bf16.msra.mxu0 %v5818
    %6248 = vmatprep.subr.bf16.mxu0 0
    %6249 = vmatpush1.bf16.msra.mxu0 %v5819
    %6250 = vmatprep.subr.bf16.mxu0 0
    %6251 = vmatpush1.bf16.msra.mxu0 %v5820
    %6252 = vmatprep.subr.bf16.mxu0 0
    %6253 = vmatpush1.bf16.msra.mxu0 %v5821
    %6254 = vmatprep.subr.bf16.mxu0 0
    %6255 = vmatpush1.bf16.msra.mxu0 %v5822
    %6256 = vmatprep.subr.bf16.mxu0 0
    %6257 = vmatpush1.bf16.msra.mxu0 %v5823
    %6258 = vmatprep.subr.bf16.mxu0 0
    %6259 = vmatpush1.bf16.msra.mxu0 %v5824
    %6260 = vmatprep.subr.bf16.mxu0 0
    %6261 = vmatpush1.bf16.msra.mxu0 %v5825
    %6262 = vmatprep.subr.bf16.mxu0 0
    %6263 = vmatpush1.bf16.msra.mxu0 %v5826
    %6264 = vmatprep.subr.bf16.mxu0 0
    %6265 = vmatpush1.bf16.msra.mxu0 %v5827
    %6266 = vmatprep.subr.bf16.mxu0 0
    %6267 = vmatpush1.bf16.msra.mxu0 %v5828
    %6268 = vmatprep.subr.bf16.mxu0 0
    %6269 = vmatpush1.bf16.msra.mxu0 %v5829
    %6270 = vmatprep.mubr.bf16.mxu0 %v4926
    %6271 = vmatmul.mubr.bf16.gmra.mrb[0].mxu0 %v4925
    %v6272 = vpop.f32.mrb[0].mxu0
    %v6273 = vadd.f32 %v6233, %v6272
    %v6274 = vpop.f32.mrb[0].mxu0
    %v6275 = vpop.f32.mrb[0].mxu0
    %v6276 = vpop.f32.mrb[0].mxu0
    %6277 = vdwg.mxu0
    %v6278 = vmax.f32 %v6273, 0.0
    %v6279 = vpack.c.bf16 %v6278, %v6278
    %v6280 = vld [vmem:[%s7] sm:$0xf]
    %v6281 = vld [vmem:[%s7 + $0x4] sm:$0x1]
    %v6282 = vld [vmem:[%s8] sm:$0x1]
    %v6284 = vlaneseq
    %v6285 = vshrl.u32 %v6284, 7
    %v6286 = vsub.s32 0, %v6285
    %v6287 = vrot.slane %v6282, %v6286
    %v6291 = vunpack.c.l.b16 %v6280
    %v6292 = vunpack.c.l.b16 %v6281
    %v6293 = vpack.c.b16 %v6292, %v6291
    %vm6294 = vcmask 80896
    %v6296 = vsel %vm6294, %v6279, 0
    %vm6298 = vcmask 1044480
    %v6300 = vsel %vm6298, %v6293, 0
    %6302 = vmatprep.subr.bf16.mxu0 0
    %6303 = vmatpush1.bf16.msra.mxu0 %v6300
    %6304 = vmatprep.subr.bf16.mxu0 0
    %6305 = vmatpush1.bf16.msra.mxu0 0
    %6306 = vmatprep.subr.bf16.mxu0 0
    %6307 = vmatpush1.bf16.msra.mxu0 0
    %6308 = vmatprep.subr.bf16.mxu0 0
    %6309 = vmatpush1.bf16.msra.mxu0 0
    %6310 = vmatprep.subr.bf16.mxu0 0
    %6311 = vmatpush1.bf16.msra.mxu0 0
    %6312 = vmatprep.subr.bf16.mxu0 0
    %6313 = vmatpush1.bf16.msra.mxu0 0
    %6314 = vmatprep.subr.bf16.mxu0 0
    %6315 = vmatpush1.bf16.msra.mxu0 0
    %6316 = vmatprep.subr.bf16.mxu0 0
    %6317 = vmatpush1.bf16.msra.mxu0 0
    %6318 = vmatprep.subr.bf16.mxu0 0
    %6319 = vmatpush1.bf16.msra.mxu0 0
    %6320 = vmatprep.subr.bf16.mxu0 0
    %6321 = vmatpush1.bf16.msra.mxu0 0
    %6322 = vmatprep.subr.bf16.mxu0 0
    %6323 = vmatpush1.bf16.msra.mxu0 0
    %6324 = vmatprep.subr.bf16.mxu0 0
    %6325 = vmatpush1.bf16.msra.mxu0 0
    %6326 = vmatprep.subr.bf16.mxu0 0
    %6327 = vmatpush1.bf16.msra.mxu0 0
    %6328 = vmatprep.subr.bf16.mxu0 0
    %6329 = vmatpush1.bf16.msra.mxu0 0
    %6330 = vmatprep.subr.bf16.mxu0 0
    %6331 = vmatpush1.bf16.msra.mxu0 0
    %6332 = vmatprep.subr.bf16.mxu0 0
    %6333 = vmatpush1.bf16.msra.mxu0 0
    %6334 = vmatprep.mubr.bf16.mxu0 0
    %6335 = vmatmul.mubr.bf16.gmra.mrb[0].mxu0 %v6296
    %v6336 = vpop.f32.mrb[0].mxu0
    %v6337 = vadd.f32 %v6287, %v6336
    %v6338 = vpop.f32.mrb[0].mxu0
    %v6339 = vpop.f32.mrb[0].mxu0
    %v6340 = vpop.f32.mrb[0].mxu0
    %6341 = vdwg.mxu0
    %6342 = vst [vmem:[#allocation4] sm:$0x3] %v6337
    // Predicated region
    $region38: #{conv_adv_forward.1} parent=1 // pred_check
      _
    $region39: #{conv_adv_forward.1} parent=1 // pred_check_branch
      %6344 = sbr.rel (0) target = $region41
    $region40: #{conv_adv_forward.1} parent=1 // pred_region
      %s6346 = ssub.s32 32, 32
      %6347 = vsyncadd [#allocation5], %s6346
      %s6349 = sshll.u32 [#allocation4], 4
      %s6350 = int_to_ptr.vmem [resolvable:$true] %s6349
      %6352 = dma.vmem_to_hbm [thread:$0]  %s6350, 32, %s9, [#allocation5]
    $region41: #{conv_adv_forward.1} parent=1 // pred_fallthru
      _
    // Predicated region
    $region42: #{conv_adv_forward.1} parent=1 // pred_check
      _
    $region43: #{conv_adv_forward.1} parent=1 // pred_check_branch
      %6354 = sbr.rel (0) target = $region45
    $region44: #{conv_adv_forward.1} parent=1 // pred_region
      %6355 = dma.done [#allocation5], 32
    $region45: #{conv_adv_forward.1} parent=1 // pred_fallthru
      _
    %6356 = vsyncpa [#allocation5], 1

</llo_original>
